<compile_context>
chip_gen: v7x
topology: tpu7x:2x2x1
jax: 0.10.0
libtpu: 0.0.40
codegen_flags: <defaults>
</compile_context>

<pallas_src>
import functools

import jax
import jax.numpy as jnp
from jax.experimental import pallas as pl
from jax.experimental.pallas import tpu as pltpu

# dtype fed to the MXU and used for matmul-only intermediate activations.
MXU_DTYPE = jnp.bfloat16
_VMEM_LIMIT_BYTES = 48 * 1024 * 1024   # > scoped defaults, < v7x 64 MiB physical VMEM


def _cparams(*semantics):
    return pltpu.CompilerParams(dimension_semantics=tuple(semantics),
                                vmem_limit_bytes=_VMEM_LIMIT_BYTES)


# ----------------------------- tiling helpers -----------------------------
def _pick_tm(rows, target=512):
    """Row tile: full array when small, otherwise 512 (8-multiple, MXU friendly)."""
    return rows if rows <= target else target


def _pick_tile_n(n, target=1024):
    """Hidden-axis tile: full when small, otherwise the largest 128-multiple divisor <= target."""
    if n <= target or n % 128 != 0:
        return n
    for cand in range(target, 127, -128):
        if n % cand == 0:
            return cand
    return n


def _pick_batch_tile(num_seqs, seq_len, dim, budget_bytes=16 * 1024 * 1024):
    """Largest divisor of num_seqs that fits the VMEM budget, capped so grid has >=2-4 steps."""
    per_seq = (seq_len * 3 * dim * 2 * 2      # bf16 qkv block, double-buffered
               + seq_len * dim * 2 * 2        # bf16 output block, double-buffered
               + 2 * seq_len * seq_len * 4    # f32 score matrices (a couple of heads live)
               + 6 * seq_len * dim * 4)       # f32 q/k/v/p/o temporaries (conservative)
    cap = max(1, budget_bytes // max(per_seq, 1))
    cap = min(cap, max(1, num_seqs // 4), 256)
    for d in range(cap, 0, -1):
        if num_seqs % d == 0:
            return d
    return 1


def _heads_per_group(num_heads, head_dim):
    """Group heads so a group's lane width is ~128 (lane-dense loads/stores)."""
    if head_dim >= 128:
        return 1
    target = min(num_heads, max(1, 128 // head_dim))
    for g in range(target, 0, -1):
        if num_heads % g == 0:
            return g
    return 1


# ----------------------- fused LayerNorm + matmul (no bias: qkv) -----------------------
def _ln_linear_kernel(x_ref, g_ref, beta_ref, w_ref, o_ref, *, eps):
    x = x_ref[...].astype(jnp.float32)
    mean = jnp.mean(x, axis=-1, keepdims=True)
    xc = x - mean
    var = jnp.mean(xc * xc, axis=-1, keepdims=True)
    inv = jax.lax.rsqrt(var + eps)
    xln = (xc * inv * g_ref[...] + beta_ref[...]).astype(w_ref.dtype)
    o_ref[...] = jnp.dot(xln, w_ref[...],
                         preferred_element_type=jnp.float32).astype(o_ref.dtype)


def ln_linear(x2d, gamma, beta, w, out_dtype, eps=1e-5):
    m, d = x2d.shape
    n = w.shape[1]
    tm = _pick_tm(m)
    return pl.pallas_call(
        functools.partial(_ln_linear_kernel, eps=eps),
        out_shape=jax.ShapeDtypeStruct((m, n), out_dtype),
        grid=(pl.cdiv(m, tm),),
        in_specs=[
            pl.BlockSpec((tm, d), lambda i: (i, 0)),
            pl.BlockSpec((1, d), lambda i: (0, 0)),
            pl.BlockSpec((1, d), lambda i: (0, 0)),
            pl.BlockSpec((d, n), lambda i: (0, 0)),
        ],
        out_specs=pl.BlockSpec((tm, n), lambda i: (i, 0)),
        compiler_params=_cparams("parallel"),
    )(x2d, gamma.reshape(1, d), beta.reshape(1, d), w)


# ----------------------- plain matmul (+ bias, + optional fused residual) -----------------------
def _linear_kernel(x_ref, w_ref, b_ref, *rest, has_residual):
    o_ref = rest[-1]
    acc = jnp.dot(x_ref[...].astype(w_ref.dtype), w_ref[...],
                  preferred_element_type=jnp.float32)
    acc = acc + b_ref[...]
    if has_residual:
        acc = acc + rest[0][...].astype(jnp.float32)
    o_ref[...] = acc.astype(o_ref.dtype)


def linear(x2d, w, bias, residual=None, out_dtype=jnp.float32):
    m, k = x2d.shape
    n = w.shape[1]
    tm = _pick_tm(m)
    in_specs = [
        pl.BlockSpec((tm, k), lambda i: (i, 0)),
        pl.BlockSpec((k, n), lambda i: (0, 0)),
        pl.BlockSpec((1, n), lambda i: (0, 0)),
    ]
    args = [x2d, w, bias.reshape(1, n)]
    if residual is not None:
        in_specs.append(pl.BlockSpec((tm, n), lambda i: (i, 0)))
        args.append(residual)
    return pl.pallas_call(
        functools.partial(_linear_kernel, has_residual=residual is not None),
        out_shape=jax.ShapeDtypeStruct((m, n), out_dtype),
        grid=(pl.cdiv(m, tm),),
        in_specs=in_specs,
        out_specs=pl.BlockSpec((tm, n), lambda i: (i, 0)),
        compiler_params=_cparams("parallel"),
    )(*args)


# ----------------------------- attention cores -----------------------------
def _attend(q, k, v, scale):
    """Plain softmax attention for one head. q,k,v: (bt, S, hd) bf16 -> (bt, S, hd) f32."""
    s = jnp.einsum('bqd,bkd->bqk', q, k, preferred_element_type=jnp.float32) * scale
    s = s - jnp.max(s, axis=-1, keepdims=True)
    p = jnp.exp(s)
    o = jnp.einsum('bqk,bkd->bqd', p.astype(MXU_DTYPE), v,
                   preferred_element_type=jnp.float32)
    return o * pl.reciprocal(jnp.sum(p, axis=-1, keepdims=True), approx=True)


def _attend_with_cls(q, k_p, k_c, v_p, v_c, scale):
    """Softmax attention over {patch keys} U {one cls key} without any sublane concatenation.

    q: (bt, Sq, hd); k_p/v_p: (bt, Sk, hd); k_c/v_c: (bt, 1, hd).
    """
    s_p = jnp.einsum('bqd,bkd->bqk', q, k_p, preferred_element_type=jnp.float32) * scale
    s_c = jnp.sum(q.astype(jnp.float32) * k_c.astype(jnp.float32),
                  axis=-1, keepdims=True) * scale                         # (bt, Sq, 1)
    m = jnp.maximum(jnp.max(s_p, axis=-1, keepdims=True), s_c)
    p_p = jnp.exp(s_p - m)
    p_c = jnp.exp(s_c - m)
    denom = jnp.sum(p_p, axis=-1, keepdims=True) + p_c
    num = (jnp.einsum('bqk,bkd->bqd', p_p.astype(MXU_DTYPE), v_p,
                      preferred_element_type=jnp.float32)
           + p_c * v_c.astype(jnp.float32))
    return num * pl.reciprocal(denom, approx=True)


def _attention_kernel(qkv_ref, o_ref, *, num_heads, dim, scale, heads_per_group):
    """Temporal attention: qkv (bt, S, 3D) -> out (bt, S, D); heads processed in lane groups."""
    hd = dim // num_heads
    gw = heads_per_group * hd
    for g in range(num_heads // heads_per_group):
        c0 = g * gw
        q = qkv_ref[:, :, c0:c0 + gw]
        k = qkv_ref[:, :, dim + c0:dim + c0 + gw]
        v = qkv_ref[:, :, 2 * dim + c0:2 * dim + c0 + gw]
        outs = []
        for j in range(heads_per_group):
            sl = slice(j * hd, (j + 1) * hd)
            outs.append(_attend(q[:, :, sl], k[:, :, sl], v[:, :, sl], scale))
        o_g = outs[0] if heads_per_group == 1 else jnp.concatenate(outs, axis=-1)
        o_ref[:, :, c0:c0 + gw] = o_g.astype(o_ref.dtype)     # lane-dense group store


def attention(qkv, num_heads, scale):
    B, S, three_d = qkv.shape
    D = three_d // 3
    bt = _pick_batch_tile(B, S, D)
    hpg = _heads_per_group(num_heads, D // num_heads)
    return pl.pallas_call(
        functools.partial(_attention_kernel, num_heads=num_heads, dim=D, scale=scale,
                          heads_per_group=hpg),
        out_shape=jax.ShapeDtypeStruct((B, S, D), MXU_DTYPE),
        grid=(B // bt,),
        in_specs=[pl.BlockSpec((bt, S, three_d), lambda i: (i, 0, 0))],
        out_specs=pl.BlockSpec((bt, S, D), lambda i: (i, 0, 0)),
        compiler_params=_cparams("parallel"),
    )(qkv)


def _spatial_attention_kernel(qkv_p_ref, qkv_c_ref, op_ref, oc_ref, *,
                              num_heads, dim, scale, heads_per_group):
    """Spatial attention with the cls token fused in as an extra key/value and query."""
    hd = dim // num_heads
    gw = heads_per_group * hd
    for g in range(num_heads // heads_per_group):
        c0 = g * gw
        q_p = qkv_p_ref[:, :, c0:c0 + gw]
        k_p = qkv_p_ref[:, :, dim + c0:dim + c0 + gw]
        v_p = qkv_p_ref[:, :, 2 * dim + c0:2 * dim + c0 + gw]
        q_c = qkv_c_ref[:, :, c0:c0 + gw]
        k_c = qkv_c_ref[:, :, dim + c0:dim + c0 + gw]
        v_c = qkv_c_ref[:, :, 2 * dim + c0:2 * dim + c0 + gw]
        op_cols, oc_cols = [], []
        for j in range(heads_per_group):
            sl = slice(j * hd, (j + 1) * hd)
            op_cols.append(_attend_with_cls(q_p[:, :, sl], k_p[:, :, sl], k_c[:, :, sl],
                                            v_p[:, :, sl], v_c[:, :, sl], scale))
            oc_cols.append(_attend_with_cls(q_c[:, :, sl], k_p[:, :, sl], k_c[:, :, sl],
                                            v_p[:, :, sl], v_c[:, :, sl], scale))
        op_g = op_cols[0] if heads_per_group == 1 else jnp.concatenate(op_cols, axis=-1)
        oc_g = oc_cols[0] if heads_per_group == 1 else jnp.concatenate(oc_cols, axis=-1)
        op_ref[:, :, c0:c0 + gw] = op_g.astype(op_ref.dtype)
        oc_ref[:, :, c0:c0 + gw] = oc_g.astype(oc_ref.dtype)


def spatial_attention(qkv_patch, qkv_cls, num_heads, scale):
    """qkv_patch: (b*t, hw, 3D) bf16, qkv_cls: (b*t, 1, 3D) bf16.

    Returns (patch_out (b*t, hw, D), cls_out (b*t, 1, D)) in bf16.
    """
    B, S, three_d = qkv_patch.shape
    D = three_d // 3
    bt = _pick_batch_tile(B, S + 1, D)
    hpg = _heads_per_group(num_heads, D // num_heads)
    return pl.pallas_call(
        functools.partial(_spatial_attention_kernel, num_heads=num_heads, dim=D,
                          scale=scale, heads_per_group=hpg),
        out_shape=(jax.ShapeDtypeStruct((B, S, D), MXU_DTYPE),
                   jax.ShapeDtypeStruct((B, 1, D), MXU_DTYPE)),
        grid=(B // bt,),
        in_specs=[pl.BlockSpec((bt, S, three_d), lambda i: (i, 0, 0)),
                  pl.BlockSpec((bt, 1, three_d), lambda i: (i, 0, 0))],
        out_specs=(pl.BlockSpec((bt, S, D), lambda i: (i, 0, 0)),
                   pl.BlockSpec((bt, 1, D), lambda i: (i, 0, 0))),
        compiler_params=_cparams("parallel"),
    )(qkv_patch, qkv_cls)


# ------------------- fused LayerNorm + MLP (w1 + GELU + w2) + residual -------------------
def _mlp_kernel(x_ref, g_ref, beta_ref, w1_ref, b1_ref, w2_ref, b2_ref, o_ref,
                xln_sc, acc_sc, *, eps):
    hstep = pl.program_id(1)

    @pl.when(hstep == 0)
    def _():
        x = x_ref[...].astype(jnp.float32)
        mean = jnp.mean(x, axis=-1, keepdims=True)
        xc = x - mean
        var = jnp.mean(xc * xc, axis=-1, keepdims=True)
        inv = jax.lax.rsqrt(var + eps)
        xln_sc[...] = (xc * inv * g_ref[...] + beta_ref[...]).astype(xln_sc.dtype)
        acc_sc[...] = jnp.zeros_like(acc_sc)

    hid = jnp.dot(xln_sc[...], w1_ref[...], preferred_element_type=jnp.float32) + b1_ref[...]
    hid = 0.5 * hid * (1.0 + jax.lax.erf(hid * (2.0 ** -0.5)))   # exact GELU, f32
    acc_sc[...] += jnp.dot(hid.astype(w2_ref.dtype), w2_ref[...],
                           preferred_element_type=jnp.float32)

    @pl.when(hstep == pl.num_programs(1) - 1)
    def _():
        o_ref[...] = (acc_sc[...] + b2_ref[...]
                      + x_ref[...].astype(jnp.float32)).astype(o_ref.dtype)


def mlp_block(x2d, gamma, beta, w1, b1, w2, b2, eps=1e-5):
    """x + MLP(LayerNorm(x)) with the (rows, 4*dim) hidden activation kept in VMEM only."""
    m, d = x2d.shape
    hidden = w1.shape[1]
    tm = _pick_tm(m)            # 512-row tiles -> w1/w2 streamed from HBM far fewer times
    th = _pick_tile_n(hidden)   # up to 1024-wide hidden tiles -> fewer reduction steps
    return pl.pallas_call(
        functools.partial(_mlp_kernel, eps=eps),
        out_shape=jax.ShapeDtypeStruct((m, d), jnp.float32),
        grid=(pl.cdiv(m, tm), hidden // th),
        in_specs=[
            pl.BlockSpec((tm, d), lambda i, h: (i, 0)),
            pl.BlockSpec((1, d), lambda i, h: (0, 0)),
            pl.BlockSpec((1, d), lambda i, h: (0, 0)),
            pl.BlockSpec((d, th), lambda i, h: (0, h)),
            pl.BlockSpec((1, th), lambda i, h: (0, h)),
            pl.BlockSpec((th, d), lambda i, h: (h, 0)),
            pl.BlockSpec((1, d), lambda i, h: (0, 0)),
        ],
        out_specs=pl.BlockSpec((tm, d), lambda i, h: (i, 0)),
        scratch_shapes=[pltpu.VMEM((tm, d), MXU_DTYPE),
                        pltpu.VMEM((tm, d), jnp.float32)],
        compiler_params=_cparams("parallel", "arbitrary"),
    )(x2d, gamma.reshape(1, d), beta.reshape(1, d),
      w1, b1.reshape(1, hidden), w2, b2.reshape(1, d))


# ----------------------------- Block forward -----------------------------
def block_forward(x, params, b, t, w, num_heads):
    B, N, D = x.shape
    num_spatial = (N - 1) // t
    h = num_spatial // w
    hw = h * w
    hd = D // num_heads
    scale = hd ** -0.5                                   # qk_scale=None -> head_dim ** -0.5

    x_patch = x[:, 1:, :].reshape(b * hw * t, D)         # rows in (b, hw, t) order, f32
    cls_in = x[:, 0, :]                                  # (b, D) f32

    # ---- temporal attention (qkv_bias=False -> no bias) ----
    qkv_t = ln_linear(x_patch, params["temporal_norm1_g"], params["temporal_norm1_b"],
                      params["temporal_attn"]["w_qkv"], out_dtype=MXU_DTYPE)
    attn_t = attention(qkv_t.reshape(b * hw, t, 3 * D), num_heads, scale)       # bf16
    res_t = linear(attn_t.reshape(-1, D), params["temporal_attn"]["w_proj"],
                   params["temporal_attn"]["b_proj"], out_dtype=MXU_DTYPE)      # bf16
    xt_new = linear(res_t, params["temporal_fc_w"], params["temporal_fc_b"],
                    residual=x_patch, out_dtype=jnp.float32)                    # (b*hw*t, D) f32

    # ---- spatial attention ----
    # Single remaining full-tensor transpose: (b, hw, t, D) -> (b, t, hw, D) in f32.
    xs_patch = xt_new.reshape(b, hw, t, D).transpose(0, 2, 1, 3).reshape(b * t * hw, D)
    qkv_sp = ln_linear(xs_patch, params["norm1_g"], params["norm1_b"],
                       params["attn"]["w_qkv"], out_dtype=MXU_DTYPE)            # (b*t*hw, 3D)
    qkv_sc = ln_linear(cls_in, params["norm1_g"], params["norm1_b"],
                       params["attn"]["w_qkv"], out_dtype=MXU_DTYPE)            # (b, 3D)
    qkv_sc = jnp.broadcast_to(qkv_sc[:, None, None, :],
                              (b, t, 1, 3 * D)).reshape(b * t, 1, 3 * D)        # tiny bf16
    o_p, o_c = spatial_attention(qkv_sp.reshape(b * t, hw, 3 * D), qkv_sc,
                                 num_heads, scale)                               # bf16 outputs

    # cheap bf16 back-permute of the attention output to token order (b, hw, t)
    o_p = o_p.reshape(b, t, hw, D).transpose(0, 2, 1, 3).reshape(b * hw * t, D)
    patch_new = linear(o_p, params["attn"]["w_proj"], params["attn"]["b_proj"],
                       residual=xt_new, out_dtype=jnp.float32)                   # x_new patches
    cls_proj = linear(o_c.reshape(b * t, D), params["attn"]["w_proj"],
                      params["attn"]["b_proj"], out_dtype=jnp.float32)           # (b*t, D)
    cls_new = cls_in[:, None, :] + cls_proj.reshape(b, t, D).mean(axis=1, keepdims=True)

    x_new = jnp.concatenate([cls_new, patch_new.reshape(b, hw * t, D)], axis=1)  # (b, N, D)

    # ---- fused LayerNorm + MLP + residual ----
    out = mlp_block(x_new.reshape(b * N, D), params["norm2_g"], params["norm2_b"],
                    params["mlp_w1"], params["mlp_b1"], params["mlp_w2"], params["mlp_b2"])
    return out.reshape(b, N, D)


# ----------------------------- parameter init -----------------------------
def init_block_params(key, dim, mlp_ratio=4.0):
    hidden = int(dim * mlp_ratio)
    ks = jax.random.split(key, 8)

    def w_init(k, shape):
        # Matmul weights are pre-cast to the MXU dtype once here (no per-forward convert).
        return (0.02 * jax.random.normal(k, shape, jnp.float32)).astype(MXU_DTYPE)

    return {
        "norm1_g": jnp.ones((dim,), jnp.float32),
        "norm1_b": jnp.zeros((dim,), jnp.float32),
        "temporal_norm1_g": jnp.ones((dim,), jnp.float32),
        "temporal_norm1_b": jnp.zeros((dim,), jnp.float32),
        "norm2_g": jnp.ones((dim,), jnp.float32),
        "norm2_b": jnp.zeros((dim,), jnp.float32),
        "attn": {                                    # qkv_bias=False -> no qkv bias parameter
            "w_qkv": w_init(ks[0], (dim, 3 * dim)),
            "w_proj": w_init(ks[1], (dim, dim)),
            "b_proj": jnp.zeros((dim,), jnp.float32),
        },
        "temporal_attn": {
            "w_qkv": w_init(ks[2], (dim, 3 * dim)),
            "w_proj": w_init(ks[3], (dim, dim)),
            "b_proj": jnp.zeros((dim,), jnp.float32),
        },
        "temporal_fc_w": w_init(ks[4], (dim, dim)),
        "temporal_fc_b": jnp.zeros((dim,), jnp.float32),
        "mlp_w1": w_init(ks[5], (dim, hidden)),
        "mlp_b1": jnp.zeros((hidden,), jnp.float32),
        "mlp_w2": w_init(ks[6], (hidden, dim)),
        "mlp_b2": jnp.zeros((dim,), jnp.float32),
    }


if __name__ == "__main__":
    # small, forward-consistent shapes: dim=32, heads=4 (hd=8), b=2, t=2, h=w=2
    dim, num_heads = 32, 4
    b, t, w_patches, h_patches = 2, 2, 2, 2
    N = h_patches * w_patches * t + 1   # 9 tokens (1 cls + h*w*t patches)

    key = jax.random.PRNGKey(0)
    kx, kp = jax.random.split(key)
    x = jax.random.normal(kx, (b, N, dim), jnp.float32)
    params = init_block_params(kp, dim)

    fwd = jax.jit(functools.partial(block_forward, b=b, t=t, w=w_patches, num_heads=num_heads))
    out = fwd(x, params)
    jax.block_until_ready(out)
    assert out.shape == (b, N, dim)
    assert bool(jnp.all(jnp.isfinite(out)))
    print("KERNEL_OK")
</pallas_src>

<mosaic_0001>
module attributes {stable_mosaic.version = 11 : i64} {
  func.func @_ln_linear_kernel(%arg0: i32, %arg1: memref<2x32xf32, #tpu.memory_space<vmem>>, %arg2: memref<1x32xf32, #tpu.memory_space<vmem>>, %arg3: memref<1x32xf32, #tpu.memory_space<vmem>>, %arg4: memref<32x96xbf16, #tpu.memory_space<vmem>>, %arg5: memref<2x96xbf16, #tpu.memory_space<vmem>>) attributes {dimension_semantics = [#tpu.dimension_semantics<parallel>], iteration_bounds = array<i64: 1>, scalar_prefetch = 0 : i64, scratch_operands = 0 : i64, tpu.core_type = #tpu.core_type<tc>, window_params = [{transform_indices = @transform_0, window_bounds = array<i64: 2, 32>}, {pipeline_mode = #tpu.pipeline_mode<synchronous>, transform_indices = @transform_1, window_bounds = array<i64: 1, 32>}, {pipeline_mode = #tpu.pipeline_mode<synchronous>, transform_indices = @transform_2, window_bounds = array<i64: 1, 32>}, {pipeline_mode = #tpu.pipeline_mode<synchronous>, transform_indices = @transform_3, window_bounds = array<i64: 32, 96>}, {transform_indices = @transform_4, window_bounds = array<i64: 2, 96>}]} {
    %c0 = arith.constant 0 : index
    %c0_0 = arith.constant 0 : index
    %0 = vector.load %arg1[%c0, %c0_0] : memref<2x32xf32, #tpu.memory_space<vmem>>, vector<2x32xf32>
    %cst = arith.constant dense<0.000000e+00> : vector<2xf32>
    %1 = vector.multi_reduction <add>, %0, %cst [1] : vector<2x32xf32> to vector<2xf32>
    %2 = vector.shape_cast %1 : vector<2xf32> to vector<2x1xf32>
    %cst_1 = arith.constant 3.200000e+01 : f32
    %3 = vector.broadcast %cst_1 : f32 to vector<2x1xf32>
    %4 = arith.divf %2, %3 : vector<2x1xf32>
    %5 = vector.broadcast %4 : vector<2x1xf32> to vector<2x32xf32>
    %6 = arith.subf %0, %5 : vector<2x32xf32>
    %7 = arith.mulf %6, %6 : vector<2x32xf32>
    %cst_2 = arith.constant dense<0.000000e+00> : vector<2xf32>
    %8 = vector.multi_reduction <add>, %7, %cst_2 [1] : vector<2x32xf32> to vector<2xf32>
    %9 = vector.shape_cast %8 : vector<2xf32> to vector<2x1xf32>
    %cst_3 = arith.constant 3.200000e+01 : f32
    %10 = vector.broadcast %cst_3 : f32 to vector<2x1xf32>
    %11 = arith.divf %9, %10 : vector<2x1xf32>
    %cst_4 = arith.constant 9.99999974E-6 : f32
    %12 = vector.broadcast %cst_4 : f32 to vector<2x1xf32>
    %13 = arith.addf %11, %12 : vector<2x1xf32>
    %14 = math.rsqrt %13 : vector<2x1xf32>
    %15 = vector.broadcast %14 : vector<2x1xf32> to vector<2x32xf32>
    %16 = arith.mulf %6, %15 : vector<2x32xf32>
    %c0_5 = arith.constant 0 : index
    %c0_6 = arith.constant 0 : index
    %17 = vector.load %arg2[%c0_5, %c0_6] : memref<1x32xf32, #tpu.memory_space<vmem>>, vector<1x32xf32>
    %18 = vector.broadcast %17 : vector<1x32xf32> to vector<2x32xf32>
    %19 = arith.mulf %16, %18 : vector<2x32xf32>
    %c0_7 = arith.constant 0 : index
    %c0_8 = arith.constant 0 : index
    %20 = vector.load %arg3[%c0_7, %c0_8] : memref<1x32xf32, #tpu.memory_space<vmem>>, vector<1x32xf32>
    %21 = vector.broadcast %20 : vector<1x32xf32> to vector<2x32xf32>
    %22 = arith.addf %19, %21 : vector<2x32xf32>
    %23 = arith.truncf %22 : vector<2x32xf32> to vector<2x32xbf16>
    %c0_9 = arith.constant 0 : index
    %c0_10 = arith.constant 0 : index
    %24 = vector.load %arg4[%c0_9, %c0_10] : memref<32x96xbf16, #tpu.memory_space<vmem>>, vector<32x96xbf16>
    %cst_11 = arith.constant dense<0.000000e+00> : vector<2x96xf32>
    %25 = tpu.matmul %23, %24, %cst_11 {dimension_numbers = #tpu.dot_dimension_numbers<[1], [0], [0], [1], [0, 0, 1, 1], [], []>} : vector<2x32xbf16>, vector<32x96xbf16>, vector<2x96xf32> -> vector<2x96xf32>
    %26 = arith.truncf %25 : vector<2x96xf32> to vector<2x96xbf16>
    %c0_12 = arith.constant 0 : index
    %c0_13 = arith.constant 0 : index
    %27 = vector.load %arg5[%c0_12, %c0_13] : memref<2x96xbf16, #tpu.memory_space<vmem>>, vector<2x96xbf16>
    tpu.vector_store %arg5[%c0_12, %c0_13], %26 {strides = array<i32>} : memref<2x96xbf16, #tpu.memory_space<vmem>>, vector<2x96xbf16>,
    return
  }
  func.func @transform_0(%arg0: i32) -> (i32, i32) {
    %c0_i32 = arith.constant 0 : i32
    %c0_i32_0 = arith.constant 0 : i32
    return %arg0, %c0_i32 : i32, i32
  }
  func.func @transform_1(%arg0: i32) -> (i32, i32) {
    %c0_i32 = arith.constant 0 : i32
    %c0_i32_0 = arith.constant 0 : i32
    %c0_i32_1 = arith.constant 0 : i32
    return %c0_i32, %c0_i32_0 : i32, i32
  }
  func.func @transform_2(%arg0: i32) -> (i32, i32) {
    %c0_i32 = arith.constant 0 : i32
    %c0_i32_0 = arith.constant 0 : i32
    %c0_i32_1 = arith.constant 0 : i32
    return %c0_i32, %c0_i32_0 : i32, i32
  }
  func.func @transform_3(%arg0: i32) -> (i32, i32) {
    %c0_i32 = arith.constant 0 : i32
    %c0_i32_0 = arith.constant 0 : i32
    %c0_i32_1 = arith.constant 0 : i32
    return %c0_i32, %c0_i32_0 : i32, i32
  }
  func.func @transform_4(%arg0: i32) -> (i32, i32) {
    %c0_i32 = arith.constant 0 : i32
    %c0_i32_0 = arith.constant 0 : i32
    return %arg0, %c0_i32 : i32, i32
  }
}

module attributes {stable_mosaic.version = 11 : i64} {
  func.func @_ln_linear_kernel(%arg0: i32, %arg1: memref<16x32xf32, #tpu.memory_space<vmem>>, %arg2: memref<1x32xf32, #tpu.memory_space<vmem>>, %arg3: memref<1x32xf32, #tpu.memory_space<vmem>>, %arg4: memref<32x96xbf16, #tpu.memory_space<vmem>>, %arg5: memref<16x96xbf16, #tpu.memory_space<vmem>>) attributes {dimension_semantics = [#tpu.dimension_semantics<parallel>], iteration_bounds = array<i64: 1>, scalar_prefetch = 0 : i64, scratch_operands = 0 : i64, tpu.core_type = #tpu.core_type<tc>, window_params = [{transform_indices = @transform_0, window_bounds = array<i64: 16, 32>}, {pipeline_mode = #tpu.pipeline_mode<synchronous>, transform_indices = @transform_1, window_bounds = array<i64: 1, 32>}, {pipeline_mode = #tpu.pipeline_mode<synchronous>, transform_indices = @transform_2, window_bounds = array<i64: 1, 32>}, {pipeline_mode = #tpu.pipeline_mode<synchronous>, transform_indices = @transform_3, window_bounds = array<i64: 32, 96>}, {transform_indices = @transform_4, window_bounds = array<i64: 16, 96>}]} {
    %c0 = arith.constant 0 : index
    %c0_0 = arith.constant 0 : index
    %0 = vector.load %arg1[%c0, %c0_0] : memref<16x32xf32, #tpu.memory_space<vmem>>, vector<16x32xf32>
    %cst = arith.constant dense<0.000000e+00> : vector<16xf32>
    %1 = vector.multi_reduction <add>, %0, %cst [1] : vector<16x32xf32> to vector<16xf32>
    %2 = vector.shape_cast %1 : vector<16xf32> to vector<16x1xf32>
    %cst_1 = arith.constant 3.200000e+01 : f32
    %3 = vector.broadcast %cst_1 : f32 to vector<16x1xf32>
    %4 = arith.divf %2, %3 : vector<16x1xf32>
    %5 = vector.broadcast %4 : vector<16x1xf32> to vector<16x32xf32>
    %6 = arith.subf %0, %5 : vector<16x32xf32>
    %7 = arith.mulf %6, %6 : vector<16x32xf32>
    %cst_2 = arith.constant dense<0.000000e+00> : vector<16xf32>
    %8 = vector.multi_reduction <add>, %7, %cst_2 [1] : vector<16x32xf32> to vector<16xf32>
    %9 = vector.shape_cast %8 : vector<16xf32> to vector<16x1xf32>
    %cst_3 = arith.constant 3.200000e+01 : f32
    %10 = vector.broadcast %cst_3 : f32 to vector<16x1xf32>
    %11 = arith.divf %9, %10 : vector<16x1xf32>
    %cst_4 = arith.constant 9.99999974E-6 : f32
    %12 = vector.broadcast %cst_4 : f32 to vector<16x1xf32>
    %13 = arith.addf %11, %12 : vector<16x1xf32>
    %14 = math.rsqrt %13 : vector<16x1xf32>
    %15 = vector.broadcast %14 : vector<16x1xf32> to vector<16x32xf32>
    %16 = arith.mulf %6, %15 : vector<16x32xf32>
    %c0_5 = arith.constant 0 : index
    %c0_6 = arith.constant 0 : index
    %17 = vector.load %arg2[%c0_5, %c0_6] : memref<1x32xf32, #tpu.memory_space<vmem>>, vector<1x32xf32>
    %18 = vector.broadcast %17 : vector<1x32xf32> to vector<16x32xf32>
    %19 = arith.mulf %16, %18 : vector<16x32xf32>
    %c0_7 = arith.constant 0 : index
    %c0_8 = arith.constant 0 : index
    %20 = vector.load %arg3[%c0_7, %c0_8] : memref<1x32xf32, #tpu.memory_space<vmem>>, vector<1x32xf32>
    %21 = vector.broadcast %20 : vector<1x32xf32> to vector<16x32xf32>
    %22 = arith.addf %19, %21 : vector<16x32xf32>
    %23 = arith.truncf %22 : vector<16x32xf32> to vector<16x32xbf16>
    %c0_9 = arith.constant 0 : index
    %c0_10 = arith.constant 0 : index
    %24 = vector.load %arg4[%c0_9, %c0_10] : memref<32x96xbf16, #tpu.memory_space<vmem>>, vector<32x96xbf16>
    %cst_11 = arith.constant dense<0.000000e+00> : vector<16x96xf32>
    %25 = tpu.matmul %23, %24, %cst_11 {dimension_numbers = #tpu.dot_dimension_numbers<[1], [0], [0], [1], [0, 0, 1, 1], [], []>} : vector<16x32xbf16>, vector<32x96xbf16>, vector<16x96xf32> -> vector<16x96xf32>
    %26 = arith.truncf %25 : vector<16x96xf32> to vector<16x96xbf16>
    %c0_12 = arith.constant 0 : index
    %c0_13 = arith.constant 0 : index
    %27 = vector.load %arg5[%c0_12, %c0_13] : memref<16x96xbf16, #tpu.memory_space<vmem>>, vector<16x96xbf16>
    tpu.vector_store %arg5[%c0_12, %c0_13], %26 {strides = array<i32>} : memref<16x96xbf16, #tpu.memory_space<vmem>>, vector<16x96xbf16>,
    return
  }
  func.func @transform_0(%arg0: i32) -> (i32, i32) {
    %c0_i32 = arith.constant 0 : i32
    %c0_i32_0 = arith.constant 0 : i32
    return %arg0, %c0_i32 : i32, i32
  }
  func.func @transform_1(%arg0: i32) -> (i32, i32) {
    %c0_i32 = arith.constant 0 : i32
    %c0_i32_0 = arith.constant 0 : i32
    %c0_i32_1 = arith.constant 0 : i32
    return %c0_i32, %c0_i32_0 : i32, i32
  }
  func.func @transform_2(%arg0: i32) -> (i32, i32) {
    %c0_i32 = arith.constant 0 : i32
    %c0_i32_0 = arith.constant 0 : i32
    %c0_i32_1 = arith.constant 0 : i32
    return %c0_i32, %c0_i32_0 : i32, i32
  }
  func.func @transform_3(%arg0: i32) -> (i32, i32) {
    %c0_i32 = arith.constant 0 : i32
    %c0_i32_0 = arith.constant 0 : i32
    %c0_i32_1 = arith.constant 0 : i32
    return %c0_i32, %c0_i32_0 : i32, i32
  }
  func.func @transform_4(%arg0: i32) -> (i32, i32) {
    %c0_i32 = arith.constant 0 : i32
    %c0_i32_0 = arith.constant 0 : i32
    return %arg0, %c0_i32 : i32, i32
  }
}

module attributes {stable_mosaic.version = 11 : i64} {
  func.func @_attention_kernel(%arg0: i32, %arg1: memref<2x2x96xbf16, #tpu.memory_space<vmem>>, %arg2: memref<2x2x32xbf16, #tpu.memory_space<vmem>>) attributes {dimension_semantics = [#tpu.dimension_semantics<parallel>], iteration_bounds = array<i64: 4>, scalar_prefetch = 0 : i64, scratch_operands = 0 : i64, tpu.core_type = #tpu.core_type<tc>, window_params = [{transform_indices = @transform_0, window_bounds = array<i64: 2, 2, 96>}, {transform_indices = @transform_1, window_bounds = array<i64: 2, 2, 32>}]} {
    %c0 = arith.constant 0 : index
    %c0_0 = arith.constant 0 : index
    %c0_1 = arith.constant 0 : index
    %0 = vector.load %arg1[%c0, %c0_0, %c0_1] : memref<2x2x96xbf16, #tpu.memory_space<vmem>>, vector<2x2x32xbf16>
    %c0_2 = arith.constant 0 : index
    %c0_3 = arith.constant 0 : index
    %c32 = arith.constant 32 : index
    %1 = vector.load %arg1[%c0_2, %c0_3, %c32] : memref<2x2x96xbf16, #tpu.memory_space<vmem>>, vector<2x2x32xbf16>
    %c0_4 = arith.constant 0 : index
    %c0_5 = arith.constant 0 : index
    %c64 = arith.constant 64 : index
    %2 = vector.load %arg1[%c0_4, %c0_5, %c64] : memref<2x2x96xbf16, #tpu.memory_space<vmem>>, vector<2x2x32xbf16>
    %3 = vector.extract_strided_slice %0 {offsets = [0, 0, 0], sizes = [2, 2, 8], strides = [1, 1, 1]} : vector<2x2x32xbf16> to vector<2x2x8xbf16>
    %4 = vector.extract_strided_slice %1 {offsets = [0, 0, 0], sizes = [2, 2, 8], strides = [1, 1, 1]} : vector<2x2x32xbf16> to vector<2x2x8xbf16>
    %5 = vector.extract_strided_slice %2 {offsets = [0, 0, 0], sizes = [2, 2, 8], strides = [1, 1, 1]} : vector<2x2x32xbf16> to vector<2x2x8xbf16>
    "tpu.trace_start"() <{level = 10 : i32, message = "bqd,bkd->bqk"}> : () -> ()
    %cst = arith.constant dense<0.000000e+00> : vector<2x2x2xf32>
    %6 = tpu.matmul %3, %4, %cst {dimension_numbers = #tpu.dot_dimension_numbers<[2], [2], [1], [1], [0, 0, 0, 1, 1, 1], [0], [0]>} : vector<2x2x8xbf16>, vector<2x2x8xbf16>, vector<2x2x2xf32> -> vector<2x2x2xf32>
    "tpu.trace_stop"() : () -> ()
    %cst_6 = arith.constant 0.353553385 : f32
    %7 = vector.broadcast %cst_6 : f32 to vector<2x2x2xf32>
    %8 = arith.mulf %6, %7 : vector<2x2x2xf32>
    %cst_7 = arith.constant dense<0xFF800000> : vector<2x2xf32>
    %9 = vector.multi_reduction <maximumf>, %8, %cst_7 [2] : vector<2x2x2xf32> to vector<2x2xf32>
    %10 = vector.shape_cast %9 : vector<2x2xf32> to vector<2x2x1xf32>
    %11 = vector.broadcast %10 : vector<2x2x1xf32> to vector<2x2x2xf32>
    %12 = arith.subf %8, %11 : vector<2x2x2xf32>
    %13 = math.exp %12 : vector<2x2x2xf32>
    %14 = arith.truncf %13 : vector<2x2x2xf32> to vector<2x2x2xbf16>
    "tpu.trace_start"() <{level = 10 : i32, message = "bqk,bkd->bqd"}> : () -> ()
    %cst_8 = arith.constant dense<0.000000e+00> : vector<2x2x8xf32>
    %15 = tpu.matmul %14, %5, %cst_8 {dimension_numbers = #tpu.dot_dimension_numbers<[2], [1], [1], [2], [0, 0, 0, 1, 1, 2], [0], [0]>} : vector<2x2x2xbf16>, vector<2x2x8xbf16>, vector<2x2x8xf32> -> vector<2x2x8xf32>
    "tpu.trace_stop"() : () -> ()
    %cst_9 = arith.constant dense<0.000000e+00> : vector<2x2xf32>
    %16 = vector.multi_reduction <add>, %13, %cst_9 [2] : vector<2x2x2xf32> to vector<2x2xf32>
    %17 = vector.shape_cast %16 : vector<2x2xf32> to vector<2x2x1xf32>
    %18 = tpu.reciprocal %17 {approx = true} : vector<2x2x1xf32> -> vector<2x2x1xf32>
    %19 = vector.broadcast %18 : vector<2x2x1xf32> to vector<2x2x8xf32>
    %20 = arith.mulf %15, %19 : vector<2x2x8xf32>
    %21 = vector.extract_strided_slice %0 {offsets = [0, 0, 8], sizes = [2, 2, 8], strides = [1, 1, 1]} : vector<2x2x32xbf16> to vector<2x2x8xbf16>
    %22 = vector.extract_strided_slice %1 {offsets = [0, 0, 8], sizes = [2, 2, 8], strides = [1, 1, 1]} : vector<2x2x32xbf16> to vector<2x2x8xbf16>
    %23 = vector.extract_strided_slice %2 {offsets = [0, 0, 8], sizes = [2, 2, 8], strides = [1, 1, 1]} : vector<2x2x32xbf16> to vector<2x2x8xbf16>
    "tpu.trace_start"() <{level = 10 : i32, message = "bqd,bkd->bqk"}> : () -> ()
    %cst_10 = arith.constant dense<0.000000e+00> : vector<2x2x2xf32>
    %24 = tpu.matmul %21, %22, %cst_10 {dimension_numbers = #tpu.dot_dimension_numbers<[2], [2], [1], [1], [0, 0, 0, 1, 1, 1], [0], [0]>} : vector<2x2x8xbf16>, vector<2x2x8xbf16>, vector<2x2x2xf32> -> vector<2x2x2xf32>
    "tpu.trace_stop"() : () -> ()
    %cst_11 = arith.constant 0.353553385 : f32
    %25 = vector.broadcast %cst_11 : f32 to vector<2x2x2xf32>
    %26 = arith.mulf %24, %25 : vector<2x2x2xf32>
    %cst_12 = arith.constant dense<0xFF800000> : vector<2x2xf32>
    %27 = vector.multi_reduction <maximumf>, %26, %cst_12 [2] : vector<2x2x2xf32> to vector<2x2xf32>
    %28 = vector.shape_cast %27 : vector<2x2xf32> to vector<2x2x1xf32>
    %29 = vector.broadcast %28 : vector<2x2x1xf32> to vector<2x2x2xf32>
    %30 = arith.subf %26, %29 : vector<2x2x2xf32>
    %31 = math.exp %30 : vector<2x2x2xf32>
    %32 = arith.truncf %31 : vector<2x2x2xf32> to vector<2x2x2xbf16>
    "tpu.trace_start"() <{level = 10 : i32, message = "bqk,bkd->bqd"}> : () -> ()
    %cst_13 = arith.constant dense<0.000000e+00> : vector<2x2x8xf32>
    %33 = tpu.matmul %32, %23, %cst_13 {dimension_numbers = #tpu.dot_dimension_numbers<[2], [1], [1], [2], [0, 0, 0, 1, 1, 2], [0], [0]>} : vector<2x2x2xbf16>, vector<2x2x8xbf16>, vector<2x2x8xf32> -> vector<2x2x8xf32>
    "tpu.trace_stop"() : () -> ()
    %cst_14 = arith.constant dense<0.000000e+00> : vector<2x2xf32>
    %34 = vector.multi_reduction <add>, %31, %cst_14 [2] : vector<2x2x2xf32> to vector<2x2xf32>
    %35 = vector.shape_cast %34 : vector<2x2xf32> to vector<2x2x1xf32>
    %36 = tpu.reciprocal %35 {approx = true} : vector<2x2x1xf32> -> vector<2x2x1xf32>
    %37 = vector.broadcast %36 : vector<2x2x1xf32> to vector<2x2x8xf32>
    %38 = arith.mulf %33, %37 : vector<2x2x8xf32>
    %39 = vector.extract_strided_slice %0 {offsets = [0, 0, 16], sizes = [2, 2, 8], strides = [1, 1, 1]} : vector<2x2x32xbf16> to vector<2x2x8xbf16>
    %40 = vector.extract_strided_slice %1 {offsets = [0, 0, 16], sizes = [2, 2, 8], strides = [1, 1, 1]} : vector<2x2x32xbf16> to vector<2x2x8xbf16>
    %41 = vector.extract_strided_slice %2 {offsets = [0, 0, 16], sizes = [2, 2, 8], strides = [1, 1, 1]} : vector<2x2x32xbf16> to vector<2x2x8xbf16>
    "tpu.trace_start"() <{level = 10 : i32, message = "bqd,bkd->bqk"}> : () -> ()
    %cst_15 = arith.constant dense<0.000000e+00> : vector<2x2x2xf32>
    %42 = tpu.matmul %39, %40, %cst_15 {dimension_numbers = #tpu.dot_dimension_numbers<[2], [2], [1], [1], [0, 0, 0, 1, 1, 1], [0], [0]>} : vector<2x2x8xbf16>, vector<2x2x8xbf16>, vector<2x2x2xf32> -> vector<2x2x2xf32>
    "tpu.trace_stop"() : () -> ()
    %cst_16 = arith.constant 0.353553385 : f32
    %43 = vector.broadcast %cst_16 : f32 to vector<2x2x2xf32>
    %44 = arith.mulf %42, %43 : vector<2x2x2xf32>
    %cst_17 = arith.constant dense<0xFF800000> : vector<2x2xf32>
    %45 = vector.multi_reduction <maximumf>, %44, %cst_17 [2] : vector<2x2x2xf32> to vector<2x2xf32>
    %46 = vector.shape_cast %45 : vector<2x2xf32> to vector<2x2x1xf32>
    %47 = vector.broadcast %46 : vector<2x2x1xf32> to vector<2x2x2xf32>
    %48 = arith.subf %44, %47 : vector<2x2x2xf32>
    %49 = math.exp %48 : vector<2x2x2xf32>
    %50 = arith.truncf %49 : vector<2x2x2xf32> to vector<2x2x2xbf16>
    "tpu.trace_start"() <{level = 10 : i32, message = "bqk,bkd->bqd"}> : () -> ()
    %cst_18 = arith.constant dense<0.000000e+00> : vector<2x2x8xf32>
    %51 = tpu.matmul %50, %41, %cst_18 {dimension_numbers = #tpu.dot_dimension_numbers<[2], [1], [1], [2], [0, 0, 0, 1, 1, 2], [0], [0]>} : vector<2x2x2xbf16>, vector<2x2x8xbf16>, vector<2x2x8xf32> -> vector<2x2x8xf32>
    "tpu.trace_stop"() : () -> ()
    %cst_19 = arith.constant dense<0.000000e+00> : vector<2x2xf32>
    %52 = vector.multi_reduction <add>, %49, %cst_19 [2] : vector<2x2x2xf32> to vector<2x2xf32>
    %53 = vector.shape_cast %52 : vector<2x2xf32> to vector<2x2x1xf32>
    %54 = tpu.reciprocal %53 {approx = true} : vector<2x2x1xf32> -> vector<2x2x1xf32>
    %55 = vector.broadcast %54 : vector<2x2x1xf32> to vector<2x2x8xf32>
    %56 = arith.mulf %51, %55 : vector<2x2x8xf32>
    %57 = vector.extract_strided_slice %0 {offsets = [0, 0, 24], sizes = [2, 2, 8], strides = [1, 1, 1]} : vector<2x2x32xbf16> to vector<2x2x8xbf16>
    %58 = vector.extract_strided_slice %1 {offsets = [0, 0, 24], sizes = [2, 2, 8], strides = [1, 1, 1]} : vector<2x2x32xbf16> to vector<2x2x8xbf16>
    %59 = vector.extract_strided_slice %2 {offsets = [0, 0, 24], sizes = [2, 2, 8], strides = [1, 1, 1]} : vector<2x2x32xbf16> to vector<2x2x8xbf16>
    "tpu.trace_start"() <{level = 10 : i32, message = "bqd,bkd->bqk"}> : () -> ()
    %cst_20 = arith.constant dense<0.000000e+00> : vector<2x2x2xf32>
    %60 = tpu.matmul %57, %58, %cst_20 {dimension_numbers = #tpu.dot_dimension_numbers<[2], [2], [1], [1], [0, 0, 0, 1, 1, 1], [0], [0]>} : vector<2x2x8xbf16>, vector<2x2x8xbf16>, vector<2x2x2xf32> -> vector<2x2x2xf32>
    "tpu.trace_stop"() : () -> ()
    %cst_21 = arith.constant 0.353553385 : f32
    %61 = vector.broadcast %cst_21 : f32 to vector<2x2x2xf32>
    %62 = arith.mulf %60, %61 : vector<2x2x2xf32>
    %cst_22 = arith.constant dense<0xFF800000> : vector<2x2xf32>
    %63 = vector.multi_reduction <maximumf>, %62, %cst_22 [2] : vector<2x2x2xf32> to vector<2x2xf32>
    %64 = vector.shape_cast %63 : vector<2x2xf32> to vector<2x2x1xf32>
    %65 = vector.broadcast %64 : vector<2x2x1xf32> to vector<2x2x2xf32>
    %66 = arith.subf %62, %65 : vector<2x2x2xf32>
    %67 = math.exp %66 : vector<2x2x2xf32>
    %68 = arith.truncf %67 : vector<2x2x2xf32> to vector<2x2x2xbf16>
    "tpu.trace_start"() <{level = 10 : i32, message = "bqk,bkd->bqd"}> : () -> ()
    %cst_23 = arith.constant dense<0.000000e+00> : vector<2x2x8xf32>
    %69 = tpu.matmul %68, %59, %cst_23 {dimension_numbers = #tpu.dot_dimension_numbers<[2], [1], [1], [2], [0, 0, 0, 1, 1, 2], [0], [0]>} : vector<2x2x2xbf16>, vector<2x2x8xbf16>, vector<2x2x8xf32> -> vector<2x2x8xf32>
    "tpu.trace_stop"() : () -> ()
    %cst_24 = arith.constant dense<0.000000e+00> : vector<2x2xf32>
    %70 = vector.multi_reduction <add>, %67, %cst_24 [2] : vector<2x2x2xf32> to vector<2x2xf32>
    %71 = vector.shape_cast %70 : vector<2x2xf32> to vector<2x2x1xf32>
    %72 = tpu.reciprocal %71 {approx = true} : vector<2x2x1xf32> -> vector<2x2x1xf32>
    %73 = vector.broadcast %72 : vector<2x2x1xf32> to vector<2x2x8xf32>
    %74 = arith.mulf %69, %73 : vector<2x2x8xf32>
    %75 = tpu.concatenate %20, %38, %56, %74 in 2 : vector<2x2x8xf32>, vector<2x2x8xf32>, vector<2x2x8xf32>, vector<2x2x8xf32> -> vector<2x2x32xf32>
    %76 = arith.truncf %75 : vector<2x2x32xf32> to vector<2x2x32xbf16>
    %c0_25 = arith.constant 0 : index
    %c0_26 = arith.constant 0 : index
    %c0_27 = arith.constant 0 : index
    %77 = vector.load %arg2[%c0_25, %c0_26, %c0_27] : memref<2x2x32xbf16, #tpu.memory_space<vmem>>, vector<2x2x32xbf16>
    tpu.vector_store %arg2[%c0_25, %c0_26, %c0_27], %76 {strides = array<i32>} : memref<2x2x32xbf16, #tpu.memory_space<vmem>>, vector<2x2x32xbf16>,
    return
  }
  func.func @transform_0(%arg0: i32) -> (i32, i32, i32) {
    %c0_i32 = arith.constant 0 : i32
    %c0_i32_0 = arith.constant 0 : i32
    %c0_i32_1 = arith.constant 0 : i32
    return %arg0, %c0_i32, %c0_i32_0 : i32, i32, i32
  }
  func.func @transform_1(%arg0: i32) -> (i32, i32, i32) {
    %c0_i32 = arith.constant 0 : i32
    %c0_i32_0 = arith.constant 0 : i32
    %c0_i32_1 = arith.constant 0 : i32
    return %arg0, %c0_i32, %c0_i32_0 : i32, i32, i32
  }
}

module attributes {stable_mosaic.version = 11 : i64} {
  func.func @_linear_kernel(%arg0: i32, %arg1: memref<16x32xbf16, #tpu.memory_space<vmem>>, %arg2: memref<32x32xbf16, #tpu.memory_space<vmem>>, %arg3: memref<1x32xf32, #tpu.memory_space<vmem>>, %arg4: memref<16x32xbf16, #tpu.memory_space<vmem>>) attributes {dimension_semantics = [#tpu.dimension_semantics<parallel>], iteration_bounds = array<i64: 1>, scalar_prefetch = 0 : i64, scratch_operands = 0 : i64, tpu.core_type = #tpu.core_type<tc>, window_params = [{transform_indices = @transform_0, window_bounds = array<i64: 16, 32>}, {pipeline_mode = #tpu.pipeline_mode<synchronous>, transform_indices = @transform_1, window_bounds = array<i64: 32, 32>}, {pipeline_mode = #tpu.pipeline_mode<synchronous>, transform_indices = @transform_2, window_bounds = array<i64: 1, 32>}, {transform_indices = @transform_3, window_bounds = array<i64: 16, 32>}]} {
    %c0 = arith.constant 0 : index
    %c0_0 = arith.constant 0 : index
    %0 = vector.load %arg1[%c0, %c0_0] : memref<16x32xbf16, #tpu.memory_space<vmem>>, vector<16x32xbf16>
    %c0_1 = arith.constant 0 : index
    %c0_2 = arith.constant 0 : index
    %1 = vector.load %arg2[%c0_1, %c0_2] : memref<32x32xbf16, #tpu.memory_space<vmem>>, vector<32x32xbf16>
    %cst = arith.constant dense<0.000000e+00> : vector<16x32xf32>
    %2 = tpu.matmul %0, %1, %cst {dimension_numbers = #tpu.dot_dimension_numbers<[1], [0], [0], [1], [0, 0, 1, 1], [], []>} : vector<16x32xbf16>, vector<32x32xbf16>, vector<16x32xf32> -> vector<16x32xf32>
    %c0_3 = arith.constant 0 : index
    %c0_4 = arith.constant 0 : index
    %3 = vector.load %arg3[%c0_3, %c0_4] : memref<1x32xf32, #tpu.memory_space<vmem>>, vector<1x32xf32>
    %4 = vector.broadcast %3 : vector<1x32xf32> to vector<16x32xf32>
    %5 = arith.addf %2, %4 : vector<16x32xf32>
    %6 = arith.truncf %5 : vector<16x32xf32> to vector<16x32xbf16>
    %c0_5 = arith.constant 0 : index
    %c0_6 = arith.constant 0 : index
    %7 = vector.load %arg4[%c0_5, %c0_6] : memref<16x32xbf16, #tpu.memory_space<vmem>>, vector<16x32xbf16>
    tpu.vector_store %arg4[%c0_5, %c0_6], %6 {strides = array<i32>} : memref<16x32xbf16, #tpu.memory_space<vmem>>, vector<16x32xbf16>,
    return
  }
  func.func @transform_0(%arg0: i32) -> (i32, i32) {
    %c0_i32 = arith.constant 0 : i32
    %c0_i32_0 = arith.constant 0 : i32
    return %arg0, %c0_i32 : i32, i32
  }
  func.func @transform_1(%arg0: i32) -> (i32, i32) {
    %c0_i32 = arith.constant 0 : i32
    %c0_i32_0 = arith.constant 0 : i32
    %c0_i32_1 = arith.constant 0 : i32
    return %c0_i32, %c0_i32_0 : i32, i32
  }
  func.func @transform_2(%arg0: i32) -> (i32, i32) {
    %c0_i32 = arith.constant 0 : i32
    %c0_i32_0 = arith.constant 0 : i32
    %c0_i32_1 = arith.constant 0 : i32
    return %c0_i32, %c0_i32_0 : i32, i32
  }
  func.func @transform_3(%arg0: i32) -> (i32, i32) {
    %c0_i32 = arith.constant 0 : i32
    %c0_i32_0 = arith.constant 0 : i32
    return %arg0, %c0_i32 : i32, i32
  }
}

module attributes {stable_mosaic.version = 11 : i64} {
  func.func @_linear_kernel(%arg0: i32, %arg1: memref<16x32xbf16, #tpu.memory_space<vmem>>, %arg2: memref<32x32xbf16, #tpu.memory_space<vmem>>, %arg3: memref<1x32xf32, #tpu.memory_space<vmem>>, %arg4: memref<16x32xf32, #tpu.memory_space<vmem>>, %arg5: memref<16x32xf32, #tpu.memory_space<vmem>>) attributes {dimension_semantics = [#tpu.dimension_semantics<parallel>], iteration_bounds = array<i64: 1>, scalar_prefetch = 0 : i64, scratch_operands = 0 : i64, tpu.core_type = #tpu.core_type<tc>, window_params = [{transform_indices = @transform_0, window_bounds = array<i64: 16, 32>}, {pipeline_mode = #tpu.pipeline_mode<synchronous>, transform_indices = @transform_1, window_bounds = array<i64: 32, 32>}, {pipeline_mode = #tpu.pipeline_mode<synchronous>, transform_indices = @transform_2, window_bounds = array<i64: 1, 32>}, {transform_indices = @transform_3, window_bounds = array<i64: 16, 32>}, {transform_indices = @transform_4, window_bounds = array<i64: 16, 32>}]} {
    %c0 = arith.constant 0 : index
    %c0_0 = arith.constant 0 : index
    %0 = vector.load %arg1[%c0, %c0_0] : memref<16x32xbf16, #tpu.memory_space<vmem>>, vector<16x32xbf16>
    %c0_1 = arith.constant 0 : index
    %c0_2 = arith.constant 0 : index
    %1 = vector.load %arg2[%c0_1, %c0_2] : memref<32x32xbf16, #tpu.memory_space<vmem>>, vector<32x32xbf16>
    %cst = arith.constant dense<0.000000e+00> : vector<16x32xf32>
    %2 = tpu.matmul %0, %1, %cst {dimension_numbers = #tpu.dot_dimension_numbers<[1], [0], [0], [1], [0, 0, 1, 1], [], []>} : vector<16x32xbf16>, vector<32x32xbf16>, vector<16x32xf32> -> vector<16x32xf32>
    %c0_3 = arith.constant 0 : index
    %c0_4 = arith.constant 0 : index
    %3 = vector.load %arg3[%c0_3, %c0_4] : memref<1x32xf32, #tpu.memory_space<vmem>>, vector<1x32xf32>
    %4 = vector.broadcast %3 : vector<1x32xf32> to vector<16x32xf32>
    %5 = arith.addf %2, %4 : vector<16x32xf32>
    %c0_5 = arith.constant 0 : index
    %c0_6 = arith.constant 0 : index
    %6 = vector.load %arg4[%c0_5, %c0_6] : memref<16x32xf32, #tpu.memory_space<vmem>>, vector<16x32xf32>
    %7 = arith.addf %5, %6 : vector<16x32xf32>
    %c0_7 = arith.constant 0 : index
    %c0_8 = arith.constant 0 : index
    %8 = vector.load %arg5[%c0_7, %c0_8] : memref<16x32xf32, #tpu.memory_space<vmem>>, vector<16x32xf32>
    tpu.vector_store %arg5[%c0_7, %c0_8], %7 {strides = array<i32>} : memref<16x32xf32, #tpu.memory_space<vmem>>, vector<16x32xf32>,
    return
  }
  func.func @transform_0(%arg0: i32) -> (i32, i32) {
    %c0_i32 = arith.constant 0 : i32
    %c0_i32_0 = arith.constant 0 : i32
    return %arg0, %c0_i32 : i32, i32
  }
  func.func @transform_1(%arg0: i32) -> (i32, i32) {
    %c0_i32 = arith.constant 0 : i32
    %c0_i32_0 = arith.constant 0 : i32
    %c0_i32_1 = arith.constant 0 : i32
    return %c0_i32, %c0_i32_0 : i32, i32
  }
  func.func @transform_2(%arg0: i32) -> (i32, i32) {
    %c0_i32 = arith.constant 0 : i32
    %c0_i32_0 = arith.constant 0 : i32
    %c0_i32_1 = arith.constant 0 : i32
    return %c0_i32, %c0_i32_0 : i32, i32
  }
  func.func @transform_3(%arg0: i32) -> (i32, i32) {
    %c0_i32 = arith.constant 0 : i32
    %c0_i32_0 = arith.constant 0 : i32
    return %arg0, %c0_i32 : i32, i32
  }
  func.func @transform_4(%arg0: i32) -> (i32, i32) {
    %c0_i32 = arith.constant 0 : i32
    %c0_i32_0 = arith.constant 0 : i32
    return %arg0, %c0_i32 : i32, i32
  }
}

module attributes {stable_mosaic.version = 11 : i64} {
  func.func @_linear_kernel(%arg0: i32, %arg1: memref<4x32xbf16, #tpu.memory_space<vmem>>, %arg2: memref<32x32xbf16, #tpu.memory_space<vmem>>, %arg3: memref<1x32xf32, #tpu.memory_space<vmem>>, %arg4: memref<4x32xf32, #tpu.memory_space<vmem>>) attributes {dimension_semantics = [#tpu.dimension_semantics<parallel>], iteration_bounds = array<i64: 1>, scalar_prefetch = 0 : i64, scratch_operands = 0 : i64, tpu.core_type = #tpu.core_type<tc>, window_params = [{transform_indices = @transform_0, window_bounds = array<i64: 4, 32>}, {pipeline_mode = #tpu.pipeline_mode<synchronous>, transform_indices = @transform_1, window_bounds = array<i64: 32, 32>}, {pipeline_mode = #tpu.pipeline_mode<synchronous>, transform_indices = @transform_2, window_bounds = array<i64: 1, 32>}, {transform_indices = @transform_3, window_bounds = array<i64: 4, 32>}]} {
    %c0 = arith.constant 0 : index
    %c0_0 = arith.constant 0 : index
    %0 = vector.load %arg1[%c0, %c0_0] : memref<4x32xbf16, #tpu.memory_space<vmem>>, vector<4x32xbf16>
    %c0_1 = arith.constant 0 : index
    %c0_2 = arith.constant 0 : index
    %1 = vector.load %arg2[%c0_1, %c0_2] : memref<32x32xbf16, #tpu.memory_space<vmem>>, vector<32x32xbf16>
    %cst = arith.constant dense<0.000000e+00> : vector<4x32xf32>
    %2 = tpu.matmul %0, %1, %cst {dimension_numbers = #tpu.dot_dimension_numbers<[1], [0], [0], [1], [0, 0, 1, 1], [], []>} : vector<4x32xbf16>, vector<32x32xbf16>, vector<4x32xf32> -> vector<4x32xf32>
    %c0_3 = arith.constant 0 : index
    %c0_4 = arith.constant 0 : index
    %3 = vector.load %arg3[%c0_3, %c0_4] : memref<1x32xf32, #tpu.memory_space<vmem>>, vector<1x32xf32>
    %4 = vector.broadcast %3 : vector<1x32xf32> to vector<4x32xf32>
    %5 = arith.addf %2, %4 : vector<4x32xf32>
    %c0_5 = arith.constant 0 : index
    %c0_6 = arith.constant 0 : index
    %6 = vector.load %arg4[%c0_5, %c0_6] : memref<4x32xf32, #tpu.memory_space<vmem>>, vector<4x32xf32>
    tpu.vector_store %arg4[%c0_5, %c0_6], %5 {strides = array<i32>} : memref<4x32xf32, #tpu.memory_space<vmem>>, vector<4x32xf32>,
    return
  }
  func.func @transform_0(%arg0: i32) -> (i32, i32) {
    %c0_i32 = arith.constant 0 : i32
    %c0_i32_0 = arith.constant 0 : i32
    return %arg0, %c0_i32 : i32, i32
  }
  func.func @transform_1(%arg0: i32) -> (i32, i32) {
    %c0_i32 = arith.constant 0 : i32
    %c0_i32_0 = arith.constant 0 : i32
    %c0_i32_1 = arith.constant 0 : i32
    return %c0_i32, %c0_i32_0 : i32, i32
  }
  func.func @transform_2(%arg0: i32) -> (i32, i32) {
    %c0_i32 = arith.constant 0 : i32
    %c0_i32_0 = arith.constant 0 : i32
    %c0_i32_1 = arith.constant 0 : i32
    return %c0_i32, %c0_i32_0 : i32, i32
  }
  func.func @transform_3(%arg0: i32) -> (i32, i32) {
    %c0_i32 = arith.constant 0 : i32
    %c0_i32_0 = arith.constant 0 : i32
    return %arg0, %c0_i32 : i32, i32
  }
}

module attributes {stable_mosaic.version = 11 : i64} {
  func.func @_spatial_attention_kernel(%arg0: i32, %arg1: memref<1x4x96xbf16, #tpu.memory_space<vmem>>, %arg2: memref<1x1x96xbf16, #tpu.memory_space<vmem>>, %arg3: memref<1x4x32xbf16, #tpu.memory_space<vmem>>, %arg4: memref<1x1x32xbf16, #tpu.memory_space<vmem>>) attributes {dimension_semantics = [#tpu.dimension_semantics<parallel>], iteration_bounds = array<i64: 4>, scalar_prefetch = 0 : i64, scratch_operands = 0 : i64, tpu.core_type = #tpu.core_type<tc>, window_params = [{transform_indices = @transform_0, window_bounds = array<i64: 1, 4, 96>}, {transform_indices = @transform_1, window_bounds = array<i64: 1, 1, 96>}, {transform_indices = @transform_2, window_bounds = array<i64: 1, 4, 32>}, {transform_indices = @transform_3, window_bounds = array<i64: 1, 1, 32>}]} {
    %c0 = arith.constant 0 : index
    %c0_0 = arith.constant 0 : index
    %c0_1 = arith.constant 0 : index
    %0 = vector.load %arg1[%c0, %c0_0, %c0_1] : memref<1x4x96xbf16, #tpu.memory_space<vmem>>, vector<1x4x32xbf16>
    %c0_2 = arith.constant 0 : index
    %c0_3 = arith.constant 0 : index
    %c32 = arith.constant 32 : index
    %1 = vector.load %arg1[%c0_2, %c0_3, %c32] : memref<1x4x96xbf16, #tpu.memory_space<vmem>>, vector<1x4x32xbf16>
    %c0_4 = arith.constant 0 : index
    %c0_5 = arith.constant 0 : index
    %c64 = arith.constant 64 : index
    %2 = vector.load %arg1[%c0_4, %c0_5, %c64] : memref<1x4x96xbf16, #tpu.memory_space<vmem>>, vector<1x4x32xbf16>
    %c0_6 = arith.constant 0 : index
    %c0_7 = arith.constant 0 : index
    %c0_8 = arith.constant 0 : index
    %3 = vector.load %arg2[%c0_6, %c0_7, %c0_8] : memref<1x1x96xbf16, #tpu.memory_space<vmem>>, vector<1x1x32xbf16>
    %c0_9 = arith.constant 0 : index
    %c0_10 = arith.constant 0 : index
    %c32_11 = arith.constant 32 : index
    %4 = vector.load %arg2[%c0_9, %c0_10, %c32_11] : memref<1x1x96xbf16, #tpu.memory_space<vmem>>, vector<1x1x32xbf16>
    %c0_12 = arith.constant 0 : index
    %c0_13 = arith.constant 0 : index
    %c64_14 = arith.constant 64 : index
    %5 = vector.load %arg2[%c0_12, %c0_13, %c64_14] : memref<1x1x96xbf16, #tpu.memory_space<vmem>>, vector<1x1x32xbf16>
    %6 = vector.extract_strided_slice %0 {offsets = [0, 0, 0], sizes = [1, 4, 8], strides = [1, 1, 1]} : vector<1x4x32xbf16> to vector<1x4x8xbf16>
    %7 = vector.extract_strided_slice %1 {offsets = [0, 0, 0], sizes = [1, 4, 8], strides = [1, 1, 1]} : vector<1x4x32xbf16> to vector<1x4x8xbf16>
    %8 = vector.extract_strided_slice %4 {offsets = [0, 0, 0], sizes = [1, 1, 8], strides = [1, 1, 1]} : vector<1x1x32xbf16> to vector<1x1x8xbf16>
    %9 = vector.extract_strided_slice %2 {offsets = [0, 0, 0], sizes = [1, 4, 8], strides = [1, 1, 1]} : vector<1x4x32xbf16> to vector<1x4x8xbf16>
    %10 = vector.extract_strided_slice %5 {offsets = [0, 0, 0], sizes = [1, 1, 8], strides = [1, 1, 1]} : vector<1x1x32xbf16> to vector<1x1x8xbf16>
    "tpu.trace_start"() <{level = 10 : i32, message = "bqd,bkd->bqk"}> : () -> ()
    %cst = arith.constant dense<0.000000e+00> : vector<1x4x4xf32>
    %11 = tpu.matmul %6, %7, %cst {dimension_numbers = #tpu.dot_dimension_numbers<[2], [2], [1], [1], [0, 0, 0, 1, 1, 1], [0], [0]>} : vector<1x4x8xbf16>, vector<1x4x8xbf16>, vector<1x4x4xf32> -> vector<1x4x4xf32>
    "tpu.trace_stop"() : () -> ()
    %cst_15 = arith.constant 0.353553385 : f32
    %12 = vector.broadcast %cst_15 : f32 to vector<1x4x4xf32>
    %13 = arith.mulf %11, %12 : vector<1x4x4xf32>
    %14 = arith.extf %6 : vector<1x4x8xbf16> to vector<1x4x8xf32>
    %15 = arith.extf %8 : vector<1x1x8xbf16> to vector<1x1x8xf32>
    %16 = vector.broadcast %15 : vector<1x1x8xf32> to vector<1x4x8xf32>
    %17 = arith.mulf %14, %16 : vector<1x4x8xf32>
    %cst_16 = arith.constant dense<0.000000e+00> : vector<1x4xf32>
    %18 = vector.multi_reduction <add>, %17, %cst_16 [2] : vector<1x4x8xf32> to vector<1x4xf32>
    %19 = vector.shape_cast %18 : vector<1x4xf32> to vector<1x4x1xf32>
    %cst_17 = arith.constant 0.353553385 : f32
    %20 = vector.broadcast %cst_17 : f32 to vector<1x4x1xf32>
    %21 = arith.mulf %19, %20 : vector<1x4x1xf32>
    %cst_18 = arith.constant dense<0xFF800000> : vector<1x4xf32>
    %22 = vector.multi_reduction <maximumf>, %13, %cst_18 [2] : vector<1x4x4xf32> to vector<1x4xf32>
    %23 = vector.shape_cast %22 : vector<1x4xf32> to vector<1x4x1xf32>
    %24 = arith.maximumf %23, %21 : vector<1x4x1xf32>
    %25 = vector.broadcast %24 : vector<1x4x1xf32> to vector<1x4x4xf32>
    %26 = arith.subf %13, %25 : vector<1x4x4xf32>
    %27 = math.exp %26 : vector<1x4x4xf32>
    %28 = arith.subf %21, %24 : vector<1x4x1xf32>
    %29 = math.exp %28 : vector<1x4x1xf32>
    %cst_19 = arith.constant dense<0.000000e+00> : vector<1x4xf32>
    %30 = vector.multi_reduction <add>, %27, %cst_19 [2] : vector<1x4x4xf32> to vector<1x4xf32>
    %31 = vector.shape_cast %30 : vector<1x4xf32> to vector<1x4x1xf32>
    %32 = arith.addf %31, %29 : vector<1x4x1xf32>
    %33 = arith.truncf %27 : vector<1x4x4xf32> to vector<1x4x4xbf16>
    "tpu.trace_start"() <{level = 10 : i32, message = "bqk,bkd->bqd"}> : () -> ()
    %cst_20 = arith.constant dense<0.000000e+00> : vector<1x4x8xf32>
    %34 = tpu.matmul %33, %9, %cst_20 {dimension_numbers = #tpu.dot_dimension_numbers<[2], [1], [1], [2], [0, 0, 0, 1, 1, 2], [0], [0]>} : vector<1x4x4xbf16>, vector<1x4x8xbf16>, vector<1x4x8xf32> -> vector<1x4x8xf32>
    "tpu.trace_stop"() : () -> ()
    %35 = arith.extf %10 : vector<1x1x8xbf16> to vector<1x1x8xf32>
    %36 = vector.broadcast %29 : vector<1x4x1xf32> to vector<1x4x8xf32>
    %37 = vector.broadcast %35 : vector<1x1x8xf32> to vector<1x4x8xf32>
    %38 = arith.mulf %36, %37 : vector<1x4x8xf32>
    %39 = arith.addf %34, %38 : vector<1x4x8xf32>
    %40 = tpu.reciprocal %32 {approx = true} : vector<1x4x1xf32> -> vector<1x4x1xf32>
    %41 = vector.broadcast %40 : vector<1x4x1xf32> to vector<1x4x8xf32>
    %42 = arith.mulf %39, %41 : vector<1x4x8xf32>
    %43 = vector.extract_strided_slice %3 {offsets = [0, 0, 0], sizes = [1, 1, 8], strides = [1, 1, 1]} : vector<1x1x32xbf16> to vector<1x1x8xbf16>
    %44 = vector.extract_strided_slice %1 {offsets = [0, 0, 0], sizes = [1, 4, 8], strides = [1, 1, 1]} : vector<1x4x32xbf16> to vector<1x4x8xbf16>
    %45 = vector.extract_strided_slice %4 {offsets = [0, 0, 0], sizes = [1, 1, 8], strides = [1, 1, 1]} : vector<1x1x32xbf16> to vector<1x1x8xbf16>
    %46 = vector.extract_strided_slice %2 {offsets = [0, 0, 0], sizes = [1, 4, 8], strides = [1, 1, 1]} : vector<1x4x32xbf16> to vector<1x4x8xbf16>
    %47 = vector.extract_strided_slice %5 {offsets = [0, 0, 0], sizes = [1, 1, 8], strides = [1, 1, 1]} : vector<1x1x32xbf16> to vector<1x1x8xbf16>
    "tpu.trace_start"() <{level = 10 : i32, message = "bqd,bkd->bqk"}> : () -> ()
    %cst_21 = arith.constant dense<0.000000e+00> : vector<1x1x4xf32>
    %48 = tpu.matmul %43, %44, %cst_21 {dimension_numbers = #tpu.dot_dimension_numbers<[2], [2], [1], [1], [0, 0, 0, 1, 1, 1], [0], [0]>} : vector<1x1x8xbf16>, vector<1x4x8xbf16>, vector<1x1x4xf32> -> vector<1x1x4xf32>
    "tpu.trace_stop"() : () -> ()
    %cst_22 = arith.constant 0.353553385 : f32
    %49 = vector.broadcast %cst_22 : f32 to vector<1x1x4xf32>
    %50 = arith.mulf %48, %49 : vector<1x1x4xf32>
    %51 = arith.extf %43 : vector<1x1x8xbf16> to vector<1x1x8xf32>
    %52 = arith.extf %45 : vector<1x1x8xbf16> to vector<1x1x8xf32>
    %53 = arith.mulf %51, %52 : vector<1x1x8xf32>
    %cst_23 = arith.constant dense<0.000000e+00> : vector<1x1xf32>
    %54 = vector.multi_reduction <add>, %53, %cst_23 [2] : vector<1x1x8xf32> to vector<1x1xf32>
    %55 = vector.shape_cast %54 : vector<1x1xf32> to vector<1x1x1xf32>
    %cst_24 = arith.constant 0.353553385 : f32
    %56 = vector.broadcast %cst_24 : f32 to vector<1x1x1xf32>
    %57 = arith.mulf %55, %56 : vector<1x1x1xf32>
    %cst_25 = arith.constant dense<0xFF800000> : vector<1x1xf32>
    %58 = vector.multi_reduction <maximumf>, %50, %cst_25 [2] : vector<1x1x4xf32> to vector<1x1xf32>
    %59 = vector.shape_cast %58 : vector<1x1xf32> to vector<1x1x1xf32>
    %60 = arith.maximumf %59, %57 : vector<1x1x1xf32>
    %61 = vector.broadcast %60 : vector<1x1x1xf32> to vector<1x1x4xf32>
    %62 = arith.subf %50, %61 : vector<1x1x4xf32>
    %63 = math.exp %62 : vector<1x1x4xf32>
    %64 = arith.subf %57, %60 : vector<1x1x1xf32>
    %65 = math.exp %64 : vector<1x1x1xf32>
    %cst_26 = arith.constant dense<0.000000e+00> : vector<1x1xf32>
    %66 = vector.multi_reduction <add>, %63, %cst_26 [2] : vector<1x1x4xf32> to vector<1x1xf32>
    %67 = vector.shape_cast %66 : vector<1x1xf32> to vector<1x1x1xf32>
    %68 = arith.addf %67, %65 : vector<1x1x1xf32>
    %69 = arith.truncf %63 : vector<1x1x4xf32> to vector<1x1x4xbf16>
    "tpu.trace_start"() <{level = 10 : i32, message = "bqk,bkd->bqd"}> : () -> ()
    %cst_27 = arith.constant dense<0.000000e+00> : vector<1x1x8xf32>
    %70 = tpu.matmul %69, %46, %cst_27 {dimension_numbers = #tpu.dot_dimension_numbers<[2], [1], [1], [2], [0, 0, 0, 1, 1, 2], [0], [0]>} : vector<1x1x4xbf16>, vector<1x4x8xbf16>, vector<1x1x8xf32> -> vector<1x1x8xf32>
    "tpu.trace_stop"() : () -> ()
    %71 = arith.extf %47 : vector<1x1x8xbf16> to vector<1x1x8xf32>
    %72 = vector.broadcast %65 : vector<1x1x1xf32> to vector<1x1x8xf32>
    %73 = arith.mulf %72, %71 : vector<1x1x8xf32>
    %74 = arith.addf %70, %73 : vector<1x1x8xf32>
    %75 = tpu.reciprocal %68 {approx = true} : vector<1x1x1xf32> -> vector<1x1x1xf32>
    %76 = vector.broadcast %75 : vector<1x1x1xf32> to vector<1x1x8xf32>
    %77 = arith.mulf %74, %76 : vector<1x1x8xf32>
    %78 = vector.extract_strided_slice %0 {offsets = [0, 0, 8], sizes = [1, 4, 8], strides = [1, 1, 1]} : vector<1x4x32xbf16> to vector<1x4x8xbf16>
    %79 = vector.extract_strided_slice %1 {offsets = [0, 0, 8], sizes = [1, 4, 8], strides = [1, 1, 1]} : vector<1x4x32xbf16> to vector<1x4x8xbf16>
    %80 = vector.extract_strided_slice %4 {offsets = [0, 0, 8], sizes = [1, 1, 8], strides = [1, 1, 1]} : vector<1x1x32xbf16> to vector<1x1x8xbf16>
    %81 = vector.extract_strided_slice %2 {offsets = [0, 0, 8], sizes = [1, 4, 8], strides = [1, 1, 1]} : vector<1x4x32xbf16> to vector<1x4x8xbf16>
    %82 = vector.extract_strided_slice %5 {offsets = [0, 0, 8], sizes = [1, 1, 8], strides = [1, 1, 1]} : vector<1x1x32xbf16> to vector<1x1x8xbf16>
    "tpu.trace_start"() <{level = 10 : i32, message = "bqd,bkd->bqk"}> : () -> ()
    %cst_28 = arith.constant dense<0.000000e+00> : vector<1x4x4xf32>
    %83 = tpu.matmul %78, %79, %cst_28 {dimension_numbers = #tpu.dot_dimension_numbers<[2], [2], [1], [1], [0, 0, 0, 1, 1, 1], [0], [0]>} : vector<1x4x8xbf16>, vector<1x4x8xbf16>, vector<1x4x4xf32> -> vector<1x4x4xf32>
    "tpu.trace_stop"() : () -> ()
    %cst_29 = arith.constant 0.353553385 : f32
    %84 = vector.broadcast %cst_29 : f32 to vector<1x4x4xf32>
    %85 = arith.mulf %83, %84 : vector<1x4x4xf32>
    %86 = arith.extf %78 : vector<1x4x8xbf16> to vector<1x4x8xf32>
    %87 = arith.extf %80 : vector<1x1x8xbf16> to vector<1x1x8xf32>
    %88 = vector.broadcast %87 : vector<1x1x8xf32> to vector<1x4x8xf32>
    %89 = arith.mulf %86, %88 : vector<1x4x8xf32>
    %cst_30 = arith.constant dense<0.000000e+00> : vector<1x4xf32>
    %90 = vector.multi_reduction <add>, %89, %cst_30 [2] : vector<1x4x8xf32> to vector<1x4xf32>
    %91 = vector.shape_cast %90 : vector<1x4xf32> to vector<1x4x1xf32>
    %cst_31 = arith.constant 0.353553385 : f32
    %92 = vector.broadcast %cst_31 : f32 to vector<1x4x1xf32>
    %93 = arith.mulf %91, %92 : vector<1x4x1xf32>
    %cst_32 = arith.constant dense<0xFF800000> : vector<1x4xf32>
    %94 = vector.multi_reduction <maximumf>, %85, %cst_32 [2] : vector<1x4x4xf32> to vector<1x4xf32>
    %95 = vector.shape_cast %94 : vector<1x4xf32> to vector<1x4x1xf32>
    %96 = arith.maximumf %95, %93 : vector<1x4x1xf32>
    %97 = vector.broadcast %96 : vector<1x4x1xf32> to vector<1x4x4xf32>
    %98 = arith.subf %85, %97 : vector<1x4x4xf32>
    %99 = math.exp %98 : vector<1x4x4xf32>
    %100 = arith.subf %93, %96 : vector<1x4x1xf32>
    %101 = math.exp %100 : vector<1x4x1xf32>
    %cst_33 = arith.constant dense<0.000000e+00> : vector<1x4xf32>
    %102 = vector.multi_reduction <add>, %99, %cst_33 [2] : vector<1x4x4xf32> to vector<1x4xf32>
    %103 = vector.shape_cast %102 : vector<1x4xf32> to vector<1x4x1xf32>
    %104 = arith.addf %103, %101 : vector<1x4x1xf32>
    %105 = arith.truncf %99 : vector<1x4x4xf32> to vector<1x4x4xbf16>
    "tpu.trace_start"() <{level = 10 : i32, message = "bqk,bkd->bqd"}> : () -> ()
    %cst_34 = arith.constant dense<0.000000e+00> : vector<1x4x8xf32>
    %106 = tpu.matmul %105, %81, %cst_34 {dimension_numbers = #tpu.dot_dimension_numbers<[2], [1], [1], [2], [0, 0, 0, 1, 1, 2], [0], [0]>} : vector<1x4x4xbf16>, vector<1x4x8xbf16>, vector<1x4x8xf32> -> vector<1x4x8xf32>
    "tpu.trace_stop"() : () -> ()
    %107 = arith.extf %82 : vector<1x1x8xbf16> to vector<1x1x8xf32>
    %108 = vector.broadcast %101 : vector<1x4x1xf32> to vector<1x4x8xf32>
    %109 = vector.broadcast %107 : vector<1x1x8xf32> to vector<1x4x8xf32>
    %110 = arith.mulf %108, %109 : vector<1x4x8xf32>
    %111 = arith.addf %106, %110 : vector<1x4x8xf32>
    %112 = tpu.reciprocal %104 {approx = true} : vector<1x4x1xf32> -> vector<1x4x1xf32>
    %113 = vector.broadcast %112 : vector<1x4x1xf32> to vector<1x4x8xf32>
    %114 = arith.mulf %111, %113 : vector<1x4x8xf32>
    %115 = vector.extract_strided_slice %3 {offsets = [0, 0, 8], sizes = [1, 1, 8], strides = [1, 1, 1]} : vector<1x1x32xbf16> to vector<1x1x8xbf16>
    %116 = vector.extract_strided_slice %1 {offsets = [0, 0, 8], sizes = [1, 4, 8], strides = [1, 1, 1]} : vector<1x4x32xbf16> to vector<1x4x8xbf16>
    %117 = vector.extract_strided_slice %4 {offsets = [0, 0, 8], sizes = [1, 1, 8], strides = [1, 1, 1]} : vector<1x1x32xbf16> to vector<1x1x8xbf16>
    %118 = vector.extract_strided_slice %2 {offsets = [0, 0, 8], sizes = [1, 4, 8], strides = [1, 1, 1]} : vector<1x4x32xbf16> to vector<1x4x8xbf16>
    %119 = vector.extract_strided_slice %5 {offsets = [0, 0, 8], sizes = [1, 1, 8], strides = [1, 1, 1]} : vector<1x1x32xbf16> to vector<1x1x8xbf16>
    "tpu.trace_start"() <{level = 10 : i32, message = "bqd,bkd->bqk"}> : () -> ()
    %cst_35 = arith.constant dense<0.000000e+00> : vector<1x1x4xf32>
    %120 = tpu.matmul %115, %116, %cst_35 {dimension_numbers = #tpu.dot_dimension_numbers<[2], [2], [1], [1], [0, 0, 0, 1, 1, 1], [0], [0]>} : vector<1x1x8xbf16>, vector<1x4x8xbf16>, vector<1x1x4xf32> -> vector<1x1x4xf32>
    "tpu.trace_stop"() : () -> ()
    %cst_36 = arith.constant 0.353553385 : f32
    %121 = vector.broadcast %cst_36 : f32 to vector<1x1x4xf32>
    %122 = arith.mulf %120, %121 : vector<1x1x4xf32>
    %123 = arith.extf %115 : vector<1x1x8xbf16> to vector<1x1x8xf32>
    %124 = arith.extf %117 : vector<1x1x8xbf16> to vector<1x1x8xf32>
    %125 = arith.mulf %123, %124 : vector<1x1x8xf32>
    %cst_37 = arith.constant dense<0.000000e+00> : vector<1x1xf32>
    %126 = vector.multi_reduction <add>, %125, %cst_37 [2] : vector<1x1x8xf32> to vector<1x1xf32>
    %127 = vector.shape_cast %126 : vector<1x1xf32> to vector<1x1x1xf32>
    %cst_38 = arith.constant 0.353553385 : f32
    %128 = vector.broadcast %cst_38 : f32 to vector<1x1x1xf32>
    %129 = arith.mulf %127, %128 : vector<1x1x1xf32>
    %cst_39 = arith.constant dense<0xFF800000> : vector<1x1xf32>
    %130 = vector.multi_reduction <maximumf>, %122, %cst_39 [2] : vector<1x1x4xf32> to vector<1x1xf32>
    %131 = vector.shape_cast %130 : vector<1x1xf32> to vector<1x1x1xf32>
    %132 = arith.maximumf %131, %129 : vector<1x1x1xf32>
    %133 = vector.broadcast %132 : vector<1x1x1xf32> to vector<1x1x4xf32>
    %134 = arith.subf %122, %133 : vector<1x1x4xf32>
    %135 = math.exp %134 : vector<1x1x4xf32>
    %136 = arith.subf %129, %132 : vector<1x1x1xf32>
    %137 = math.exp %136 : vector<1x1x1xf32>
    %cst_40 = arith.constant dense<0.000000e+00> : vector<1x1xf32>
    %138 = vector.multi_reduction <add>, %135, %cst_40 [2] : vector<1x1x4xf32> to vector<1x1xf32>
    %139 = vector.shape_cast %138 : vector<1x1xf32> to vector<1x1x1xf32>
    %140 = arith.addf %139, %137 : vector<1x1x1xf32>
    %141 = arith.truncf %135 : vector<1x1x4xf32> to vector<1x1x4xbf16>
    "tpu.trace_start"() <{level = 10 : i32, message = "bqk,bkd->bqd"}> : () -> ()
    %cst_41 = arith.constant dense<0.000000e+00> : vector<1x1x8xf32>
    %142 = tpu.matmul %141, %118, %cst_41 {dimension_numbers = #tpu.dot_dimension_numbers<[2], [1], [1], [2], [0, 0, 0, 1, 1, 2], [0], [0]>} : vector<1x1x4xbf16>, vector<1x4x8xbf16>, vector<1x1x8xf32> -> vector<1x1x8xf32>
    "tpu.trace_stop"() : () -> ()
    %143 = arith.extf %119 : vector<1x1x8xbf16> to vector<1x1x8xf32>
    %144 = vector.broadcast %137 : vector<1x1x1xf32> to vector<1x1x8xf32>
    %145 = arith.mulf %144, %143 : vector<1x1x8xf32>
    %146 = arith.addf %142, %145 : vector<1x1x8xf32>
    %147 = tpu.reciprocal %140 {approx = true} : vector<1x1x1xf32> -> vector<1x1x1xf32>
    %148 = vector.broadcast %147 : vector<1x1x1xf32> to vector<1x1x8xf32>
    %149 = arith.mulf %146, %148 : vector<1x1x8xf32>
    %150 = vector.extract_strided_slice %0 {offsets = [0, 0, 16], sizes = [1, 4, 8], strides = [1, 1, 1]} : vector<1x4x32xbf16> to vector<1x4x8xbf16>
    %151 = vector.extract_strided_slice %1 {offsets = [0, 0, 16], sizes = [1, 4, 8], strides = [1, 1, 1]} : vector<1x4x32xbf16> to vector<1x4x8xbf16>
    %152 = vector.extract_strided_slice %4 {offsets = [0, 0, 16], sizes = [1, 1, 8], strides = [1, 1, 1]} : vector<1x1x32xbf16> to vector<1x1x8xbf16>
    %153 = vector.extract_strided_slice %2 {offsets = [0, 0, 16], sizes = [1, 4, 8], strides = [1, 1, 1]} : vector<1x4x32xbf16> to vector<1x4x8xbf16>
    %154 = vector.extract_strided_slice %5 {offsets = [0, 0, 16], sizes = [1, 1, 8], strides = [1, 1, 1]} : vector<1x1x32xbf16> to vector<1x1x8xbf16>
    "tpu.trace_start"() <{level = 10 : i32, message = "bqd,bkd->bqk"}> : () -> ()
    %cst_42 = arith.constant dense<0.000000e+00> : vector<1x4x4xf32>
    %155 = tpu.matmul %150, %151, %cst_42 {dimension_numbers = #tpu.dot_dimension_numbers<[2], [2], [1], [1], [0, 0, 0, 1, 1, 1], [0], [0]>} : vector<1x4x8xbf16>, vector<1x4x8xbf16>, vector<1x4x4xf32> -> vector<1x4x4xf32>
    "tpu.trace_stop"() : () -> ()
    %cst_43 = arith.constant 0.353553385 : f32
    %156 = vector.broadcast %cst_43 : f32 to vector<1x4x4xf32>
    %157 = arith.mulf %155, %156 : vector<1x4x4xf32>
    %158 = arith.extf %150 : vector<1x4x8xbf16> to vector<1x4x8xf32>
    %159 = arith.extf %152 : vector<1x1x8xbf16> to vector<1x1x8xf32>
    %160 = vector.broadcast %159 : vector<1x1x8xf32> to vector<1x4x8xf32>
    %161 = arith.mulf %158, %160 : vector<1x4x8xf32>
    %cst_44 = arith.constant dense<0.000000e+00> : vector<1x4xf32>
    %162 = vector.multi_reduction <add>, %161, %cst_44 [2] : vector<1x4x8xf32> to vector<1x4xf32>
    %163 = vector.shape_cast %162 : vector<1x4xf32> to vector<1x4x1xf32>
    %cst_45 = arith.constant 0.353553385 : f32
    %164 = vector.broadcast %cst_45 : f32 to vector<1x4x1xf32>
    %165 = arith.mulf %163, %164 : vector<1x4x1xf32>
    %cst_46 = arith.constant dense<0xFF800000> : vector<1x4xf32>
    %166 = vector.multi_reduction <maximumf>, %157, %cst_46 [2] : vector<1x4x4xf32> to vector<1x4xf32>
    %167 = vector.shape_cast %166 : vector<1x4xf32> to vector<1x4x1xf32>
    %168 = arith.maximumf %167, %165 : vector<1x4x1xf32>
    %169 = vector.broadcast %168 : vector<1x4x1xf32> to vector<1x4x4xf32>
    %170 = arith.subf %157, %169 : vector<1x4x4xf32>
    %171 = math.exp %170 : vector<1x4x4xf32>
    %172 = arith.subf %165, %168 : vector<1x4x1xf32>
    %173 = math.exp %172 : vector<1x4x1xf32>
    %cst_47 = arith.constant dense<0.000000e+00> : vector<1x4xf32>
    %174 = vector.multi_reduction <add>, %171, %cst_47 [2] : vector<1x4x4xf32> to vector<1x4xf32>
    %175 = vector.shape_cast %174 : vector<1x4xf32> to vector<1x4x1xf32>
    %176 = arith.addf %175, %173 : vector<1x4x1xf32>
    %177 = arith.truncf %171 : vector<1x4x4xf32> to vector<1x4x4xbf16>
    "tpu.trace_start"() <{level = 10 : i32, message = "bqk,bkd->bqd"}> : () -> ()
    %cst_48 = arith.constant dense<0.000000e+00> : vector<1x4x8xf32>
    %178 = tpu.matmul %177, %153, %cst_48 {dimension_numbers = #tpu.dot_dimension_numbers<[2], [1], [1], [2], [0, 0, 0, 1, 1, 2], [0], [0]>} : vector<1x4x4xbf16>, vector<1x4x8xbf16>, vector<1x4x8xf32> -> vector<1x4x8xf32>
    "tpu.trace_stop"() : () -> ()
    %179 = arith.extf %154 : vector<1x1x8xbf16> to vector<1x1x8xf32>
    %180 = vector.broadcast %173 : vector<1x4x1xf32> to vector<1x4x8xf32>
    %181 = vector.broadcast %179 : vector<1x1x8xf32> to vector<1x4x8xf32>
    %182 = arith.mulf %180, %181 : vector<1x4x8xf32>
    %183 = arith.addf %178, %182 : vector<1x4x8xf32>
    %184 = tpu.reciprocal %176 {approx = true} : vector<1x4x1xf32> -> vector<1x4x1xf32>
    %185 = vector.broadcast %184 : vector<1x4x1xf32> to vector<1x4x8xf32>
    %186 = arith.mulf %183, %185 : vector<1x4x8xf32>
    %187 = vector.extract_strided_slice %3 {offsets = [0, 0, 16], sizes = [1, 1, 8], strides = [1, 1, 1]} : vector<1x1x32xbf16> to vector<1x1x8xbf16>
    %188 = vector.extract_strided_slice %1 {offsets = [0, 0, 16], sizes = [1, 4, 8], strides = [1, 1, 1]} : vector<1x4x32xbf16> to vector<1x4x8xbf16>
    %189 = vector.extract_strided_slice %4 {offsets = [0, 0, 16], sizes = [1, 1, 8], strides = [1, 1, 1]} : vector<1x1x32xbf16> to vector<1x1x8xbf16>
    %190 = vector.extract_strided_slice %2 {offsets = [0, 0, 16], sizes = [1, 4, 8], strides = [1, 1, 1]} : vector<1x4x32xbf16> to vector<1x4x8xbf16>
    %191 = vector.extract_strided_slice %5 {offsets = [0, 0, 16], sizes = [1, 1, 8], strides = [1, 1, 1]} : vector<1x1x32xbf16> to vector<1x1x8xbf16>
    "tpu.trace_start"() <{level = 10 : i32, message = "bqd,bkd->bqk"}> : () -> ()
    %cst_49 = arith.constant dense<0.000000e+00> : vector<1x1x4xf32>
    %192 = tpu.matmul %187, %188, %cst_49 {dimension_numbers = #tpu.dot_dimension_numbers<[2], [2], [1], [1], [0, 0, 0, 1, 1, 1], [0], [0]>} : vector<1x1x8xbf16>, vector<1x4x8xbf16>, vector<1x1x4xf32> -> vector<1x1x4xf32>
    "tpu.trace_stop"() : () -> ()
    %cst_50 = arith.constant 0.353553385 : f32
    %193 = vector.broadcast %cst_50 : f32 to vector<1x1x4xf32>
    %194 = arith.mulf %192, %193 : vector<1x1x4xf32>
    %195 = arith.extf %187 : vector<1x1x8xbf16> to vector<1x1x8xf32>
    %196 = arith.extf %189 : vector<1x1x8xbf16> to vector<1x1x8xf32>
    %197 = arith.mulf %195, %196 : vector<1x1x8xf32>
    %cst_51 = arith.constant dense<0.000000e+00> : vector<1x1xf32>
    %198 = vector.multi_reduction <add>, %197, %cst_51 [2] : vector<1x1x8xf32> to vector<1x1xf32>
    %199 = vector.shape_cast %198 : vector<1x1xf32> to vector<1x1x1xf32>
    %cst_52 = arith.constant 0.353553385 : f32
    %200 = vector.broadcast %cst_52 : f32 to vector<1x1x1xf32>
    %201 = arith.mulf %199, %200 : vector<1x1x1xf32>
    %cst_53 = arith.constant dense<0xFF800000> : vector<1x1xf32>
    %202 = vector.multi_reduction <maximumf>, %194, %cst_53 [2] : vector<1x1x4xf32> to vector<1x1xf32>
    %203 = vector.shape_cast %202 : vector<1x1xf32> to vector<1x1x1xf32>
    %204 = arith.maximumf %203, %201 : vector<1x1x1xf32>
    %205 = vector.broadcast %204 : vector<1x1x1xf32> to vector<1x1x4xf32>
    %206 = arith.subf %194, %205 : vector<1x1x4xf32>
    %207 = math.exp %206 : vector<1x1x4xf32>
    %208 = arith.subf %201, %204 : vector<1x1x1xf32>
    %209 = math.exp %208 : vector<1x1x1xf32>
    %cst_54 = arith.constant dense<0.000000e+00> : vector<1x1xf32>
    %210 = vector.multi_reduction <add>, %207, %cst_54 [2] : vector<1x1x4xf32> to vector<1x1xf32>
    %211 = vector.shape_cast %210 : vector<1x1xf32> to vector<1x1x1xf32>
    %212 = arith.addf %211, %209 : vector<1x1x1xf32>
    %213 = arith.truncf %207 : vector<1x1x4xf32> to vector<1x1x4xbf16>
    "tpu.trace_start"() <{level = 10 : i32, message = "bqk,bkd->bqd"}> : () -> ()
    %cst_55 = arith.constant dense<0.000000e+00> : vector<1x1x8xf32>
    %214 = tpu.matmul %213, %190, %cst_55 {dimension_numbers = #tpu.dot_dimension_numbers<[2], [1], [1], [2], [0, 0, 0, 1, 1, 2], [0], [0]>} : vector<1x1x4xbf16>, vector<1x4x8xbf16>, vector<1x1x8xf32> -> vector<1x1x8xf32>
    "tpu.trace_stop"() : () -> ()
    %215 = arith.extf %191 : vector<1x1x8xbf16> to vector<1x1x8xf32>
    %216 = vector.broadcast %209 : vector<1x1x1xf32> to vector<1x1x8xf32>
    %217 = arith.mulf %216, %215 : vector<1x1x8xf32>
    %218 = arith.addf %214, %217 : vector<1x1x8xf32>
    %219 = tpu.reciprocal %212 {approx = true} : vector<1x1x1xf32> -> vector<1x1x1xf32>
    %220 = vector.broadcast %219 : vector<1x1x1xf32> to vector<1x1x8xf32>
    %221 = arith.mulf %218, %220 : vector<1x1x8xf32>
    %222 = vector.extract_strided_slice %0 {offsets = [0, 0, 24], sizes = [1, 4, 8], strides = [1, 1, 1]} : vector<1x4x32xbf16> to vector<1x4x8xbf16>
    %223 = vector.extract_strided_slice %1 {offsets = [0, 0, 24], sizes = [1, 4, 8], strides = [1, 1, 1]} : vector<1x4x32xbf16> to vector<1x4x8xbf16>
    %224 = vector.extract_strided_slice %4 {offsets = [0, 0, 24], sizes = [1, 1, 8], strides = [1, 1, 1]} : vector<1x1x32xbf16> to vector<1x1x8xbf16>
    %225 = vector.extract_strided_slice %2 {offsets = [0, 0, 24], sizes = [1, 4, 8], strides = [1, 1, 1]} : vector<1x4x32xbf16> to vector<1x4x8xbf16>
    %226 = vector.extract_strided_slice %5 {offsets = [0, 0, 24], sizes = [1, 1, 8], strides = [1, 1, 1]} : vector<1x1x32xbf16> to vector<1x1x8xbf16>
    "tpu.trace_start"() <{level = 10 : i32, message = "bqd,bkd->bqk"}> : () -> ()
    %cst_56 = arith.constant dense<0.000000e+00> : vector<1x4x4xf32>
    %227 = tpu.matmul %222, %223, %cst_56 {dimension_numbers = #tpu.dot_dimension_numbers<[2], [2], [1], [1], [0, 0, 0, 1, 1, 1], [0], [0]>} : vector<1x4x8xbf16>, vector<1x4x8xbf16>, vector<1x4x4xf32> -> vector<1x4x4xf32>
    "tpu.trace_stop"() : () -> ()
    %cst_57 = arith.constant 0.353553385 : f32
    %228 = vector.broadcast %cst_57 : f32 to vector<1x4x4xf32>
    %229 = arith.mulf %227, %228 : vector<1x4x4xf32>
    %230 = arith.extf %222 : vector<1x4x8xbf16> to vector<1x4x8xf32>
    %231 = arith.extf %224 : vector<1x1x8xbf16> to vector<1x1x8xf32>
    %232 = vector.broadcast %231 : vector<1x1x8xf32> to vector<1x4x8xf32>
    %233 = arith.mulf %230, %232 : vector<1x4x8xf32>
    %cst_58 = arith.constant dense<0.000000e+00> : vector<1x4xf32>
    %234 = vector.multi_reduction <add>, %233, %cst_58 [2] : vector<1x4x8xf32> to vector<1x4xf32>
    %235 = vector.shape_cast %234 : vector<1x4xf32> to vector<1x4x1xf32>
    %cst_59 = arith.constant 0.353553385 : f32
    %236 = vector.broadcast %cst_59 : f32 to vector<1x4x1xf32>
    %237 = arith.mulf %235, %236 : vector<1x4x1xf32>
    %cst_60 = arith.constant dense<0xFF800000> : vector<1x4xf32>
    %238 = vector.multi_reduction <maximumf>, %229, %cst_60 [2] : vector<1x4x4xf32> to vector<1x4xf32>
    %239 = vector.shape_cast %238 : vector<1x4xf32> to vector<1x4x1xf32>
    %240 = arith.maximumf %239, %237 : vector<1x4x1xf32>
    %241 = vector.broadcast %240 : vector<1x4x1xf32> to vector<1x4x4xf32>
    %242 = arith.subf %229, %241 : vector<1x4x4xf32>
    %243 = math.exp %242 : vector<1x4x4xf32>
    %244 = arith.subf %237, %240 : vector<1x4x1xf32>
    %245 = math.exp %244 : vector<1x4x1xf32>
    %cst_61 = arith.constant dense<0.000000e+00> : vector<1x4xf32>
    %246 = vector.multi_reduction <add>, %243, %cst_61 [2] : vector<1x4x4xf32> to vector<1x4xf32>
    %247 = vector.shape_cast %246 : vector<1x4xf32> to vector<1x4x1xf32>
    %248 = arith.addf %247, %245 : vector<1x4x1xf32>
    %249 = arith.truncf %243 : vector<1x4x4xf32> to vector<1x4x4xbf16>
    "tpu.trace_start"() <{level = 10 : i32, message = "bqk,bkd->bqd"}> : () -> ()
    %cst_62 = arith.constant dense<0.000000e+00> : vector<1x4x8xf32>
    %250 = tpu.matmul %249, %225, %cst_62 {dimension_numbers = #tpu.dot_dimension_numbers<[2], [1], [1], [2], [0, 0, 0, 1, 1, 2], [0], [0]>} : vector<1x4x4xbf16>, vector<1x4x8xbf16>, vector<1x4x8xf32> -> vector<1x4x8xf32>
    "tpu.trace_stop"() : () -> ()
    %251 = arith.extf %226 : vector<1x1x8xbf16> to vector<1x1x8xf32>
    %252 = vector.broadcast %245 : vector<1x4x1xf32> to vector<1x4x8xf32>
    %253 = vector.broadcast %251 : vector<1x1x8xf32> to vector<1x4x8xf32>
    %254 = arith.mulf %252, %253 : vector<1x4x8xf32>
    %255 = arith.addf %250, %254 : vector<1x4x8xf32>
    %256 = tpu.reciprocal %248 {approx = true} : vector<1x4x1xf32> -> vector<1x4x1xf32>
    %257 = vector.broadcast %256 : vector<1x4x1xf32> to vector<1x4x8xf32>
    %258 = arith.mulf %255, %257 : vector<1x4x8xf32>
    %259 = vector.extract_strided_slice %3 {offsets = [0, 0, 24], sizes = [1, 1, 8], strides = [1, 1, 1]} : vector<1x1x32xbf16> to vector<1x1x8xbf16>
    %260 = vector.extract_strided_slice %1 {offsets = [0, 0, 24], sizes = [1, 4, 8], strides = [1, 1, 1]} : vector<1x4x32xbf16> to vector<1x4x8xbf16>
    %261 = vector.extract_strided_slice %4 {offsets = [0, 0, 24], sizes = [1, 1, 8], strides = [1, 1, 1]} : vector<1x1x32xbf16> to vector<1x1x8xbf16>
    %262 = vector.extract_strided_slice %2 {offsets = [0, 0, 24], sizes = [1, 4, 8], strides = [1, 1, 1]} : vector<1x4x32xbf16> to vector<1x4x8xbf16>
    %263 = vector.extract_strided_slice %5 {offsets = [0, 0, 24], sizes = [1, 1, 8], strides = [1, 1, 1]} : vector<1x1x32xbf16> to vector<1x1x8xbf16>
    "tpu.trace_start"() <{level = 10 : i32, message = "bqd,bkd->bqk"}> : () -> ()
    %cst_63 = arith.constant dense<0.000000e+00> : vector<1x1x4xf32>
    %264 = tpu.matmul %259, %260, %cst_63 {dimension_numbers = #tpu.dot_dimension_numbers<[2], [2], [1], [1], [0, 0, 0, 1, 1, 1], [0], [0]>} : vector<1x1x8xbf16>, vector<1x4x8xbf16>, vector<1x1x4xf32> -> vector<1x1x4xf32>
    "tpu.trace_stop"() : () -> ()
    %cst_64 = arith.constant 0.353553385 : f32
    %265 = vector.broadcast %cst_64 : f32 to vector<1x1x4xf32>
    %266 = arith.mulf %264, %265 : vector<1x1x4xf32>
    %267 = arith.extf %259 : vector<1x1x8xbf16> to vector<1x1x8xf32>
    %268 = arith.extf %261 : vector<1x1x8xbf16> to vector<1x1x8xf32>
    %269 = arith.mulf %267, %268 : vector<1x1x8xf32>
    %cst_65 = arith.constant dense<0.000000e+00> : vector<1x1xf32>
    %270 = vector.multi_reduction <add>, %269, %cst_65 [2] : vector<1x1x8xf32> to vector<1x1xf32>
    %271 = vector.shape_cast %270 : vector<1x1xf32> to vector<1x1x1xf32>
    %cst_66 = arith.constant 0.353553385 : f32
    %272 = vector.broadcast %cst_66 : f32 to vector<1x1x1xf32>
    %273 = arith.mulf %271, %272 : vector<1x1x1xf32>
    %cst_67 = arith.constant dense<0xFF800000> : vector<1x1xf32>
    %274 = vector.multi_reduction <maximumf>, %266, %cst_67 [2] : vector<1x1x4xf32> to vector<1x1xf32>
    %275 = vector.shape_cast %274 : vector<1x1xf32> to vector<1x1x1xf32>
    %276 = arith.maximumf %275, %273 : vector<1x1x1xf32>
    %277 = vector.broadcast %276 : vector<1x1x1xf32> to vector<1x1x4xf32>
    %278 = arith.subf %266, %277 : vector<1x1x4xf32>
    %279 = math.exp %278 : vector<1x1x4xf32>
    %280 = arith.subf %273, %276 : vector<1x1x1xf32>
    %281 = math.exp %280 : vector<1x1x1xf32>
    %cst_68 = arith.constant dense<0.000000e+00> : vector<1x1xf32>
    %282 = vector.multi_reduction <add>, %279, %cst_68 [2] : vector<1x1x4xf32> to vector<1x1xf32>
    %283 = vector.shape_cast %282 : vector<1x1xf32> to vector<1x1x1xf32>
    %284 = arith.addf %283, %281 : vector<1x1x1xf32>
    %285 = arith.truncf %279 : vector<1x1x4xf32> to vector<1x1x4xbf16>
    "tpu.trace_start"() <{level = 10 : i32, message = "bqk,bkd->bqd"}> : () -> ()
    %cst_69 = arith.constant dense<0.000000e+00> : vector<1x1x8xf32>
    %286 = tpu.matmul %285, %262, %cst_69 {dimension_numbers = #tpu.dot_dimension_numbers<[2], [1], [1], [2], [0, 0, 0, 1, 1, 2], [0], [0]>} : vector<1x1x4xbf16>, vector<1x4x8xbf16>, vector<1x1x8xf32> -> vector<1x1x8xf32>
    "tpu.trace_stop"() : () -> ()
    %287 = arith.extf %263 : vector<1x1x8xbf16> to vector<1x1x8xf32>
    %288 = vector.broadcast %281 : vector<1x1x1xf32> to vector<1x1x8xf32>
    %289 = arith.mulf %288, %287 : vector<1x1x8xf32>
    %290 = arith.addf %286, %289 : vector<1x1x8xf32>
    %291 = tpu.reciprocal %284 {approx = true} : vector<1x1x1xf32> -> vector<1x1x1xf32>
    %292 = vector.broadcast %291 : vector<1x1x1xf32> to vector<1x1x8xf32>
    %293 = arith.mulf %290, %292 : vector<1x1x8xf32>
    %294 = tpu.concatenate %42, %114, %186, %258 in 2 : vector<1x4x8xf32>, vector<1x4x8xf32>, vector<1x4x8xf32>, vector<1x4x8xf32> -> vector<1x4x32xf32>
    %295 = tpu.concatenate %77, %149, %221, %293 in 2 : vector<1x1x8xf32>, vector<1x1x8xf32>, vector<1x1x8xf32>, vector<1x1x8xf32> -> vector<1x1x32xf32>
    %296 = arith.truncf %294 : vector<1x4x32xf32> to vector<1x4x32xbf16>
    %c0_70 = arith.constant 0 : index
    %c0_71 = arith.constant 0 : index
    %c0_72 = arith.constant 0 : index
    %297 = vector.load %arg3[%c0_70, %c0_71, %c0_72] : memref<1x4x32xbf16, #tpu.memory_space<vmem>>, vector<1x4x32xbf16>
    tpu.vector_store %arg3[%c0_70, %c0_71, %c0_72], %296 {strides = array<i32>} : memref<1x4x32xbf16, #tpu.memory_space<vmem>>, vector<1x4x32xbf16>,
    %298 = arith.truncf %295 : vector<1x1x32xf32> to vector<1x1x32xbf16>
    %c0_73 = arith.constant 0 : index
    %c0_74 = arith.constant 0 : index
    %c0_75 = arith.constant 0 : index
    %299 = vector.load %arg4[%c0_73, %c0_74, %c0_75] : memref<1x1x32xbf16, #tpu.memory_space<vmem>>, vector<1x1x32xbf16>
    tpu.vector_store %arg4[%c0_73, %c0_74, %c0_75], %298 {strides = array<i32>} : memref<1x1x32xbf16, #tpu.memory_space<vmem>>, vector<1x1x32xbf16>,
    return
  }
  func.func @transform_0(%arg0: i32) -> (i32, i32, i32) {
    %c0_i32 = arith.constant 0 : i32
    %c0_i32_0 = arith.constant 0 : i32
    %c0_i32_1 = arith.constant 0 : i32
    return %arg0, %c0_i32, %c0_i32_0 : i32, i32, i32
  }
  func.func @transform_1(%arg0: i32) -> (i32, i32, i32) {
    %c0_i32 = arith.constant 0 : i32
    %c0_i32_0 = arith.constant 0 : i32
    %c0_i32_1 = arith.constant 0 : i32
    return %arg0, %c0_i32, %c0_i32_0 : i32, i32, i32
  }
  func.func @transform_2(%arg0: i32) -> (i32, i32, i32) {
    %c0_i32 = arith.constant 0 : i32
    %c0_i32_0 = arith.constant 0 : i32
    %c0_i32_1 = arith.constant 0 : i32
    return %arg0, %c0_i32, %c0_i32_0 : i32, i32, i32
  }
  func.func @transform_3(%arg0: i32) -> (i32, i32, i32) {
    %c0_i32 = arith.constant 0 : i32
    %c0_i32_0 = arith.constant 0 : i32
    %c0_i32_1 = arith.constant 0 : i32
    return %arg0, %c0_i32, %c0_i32_0 : i32, i32, i32
  }
}

module attributes {stable_mosaic.version = 11 : i64} {
  func.func @_mlp_kernel(%arg0: i32, %arg1: i32, %arg2: memref<18x32xf32, #tpu.memory_space<vmem>>, %arg3: memref<1x32xf32, #tpu.memory_space<vmem>>, %arg4: memref<1x32xf32, #tpu.memory_space<vmem>>, %arg5: memref<32x128xbf16, #tpu.memory_space<vmem>>, %arg6: memref<1x128xf32, #tpu.memory_space<vmem>>, %arg7: memref<128x32xbf16, #tpu.memory_space<vmem>>, %arg8: memref<1x32xf32, #tpu.memory_space<vmem>>, %arg9: memref<18x32xf32, #tpu.memory_space<vmem>>, %arg10: memref<18x32xbf16, #tpu.memory_space<vmem>>, %arg11: memref<18x32xf32, #tpu.memory_space<vmem>>) attributes {dimension_semantics = [#tpu.dimension_semantics<parallel>, #tpu.dimension_semantics<arbitrary>], iteration_bounds = array<i64: 1, 1>, scalar_prefetch = 0 : i64, scratch_operands = 2 : i64, tpu.core_type = #tpu.core_type<tc>, window_params = [{transform_indices = @transform_0, window_bounds = array<i64: 18, 32>}, {pipeline_mode = #tpu.pipeline_mode<synchronous>, transform_indices = @transform_1, window_bounds = array<i64: 1, 32>}, {pipeline_mode = #tpu.pipeline_mode<synchronous>, transform_indices = @transform_2, window_bounds = array<i64: 1, 32>}, {transform_indices = @transform_3, window_bounds = array<i64: 32, 128>}, {transform_indices = @transform_4, window_bounds = array<i64: 1, 128>}, {transform_indices = @transform_5, window_bounds = array<i64: 128, 32>}, {pipeline_mode = #tpu.pipeline_mode<synchronous>, transform_indices = @transform_6, window_bounds = array<i64: 1, 32>}, {transform_indices = @transform_7, window_bounds = array<i64: 18, 32>}]} {
    %c0_i32 = arith.constant 0 : i32
    %0 = arith.cmpi eq, %arg1, %c0_i32 : i32
    %1 = arith.extui %0 : i1 to i32
    %c0_i32_0 = arith.constant 0 : i32
    %2 = arith.cmpi ne, %1, %c0_i32_0 : i32
    scf.if %2 {
      %c0_18 = arith.constant 0 : index
      %c0_19 = arith.constant 0 : index
      %26 = vector.load %arg2[%c0_18, %c0_19] : memref<18x32xf32, #tpu.memory_space<vmem>>, vector<18x32xf32>
      %cst_20 = arith.constant dense<0.000000e+00> : vector<18xf32>
      %27 = vector.multi_reduction <add>, %26, %cst_20 [1] : vector<18x32xf32> to vector<18xf32>
      %28 = vector.shape_cast %27 : vector<18xf32> to vector<18x1xf32>
      %cst_21 = arith.constant 3.200000e+01 : f32
      %29 = vector.broadcast %cst_21 : f32 to vector<18x1xf32>
      %30 = arith.divf %28, %29 : vector<18x1xf32>
      %31 = vector.broadcast %30 : vector<18x1xf32> to vector<18x32xf32>
      %32 = arith.subf %26, %31 : vector<18x32xf32>
      %33 = arith.mulf %32, %32 : vector<18x32xf32>
      %cst_22 = arith.constant dense<0.000000e+00> : vector<18xf32>
      %34 = vector.multi_reduction <add>, %33, %cst_22 [1] : vector<18x32xf32> to vector<18xf32>
      %35 = vector.shape_cast %34 : vector<18xf32> to vector<18x1xf32>
      %cst_23 = arith.constant 3.200000e+01 : f32
      %36 = vector.broadcast %cst_23 : f32 to vector<18x1xf32>
      %37 = arith.divf %35, %36 : vector<18x1xf32>
      %cst_24 = arith.constant 9.99999974E-6 : f32
      %38 = vector.broadcast %cst_24 : f32 to vector<18x1xf32>
      %39 = arith.addf %37, %38 : vector<18x1xf32>
      %40 = math.rsqrt %39 : vector<18x1xf32>
      %41 = vector.broadcast %40 : vector<18x1xf32> to vector<18x32xf32>
      %42 = arith.mulf %32, %41 : vector<18x32xf32>
      %c0_25 = arith.constant 0 : index
      %c0_26 = arith.constant 0 : index
      %43 = vector.load %arg3[%c0_25, %c0_26] : memref<1x32xf32, #tpu.memory_space<vmem>>, vector<1x32xf32>
      %44 = vector.broadcast %43 : vector<1x32xf32> to vector<18x32xf32>
      %45 = arith.mulf %42, %44 : vector<18x32xf32>
      %c0_27 = arith.constant 0 : index
      %c0_28 = arith.constant 0 : index
      %46 = vector.load %arg4[%c0_27, %c0_28] : memref<1x32xf32, #tpu.memory_space<vmem>>, vector<1x32xf32>
      %47 = vector.broadcast %46 : vector<1x32xf32> to vector<18x32xf32>
      %48 = arith.addf %45, %47 : vector<18x32xf32>
      %49 = arith.truncf %48 : vector<18x32xf32> to vector<18x32xbf16>
      %c0_29 = arith.constant 0 : index
      %c0_30 = arith.constant 0 : index
      %50 = vector.load %arg10[%c0_29, %c0_30] : memref<18x32xbf16, #tpu.memory_space<vmem>>, vector<18x32xbf16>
      tpu.vector_store %arg10[%c0_29, %c0_30], %49 {strides = array<i32>} : memref<18x32xbf16, #tpu.memory_space<vmem>>, vector<18x32xbf16>,
      %cst_31 = arith.constant 0.000000e+00 : f32
      %51 = vector.broadcast %cst_31 : f32 to vector<18x32xf32>
      %c0_32 = arith.constant 0 : index
      %c0_33 = arith.constant 0 : index
      %52 = vector.load %arg11[%c0_32, %c0_33] : memref<18x32xf32, #tpu.memory_space<vmem>>, vector<18x32xf32>
      tpu.vector_store %arg11[%c0_32, %c0_33], %51 {strides = array<i32>} : memref<18x32xf32, #tpu.memory_space<vmem>>, vector<18x32xf32>,
    } else {
    }
    %c0 = arith.constant 0 : index
    %c0_1 = arith.constant 0 : index
    %3 = vector.load %arg10[%c0, %c0_1] : memref<18x32xbf16, #tpu.memory_space<vmem>>, vector<18x32xbf16>
    %c0_2 = arith.constant 0 : index
    %c0_3 = arith.constant 0 : index
    %4 = vector.load %arg5[%c0_2, %c0_3] : memref<32x128xbf16, #tpu.memory_space<vmem>>, vector<32x128xbf16>
    %cst = arith.constant dense<0.000000e+00> : vector<18x128xf32>
    %5 = tpu.matmul %3, %4, %cst {dimension_numbers = #tpu.dot_dimension_numbers<[1], [0], [0], [1], [0, 0, 1, 1], [], []>} : vector<18x32xbf16>, vector<32x128xbf16>, vector<18x128xf32> -> vector<18x128xf32>
    %c0_4 = arith.constant 0 : index
    %c0_5 = arith.constant 0 : index
    %6 = vector.load %arg6[%c0_4, %c0_5] : memref<1x128xf32, #tpu.memory_space<vmem>>, vector<1x128xf32>
    %7 = vector.broadcast %6 : vector<1x128xf32> to vector<18x128xf32>
    %8 = arith.addf %5, %7 : vector<18x128xf32>
    %cst_6 = arith.constant 5.000000e-01 : f32
    %9 = vector.broadcast %cst_6 : f32 to vector<18x128xf32>
    %10 = arith.mulf %9, %8 : vector<18x128xf32>
    %cst_7 = arith.constant 0.707106769 : f32
    %11 = vector.broadcast %cst_7 : f32 to vector<18x128xf32>
    %12 = arith.mulf %8, %11 : vector<18x128xf32>
    %13 = math.erf %12 : vector<18x128xf32>
    %cst_8 = arith.constant 1.000000e+00 : f32
    %14 = vector.broadcast %cst_8 : f32 to vector<18x128xf32>
    %15 = arith.addf %14, %13 : vector<18x128xf32>
    %16 = arith.mulf %10, %15 : vector<18x128xf32>
    %c0_9 = arith.constant 0 : index
    %c0_10 = arith.constant 0 : index
    %17 = vector.load %arg11[%c0_9, %c0_10] : memref<18x32xf32, #tpu.memory_space<vmem>>, vector<18x32xf32>
    %18 = arith.truncf %16 : vector<18x128xf32> to vector<18x128xbf16>
    %c0_11 = arith.constant 0 : index
    %c0_12 = arith.constant 0 : index
    %19 = vector.load %arg7[%c0_11, %c0_12] : memref<128x32xbf16, #tpu.memory_space<vmem>>, vector<128x32xbf16>
    %cst_13 = arith.constant dense<0.000000e+00> : vector<18x32xf32>
    %20 = tpu.matmul %18, %19, %cst_13 {dimension_numbers = #tpu.dot_dimension_numbers<[1], [0], [0], [1], [0, 0, 1, 1], [], []>} : vector<18x128xbf16>, vector<128x32xbf16>, vector<18x32xf32> -> vector<18x32xf32>
    %21 = arith.addf %17, %20 : vector<18x32xf32>
    %c0_14 = arith.constant 0 : index
    %c0_15 = arith.constant 0 : index
    %22 = vector.load %arg11[%c0_14, %c0_15] : memref<18x32xf32, #tpu.memory_space<vmem>>, vector<18x32xf32>
    tpu.vector_store %arg11[%c0_14, %c0_15], %21 {strides = array<i32>} : memref<18x32xf32, #tpu.memory_space<vmem>>, vector<18x32xf32>,
    %c0_i32_16 = arith.constant 0 : i32
    %23 = arith.cmpi eq, %arg1, %c0_i32_16 : i32
    %24 = arith.extui %23 : i1 to i32
    %c0_i32_17 = arith.constant 0 : i32
    %25 = arith.cmpi ne, %24, %c0_i32_17 : i32
    scf.if %25 {
      %c0_18 = arith.constant 0 : index
      %c0_19 = arith.constant 0 : index
      %26 = vector.load %arg11[%c0_18, %c0_19] : memref<18x32xf32, #tpu.memory_space<vmem>>, vector<18x32xf32>
      %c0_20 = arith.constant 0 : index
      %c0_21 = arith.constant 0 : index
      %27 = vector.load %arg8[%c0_20, %c0_21] : memref<1x32xf32, #tpu.memory_space<vmem>>, vector<1x32xf32>
      %28 = vector.broadcast %27 : vector<1x32xf32> to vector<18x32xf32>
      %29 = arith.addf %26, %28 : vector<18x32xf32>
      %c0_22 = arith.constant 0 : index
      %c0_23 = arith.constant 0 : index
      %30 = vector.load %arg2[%c0_22, %c0_23] : memref<18x32xf32, #tpu.memory_space<vmem>>, vector<18x32xf32>
      %31 = arith.addf %29, %30 : vector<18x32xf32>
      %c0_24 = arith.constant 0 : index
      %c0_25 = arith.constant 0 : index
      %32 = vector.load %arg9[%c0_24, %c0_25] : memref<18x32xf32, #tpu.memory_space<vmem>>, vector<18x32xf32>
      tpu.vector_store %arg9[%c0_24, %c0_25], %31 {strides = array<i32>} : memref<18x32xf32, #tpu.memory_space<vmem>>, vector<18x32xf32>,
    } else {
    }
    return
  }
  func.func @transform_0(%arg0: i32, %arg1: i32) -> (i32, i32) {
    %c0_i32 = arith.constant 0 : i32
    %c0_i32_0 = arith.constant 0 : i32
    return %arg0, %c0_i32 : i32, i32
  }
  func.func @transform_1(%arg0: i32, %arg1: i32) -> (i32, i32) {
    %c0_i32 = arith.constant 0 : i32
    %c0_i32_0 = arith.constant 0 : i32
    %c0_i32_1 = arith.constant 0 : i32
    return %c0_i32, %c0_i32_0 : i32, i32
  }
  func.func @transform_2(%arg0: i32, %arg1: i32) -> (i32, i32) {
    %c0_i32 = arith.constant 0 : i32
    %c0_i32_0 = arith.constant 0 : i32
    %c0_i32_1 = arith.constant 0 : i32
    return %c0_i32, %c0_i32_0 : i32, i32
  }
  func.func @transform_3(%arg0: i32, %arg1: i32) -> (i32, i32) {
    %c0_i32 = arith.constant 0 : i32
    %c0_i32_0 = arith.constant 0 : i32
    return %c0_i32, %arg1 : i32, i32
  }
  func.func @transform_4(%arg0: i32, %arg1: i32) -> (i32, i32) {
    %c0_i32 = arith.constant 0 : i32
    %c0_i32_0 = arith.constant 0 : i32
    return %c0_i32, %arg1 : i32, i32
  }
  func.func @transform_5(%arg0: i32, %arg1: i32) -> (i32, i32) {
    %c0_i32 = arith.constant 0 : i32
    %c0_i32_0 = arith.constant 0 : i32
    return %arg1, %c0_i32 : i32, i32
  }
  func.func @transform_6(%arg0: i32, %arg1: i32) -> (i32, i32) {
    %c0_i32 = arith.constant 0 : i32
    %c0_i32_0 = arith.constant 0 : i32
    %c0_i32_1 = arith.constant 0 : i32
    return %c0_i32, %c0_i32_0 : i32, i32
  }
  func.func @transform_7(%arg0: i32, %arg1: i32) -> (i32, i32) {
    %c0_i32 = arith.constant 0 : i32
    %c0_i32_0 = arith.constant 0 : i32
    return %arg0, %c0_i32 : i32, i32
  }
}

</mosaic_0001>

<llo_original>
// kernel: block_forward.15
$region0: #{block_forward.15}
  #allocation0 [shape = 'u32[]', space=smem, size = 0x4, offset = 0x4, fixed_abs, tag = 'smem constant byte address 0x4 - core index']
  #allocation1 [shape = 'u32[144,128]{1,0:T(1,128)}', space=vmem, size = 0x12000, scoped, tag = 'internal scratch']
  %s0 = inlined_call_operand.vmem [shape: f32[2,32], index: 0, kind: input, shape index: {}]
  %s1 = inlined_call_operand.vmem [shape: f32[1,32], index: 1, kind: input, shape index: {}]
  %s2 = inlined_call_operand.vmem [shape: f32[1,32], index: 2, kind: input, shape index: {}]
  %s3 = inlined_call_operand.vmem [shape: bf16[32,96], index: 3, kind: input, shape index: {}]
  %s4 = inlined_call_operand.vmem [shape: bf16[2,96], index: 4, kind: output, shape index: {}]
  %s5 = sld [smem:[#allocation0]]
  $region26: #{block_forward.15} parent=0
    _
  %s7 = ssub.s32 1, %s5
  %s8 = scalar_select 0, %s7, %s5
  // Predicated region
  $region2: #{block_forward.15} parent=0 // pred_check
    _
  $region3: #{block_forward.15} parent=0 // pred_check_branch
    %10 = sbr.rel (0) target = $region5
  $region4: #{block_forward.15} parent=0 // pred_region
    _
  $region5: #{block_forward.15} parent=0 // pred_fallthru
    _
  // Predicated region
  $region6: #{block_forward.15} parent=0 // pred_check
    _
  $region7: #{block_forward.15} parent=0 // pred_check_branch
    %12 = sbr.rel (0) target = $region9
  $region8: #{block_forward.15} parent=0 // pred_region
    _
  $region9: #{block_forward.15} parent=0 // pred_fallthru
    _
  // Predicated region
  $region10: #{block_forward.15} parent=0 // pred_check
    _
  $region11: #{block_forward.15} parent=0 // pred_check_branch
    %14 = sbr.rel (0) target = $region13
  $region12: #{block_forward.15} parent=0 // pred_region
    _
  $region13: #{block_forward.15} parent=0 // pred_fallthru
    _
  // Predicated region
  $region14: #{block_forward.15} parent=0 // pred_check
    _
  $region15: #{block_forward.15} parent=0 // pred_check_branch
    %16 = sbr.rel (0) target = $region17
  $region16: #{block_forward.15} parent=0 // pred_region
    _
  $region17: #{block_forward.15} parent=0 // pred_fallthru
    _
  %v18 = vld [vmem:[%s0] sm:$0x3]
  %vm19 = vcmask 254976
  %v20 = vsel %vm19, %v18, 0.0
  %21 = vadd.xlane.f32.xlu0 %v20
  %v22 = vpop.xlane.xlu0 %21
  %v23 = vrcp.pop 32.0
  %v24 = vmul.f32 %v22, %v23
  %v25 = vsub.f32 %v18, %v24
  %v26 = vmul.f32 %v25, %v25
  %v27 = vsel %vm19, %v26, 0.0
  %28 = vadd.xlane.f32.xlu0 %v27
  %v29 = vpop.xlane.xlu0 %28
  %v30 = vmul.f32 %v29, %v23
  %v31 = vadd.f32 %v30, 1e-05
  %v32 = vrsqrt.pop %v31
  %v33 = vmul.f32 %v25, %v32
  %v34 = vld [vmem:[%s1] sm:$0x1]
  %v36 = vlaneseq
  %v37 = vshrl.u32 %v36, 7
  %v38 = vsub.s32 0, %v37
  %v39 = vrot.slane %v34, %v38
  %v41 = vmul.f32 %v33, %v39
  %v42 = vld [vmem:[%s2] sm:$0x1]
  %v44 = vlaneseq
  %v45 = vshrl.u32 %v44, 7
  %v46 = vsub.s32 0, %v45
  %v47 = vrot.slane %v42, %v46
  %v49 = vadd.f32 %v41, %v47
  %v50 = vpack.c.bf16 %v49, %v49
  %v51 = vld [vmem:[%s3] sm:$0xf]
  %v52 = vld [vmem:[%s3 + $0x4] sm:$0xf]
  %v53 = vld [vmem:[%s3 + $0x8] sm:$0xf]
  %v54 = vld [vmem:[%s3 + $0xc] sm:$0xf]
  %v59 = vunpack.c.l.b16 %v51
  %v60 = vunpack.c.l.b16 %v52
  %v61 = vunpack.c.l.b16 %v53
  %v62 = vunpack.c.l.b16 %v54
  %v63 = vpack.c.b16 %v60, %v59
  %v64 = vpack.c.b16 %v62, %v61
  %vm67 = vcmask 261120
  %v69 = vsel %vm67, %v50, 0
  %71 = vmatprep.subr.bf16.mxu0 0
  %72 = vmatpush1.bf16.msra.mxu0 %v63
  %73 = vmatprep.subr.bf16.mxu0 0
  %74 = vmatpush1.bf16.msra.mxu0 %v64
  %75 = vmatprep.subr.bf16.mxu0 0
  %76 = vmatpush1.bf16.msra.mxu0 0
  %77 = vmatprep.subr.bf16.mxu0 0
  %78 = vmatpush1.bf16.msra.mxu0 0
  %79 = vmatprep.subr.bf16.mxu0 0
  %80 = vmatpush1.bf16.msra.mxu0 0
  %81 = vmatprep.subr.bf16.mxu0 0
  %82 = vmatpush1.bf16.msra.mxu0 0
  %83 = vmatprep.subr.bf16.mxu0 0
  %84 = vmatpush1.bf16.msra.mxu0 0
  %85 = vmatprep.subr.bf16.mxu0 0
  %86 = vmatpush1.bf16.msra.mxu0 0
  %87 = vmatprep.subr.bf16.mxu0 0
  %88 = vmatpush1.bf16.msra.mxu0 0
  %89 = vmatprep.subr.bf16.mxu0 0
  %90 = vmatpush1.bf16.msra.mxu0 0
  %91 = vmatprep.subr.bf16.mxu0 0
  %92 = vmatpush1.bf16.msra.mxu0 0
  %93 = vmatprep.subr.bf16.mxu0 0
  %94 = vmatpush1.bf16.msra.mxu0 0
  %95 = vmatprep.subr.bf16.mxu0 0
  %96 = vmatpush1.bf16.msra.mxu0 0
  %97 = vmatprep.subr.bf16.mxu0 0
  %98 = vmatpush1.bf16.msra.mxu0 0
  %99 = vmatprep.subr.bf16.mxu0 0
  %100 = vmatpush1.bf16.msra.mxu0 0
  %101 = vmatprep.subr.bf16.mxu0 0
  %102 = vmatpush1.bf16.msra.mxu0 0
  %103 = vmatprep.mubr.bf16.mxu0 0
  %104 = vmatmul.mubr.bf16.gmra.mrb[0].mxu0 %v69
  %v105 = vpop.f32.mrb[0].mxu0
  %v106 = vadd.f32 0.0, %v105
  %v107 = vpop.f32.mrb[0].mxu0
  %v108 = vpop.f32.mrb[0].mxu0
  %v109 = vpop.f32.mrb[0].mxu0
  %110 = vdwg.mxu0
  %v111 = vpack.c.bf16 %v106, %v106
  %vm112 = vcmask 778240
  %113 = vst.msk [vmem:[%s4] sm:$0x1] %vm112, %v111
  // Predicated region
  $region18: #{block_forward.15} parent=0 // pred_check
    _
  $region19: #{block_forward.15} parent=0 // pred_check_branch
    %115 = sbr.rel (0) target = $region21
  $region20: #{block_forward.15} parent=0 // pred_region
    _
  $region21: #{block_forward.15} parent=0 // pred_fallthru
    _
  // Predicated region
  $region22: #{block_forward.15} parent=0 // pred_check
    _
  $region23: #{block_forward.15} parent=0 // pred_check_branch
    %117 = sbr.rel (0) target = $region25
  $region24: #{block_forward.15} parent=0 // pred_region
    _
  $region25: #{block_forward.15} parent=0 // pred_fallthru
    _

// kernel: block_forward.10
$region0: #{block_forward.10}
  #allocation0 [shape = 'u32[]', space=smem, size = 0x4, offset = 0x4, fixed_abs, tag = 'smem constant byte address 0x4 - core index']
  #allocation1 [shape = 'u32[144,128]{1,0:T(1,128)}', space=vmem, size = 0x12000, scoped, tag = 'internal scratch']
  %s0 = inlined_call_operand.vmem [shape: f32[16,32], index: 0, kind: input, shape index: {}]
  %s1 = inlined_call_operand.vmem [shape: f32[1,32], index: 1, kind: input, shape index: {}]
  %s2 = inlined_call_operand.vmem [shape: f32[1,32], index: 2, kind: input, shape index: {}]
  %s3 = inlined_call_operand.vmem [shape: bf16[32,96], index: 3, kind: input, shape index: {}]
  %s4 = inlined_call_operand.vmem [shape: bf16[16,96], index: 4, kind: output, shape index: {}]
  %s5 = sld [smem:[#allocation0]]
  $region26: #{block_forward.10} parent=0
    _
  %s7 = ssub.s32 1, %s5
  %s8 = scalar_select 0, %s7, %s5
  // Predicated region
  $region2: #{block_forward.10} parent=0 // pred_check
    _
  $region3: #{block_forward.10} parent=0 // pred_check_branch
    %10 = sbr.rel (0) target = $region5
  $region4: #{block_forward.10} parent=0 // pred_region
    _
  $region5: #{block_forward.10} parent=0 // pred_fallthru
    _
  // Predicated region
  $region6: #{block_forward.10} parent=0 // pred_check
    _
  $region7: #{block_forward.10} parent=0 // pred_check_branch
    %12 = sbr.rel (0) target = $region9
  $region8: #{block_forward.10} parent=0 // pred_region
    _
  $region9: #{block_forward.10} parent=0 // pred_fallthru
    _
  // Predicated region
  $region10: #{block_forward.10} parent=0 // pred_check
    _
  $region11: #{block_forward.10} parent=0 // pred_check_branch
    %14 = sbr.rel (0) target = $region13
  $region12: #{block_forward.10} parent=0 // pred_region
    _
  $region13: #{block_forward.10} parent=0 // pred_fallthru
    _
  // Predicated region
  $region14: #{block_forward.10} parent=0 // pred_check
    _
  $region15: #{block_forward.10} parent=0 // pred_check_branch
    %16 = sbr.rel (0) target = $region17
  $region16: #{block_forward.10} parent=0 // pred_region
    _
  $region17: #{block_forward.10} parent=0 // pred_fallthru
    _
  %v18 = vld [vmem:[%s0] sm:$0xff]
  %v19 = vld [vmem:[%s0 + $0x8] sm:$0xff]
  %vm20 = vcmask 261120
  %v21 = vsel %vm20, %v18, 0.0
  %22 = vadd.xlane.f32.xlu0 %v21
  %v23 = vpop.xlane.xlu0 %22
  %v24 = vsel %vm20, %v19, 0.0
  %25 = vadd.xlane.f32.xlu0 %v24
  %v26 = vpop.xlane.xlu0 %25
  %v27 = vrcp.pop 32.0
  %v28 = vmul.f32 %v23, %v27
  %v29 = vmul.f32 %v26, %v27
  %v30 = vsub.f32 %v18, %v28
  %v31 = vsub.f32 %v19, %v29
  %v32 = vmul.f32 %v30, %v30
  %v33 = vmul.f32 %v31, %v31
  %v34 = vsel %vm20, %v32, 0.0
  %35 = vadd.xlane.f32.xlu0 %v34
  %v36 = vpop.xlane.xlu0 %35
  %v37 = vsel %vm20, %v33, 0.0
  %38 = vadd.xlane.f32.xlu0 %v37
  %v39 = vpop.xlane.xlu0 %38
  %v40 = vmul.f32 %v36, %v27
  %v41 = vmul.f32 %v39, %v27
  %v42 = vadd.f32 %v40, 1e-05
  %v43 = vadd.f32 %v41, 1e-05
  %v44 = vrsqrt.pop %v42
  %v45 = vrsqrt.pop %v43
  %v46 = vmul.f32 %v30, %v44
  %v47 = vmul.f32 %v31, %v45
  %v48 = vld [vmem:[%s1] sm:$0x1]
  %v50 = vlaneseq
  %v51 = vshrl.u32 %v50, 7
  %v52 = vsub.s32 0, %v51
  %v53 = vrot.slane %v48, %v52
  %v55 = vmul.f32 %v46, %v53
  %v56 = vmul.f32 %v47, %v53
  %v57 = vld [vmem:[%s2] sm:$0x1]
  %v59 = vlaneseq
  %v60 = vshrl.u32 %v59, 7
  %v61 = vsub.s32 0, %v60
  %v62 = vrot.slane %v57, %v61
  %v64 = vadd.f32 %v55, %v62
  %v65 = vadd.f32 %v56, %v62
  %v66 = vpack.c.bf16 %v65, %v64
  %v67 = vld [vmem:[%s3] sm:$0xf]
  %v68 = vld [vmem:[%s3 + $0x4] sm:$0xf]
  %v69 = vld [vmem:[%s3 + $0x8] sm:$0xf]
  %v70 = vld [vmem:[%s3 + $0xc] sm:$0xf]
  %v75 = vunpack.c.l.b16 %v67
  %v76 = vunpack.c.l.b16 %v68
  %v77 = vunpack.c.l.b16 %v69
  %v78 = vunpack.c.l.b16 %v70
  %v79 = vpack.c.b16 %v76, %v75
  %v80 = vpack.c.b16 %v78, %v77
  %v84 = vsel %vm20, %v66, 0
  %86 = vmatprep.subr.bf16.mxu0 0
  %87 = vmatpush1.bf16.msra.mxu0 %v79
  %88 = vmatprep.subr.bf16.mxu0 0
  %89 = vmatpush1.bf16.msra.mxu0 %v80
  %90 = vmatprep.subr.bf16.mxu0 0
  %91 = vmatpush1.bf16.msra.mxu0 0
  %92 = vmatprep.subr.bf16.mxu0 0
  %93 = vmatpush1.bf16.msra.mxu0 0
  %94 = vmatprep.subr.bf16.mxu0 0
  %95 = vmatpush1.bf16.msra.mxu0 0
  %96 = vmatprep.subr.bf16.mxu0 0
  %97 = vmatpush1.bf16.msra.mxu0 0
  %98 = vmatprep.subr.bf16.mxu0 0
  %99 = vmatpush1.bf16.msra.mxu0 0
  %100 = vmatprep.subr.bf16.mxu0 0
  %101 = vmatpush1.bf16.msra.mxu0 0
  %102 = vmatprep.subr.bf16.mxu0 0
  %103 = vmatpush1.bf16.msra.mxu0 0
  %104 = vmatprep.subr.bf16.mxu0 0
  %105 = vmatpush1.bf16.msra.mxu0 0
  %106 = vmatprep.subr.bf16.mxu0 0
  %107 = vmatpush1.bf16.msra.mxu0 0
  %108 = vmatprep.subr.bf16.mxu0 0
  %109 = vmatpush1.bf16.msra.mxu0 0
  %110 = vmatprep.subr.bf16.mxu0 0
  %111 = vmatpush1.bf16.msra.mxu0 0
  %112 = vmatprep.subr.bf16.mxu0 0
  %113 = vmatpush1.bf16.msra.mxu0 0
  %114 = vmatprep.subr.bf16.mxu0 0
  %115 = vmatpush1.bf16.msra.mxu0 0
  %116 = vmatprep.subr.bf16.mxu0 0
  %117 = vmatpush1.bf16.msra.mxu0 0
  %118 = vmatprep.mubr.bf16.mxu0 0
  %119 = vmatmul.mubr.bf16.gmra.mrb[0].mxu0 %v84
  %v120 = vpop.f32.mrb[0].mxu0
  %v121 = vadd.f32 0.0, %v120
  %v122 = vpop.f32.mrb[0].mxu0
  %v123 = vpop.f32.mrb[0].mxu0
  %v124 = vadd.f32 0.0, %v123
  %v125 = vpop.f32.mrb[0].mxu0
  %126 = vdwg.mxu0
  %v127 = vpack.c.bf16 %v124, %v121
  %v129 = vunpack.c.l.b16 %v127
  %v130 = vunpack.c.h.b16 %v127
  %v131 = vpack.c.b16 %v129, %v129
  %v132 = vpack.c.b16 %v130, %v130
  %vm135 = vcmask 781312
  %136 = vst.msk [vmem:[%s4] sm:$0xf] %vm135, %v131
  %137 = vst.msk [vmem:[%s4 + $0x4] sm:$0xf] %vm135, %v132
  // Predicated region
  $region18: #{block_forward.10} parent=0 // pred_check
    _
  $region19: #{block_forward.10} parent=0 // pred_check_branch
    %139 = sbr.rel (0) target = $region21
  $region20: #{block_forward.10} parent=0 // pred_region
    _
  $region21: #{block_forward.10} parent=0 // pred_fallthru
    _
  // Predicated region
  $region22: #{block_forward.10} parent=0 // pred_check
    _
  $region23: #{block_forward.10} parent=0 // pred_check_branch
    %141 = sbr.rel (0) target = $region25
  $region24: #{block_forward.10} parent=0 // pred_region
    _
  $region25: #{block_forward.10} parent=0 // pred_fallthru
    _

// kernel: block_forward.12
$region0: #{block_forward.12}
  #allocation0 [shape = 'u32[]', space=smem, size = 0x4, offset = 0x4, fixed_abs, tag = 'smem constant byte address 0x4 - core index']
  #allocation1 [shape = 'u32[144,128]{1,0:T(1,128)}', space=vmem, size = 0x12000, scoped, tag = 'internal scratch']
  %s0 = inlined_call_operand.vmem [shape: bf16[16,32], index: 0, kind: input, shape index: {}]
  %s1 = inlined_call_operand.vmem [shape: bf16[32,32], index: 1, kind: input, shape index: {}]
  %s2 = inlined_call_operand.vmem [shape: f32[1,32], index: 2, kind: input, shape index: {}]
  %s3 = inlined_call_operand.vmem [shape: bf16[16,32], index: 3, kind: output, shape index: {}]
  %s4 = sld [smem:[#allocation0]]
  $region22: #{block_forward.12} parent=0
    _
  %s6 = ssub.s32 1, %s4
  %s7 = scalar_select 0, %s6, %s4
  // Predicated region
  $region2: #{block_forward.12} parent=0 // pred_check
    _
  $region3: #{block_forward.12} parent=0 // pred_check_branch
    %9 = sbr.rel (0) target = $region5
  $region4: #{block_forward.12} parent=0 // pred_region
    _
  $region5: #{block_forward.12} parent=0 // pred_fallthru
    _
  // Predicated region
  $region6: #{block_forward.12} parent=0 // pred_check
    _
  $region7: #{block_forward.12} parent=0 // pred_check_branch
    %11 = sbr.rel (0) target = $region9
  $region8: #{block_forward.12} parent=0 // pred_region
    _
  $region9: #{block_forward.12} parent=0 // pred_fallthru
    _
  // Predicated region
  $region10: #{block_forward.12} parent=0 // pred_check
    _
  $region11: #{block_forward.12} parent=0 // pred_check_branch
    %13 = sbr.rel (0) target = $region13
  $region12: #{block_forward.12} parent=0 // pred_region
    _
  $region13: #{block_forward.12} parent=0 // pred_fallthru
    _
  %v15 = vld [vmem:[%s0] sm:$0xf]
  %v16 = vld [vmem:[%s0 + $0x4] sm:$0xf]
  %v17 = vld [vmem:[%s1] sm:$0xf]
  %v18 = vld [vmem:[%s1 + $0x4] sm:$0xf]
  %v19 = vld [vmem:[%s1 + $0x8] sm:$0xf]
  %v20 = vld [vmem:[%s1 + $0xc] sm:$0xf]
  %v21 = vld [vmem:[%s2] sm:$0x1]
  %v23 = vlaneseq
  %v24 = vshrl.u32 %v23, 7
  %v25 = vsub.s32 0, %v24
  %v26 = vrot.slane %v21, %v25
  %v30 = vunpack.c.l.b16 %v15
  %v31 = vunpack.c.l.b16 %v16
  %v32 = vpack.c.b16 %v31, %v30
  %v37 = vunpack.c.l.b16 %v17
  %v38 = vunpack.c.l.b16 %v18
  %v39 = vunpack.c.l.b16 %v19
  %v40 = vunpack.c.l.b16 %v20
  %v41 = vpack.c.b16 %v38, %v37
  %v42 = vpack.c.b16 %v40, %v39
  %vm45 = vcmask 261120
  %v47 = vsel %vm45, %v32, 0
  %49 = vmatprep.subr.bf16.mxu0 0
  %50 = vmatpush1.bf16.msra.mxu0 %v41
  %51 = vmatprep.subr.bf16.mxu0 0
  %52 = vmatpush1.bf16.msra.mxu0 %v42
  %53 = vmatprep.subr.bf16.mxu0 0
  %54 = vmatpush1.bf16.msra.mxu0 0
  %55 = vmatprep.subr.bf16.mxu0 0
  %56 = vmatpush1.bf16.msra.mxu0 0
  %57 = vmatprep.subr.bf16.mxu0 0
  %58 = vmatpush1.bf16.msra.mxu0 0
  %59 = vmatprep.subr.bf16.mxu0 0
  %60 = vmatpush1.bf16.msra.mxu0 0
  %61 = vmatprep.subr.bf16.mxu0 0
  %62 = vmatpush1.bf16.msra.mxu0 0
  %63 = vmatprep.subr.bf16.mxu0 0
  %64 = vmatpush1.bf16.msra.mxu0 0
  %65 = vmatprep.subr.bf16.mxu0 0
  %66 = vmatpush1.bf16.msra.mxu0 0
  %67 = vmatprep.subr.bf16.mxu0 0
  %68 = vmatpush1.bf16.msra.mxu0 0
  %69 = vmatprep.subr.bf16.mxu0 0
  %70 = vmatpush1.bf16.msra.mxu0 0
  %71 = vmatprep.subr.bf16.mxu0 0
  %72 = vmatpush1.bf16.msra.mxu0 0
  %73 = vmatprep.subr.bf16.mxu0 0
  %74 = vmatpush1.bf16.msra.mxu0 0
  %75 = vmatprep.subr.bf16.mxu0 0
  %76 = vmatpush1.bf16.msra.mxu0 0
  %77 = vmatprep.subr.bf16.mxu0 0
  %78 = vmatpush1.bf16.msra.mxu0 0
  %79 = vmatprep.subr.bf16.mxu0 0
  %80 = vmatpush1.bf16.msra.mxu0 0
  %81 = vmatprep.mubr.bf16.mxu0 0
  %82 = vmatmul.mubr.bf16.gmra.mrb[0].mxu0 %v47
  %v83 = vpop.f32.mrb[0].mxu0
  %v84 = vadd.f32 %v26, %v83
  %v85 = vpop.f32.mrb[0].mxu0
  %v86 = vpop.f32.mrb[0].mxu0
  %v87 = vadd.f32 %v26, %v86
  %v88 = vpop.f32.mrb[0].mxu0
  %89 = vdwg.mxu0
  %v90 = vpack.c.bf16 %v87, %v84
  %v92 = vunpack.c.l.b16 %v90
  %v93 = vunpack.c.h.b16 %v90
  %v94 = vpack.c.b16 %v92, %v92
  %v95 = vpack.c.b16 %v93, %v93
  %vm98 = vcmask 257024
  %99 = vst.msk [vmem:[%s3] sm:$0xf] %vm98, %v94
  %100 = vst.msk [vmem:[%s3 + $0x4] sm:$0xf] %vm98, %v95
  // Predicated region
  $region14: #{block_forward.12} parent=0 // pred_check
    _
  $region15: #{block_forward.12} parent=0 // pred_check_branch
    %102 = sbr.rel (0) target = $region17
  $region16: #{block_forward.12} parent=0 // pred_region
    _
  $region17: #{block_forward.12} parent=0 // pred_fallthru
    _
  // Predicated region
  $region18: #{block_forward.12} parent=0 // pred_check
    _
  $region19: #{block_forward.12} parent=0 // pred_check_branch
    %104 = sbr.rel (0) target = $region21
  $region20: #{block_forward.12} parent=0 // pred_region
    _
  $region21: #{block_forward.12} parent=0 // pred_fallthru
    _

// kernel: block_forward.11
$region0: #{block_forward.11}
  #allocation0 [shape = 'u32[]', space=smem, size = 0x4, offset = 0x4, fixed_abs, tag = 'smem constant byte address 0x4 - core index']
  #allocation1 [shape = 'u32[144,128]{1,0:T(1,128)}', space=vmem, size = 0x12000, scoped, tag = 'internal scratch']
  %s0 = inlined_call_operand.vmem [shape: bf16[8,2,96], index: 0, kind: input, shape index: {}]
  %s1 = inlined_call_operand.vmem [shape: bf16[8,2,32], index: 1, kind: output, shape index: {}]
  %s2 = sld [smem:[#allocation0]]
  $region37: #{block_forward.11} parent=0
    _
  %s4 = ssub.s32 1, %s2
  %s5 = scalar_select 0, %s4, %s2
  loop: start=0, step=1, limit=6
  $region2: #{block_forward.11} parent=0 // loop_pre_header
    _
  $region3: #{block_forward.11} parent=0 // loop_header
    %s7 = sphi 0, %s11
    %p8 = scmp.ge.s32.totalorder %s7, 6
    %s17 = sphi 0, %s19
    %s20 = sphi 0, %s17
    %s21 = sphi 0, %s20
    %s37 = sphi 0, %s21
    %s43 = sphi 0, %s45
    %s46 = sphi 0, %s43
    %s47 = sphi 0, %s46
    %s63 = sphi 0, %s47
  $region4: #{block_forward.11} parent=0 // loop_header_branch
    %10 = sbr.rel (%p8) target = $region8
  $region5: #{block_forward.11} parent=0 // loop_body
    %s12 = ssub.s32 %s7, 1
    %s13 = ssub.s32 %s7, 2
    %s14 = sadd.s32 %s7, 1
    %s15 = ssub.s32 %s7, %s14
    %p16 = scmp.eq.s32.totalorder %s15, 0
    %s18 = sadd.s32 %s17, 1
    %s19 = scalar_select %p16, %s17, %s18
    %p22 = pneg %p16
    %p23 = scmp.eq.s32.totalorder %s7, 3
    %p24 = por %p22, %p23
    %p25 = scmp.ne.s32.totalorder %s17, %s20
    %p26 = scmp.eq.s32.totalorder %s7, 0
    %p27 = por %p25, %p26
    %p28 = scmp.ne.s32.totalorder %s17, %s20
    %p29 = scmp.eq.s32.totalorder %s12, 3
    %p30 = por %p28, %p29
    %p31 = scmp.ne.s32.totalorder %s20, %s21
    %p32 = scmp.eq.s32.totalorder %s12, 0
    %p33 = por %p31, %p32
    %p34 = scmp.ne.s32.totalorder %s20, %s21
    %p35 = scmp.eq.s32.totalorder %s13, 3
    %p36 = por %p34, %p35
    %p38 = scmp.ne.s32.totalorder %s21, %s37
    %p39 = scmp.eq.s32.totalorder %s13, 0
    %p40 = por %p38, %p39
    %s41 = ssub.s32 %s7, %s14
    %p42 = scmp.eq.s32.totalorder %s41, 0
    %s44 = sadd.s32 %s43, 1
    %s45 = scalar_select %p42, %s43, %s44
    %p48 = pneg %p42
    %p49 = scmp.eq.s32.totalorder %s7, 3
    %p50 = por %p48, %p49
    %p51 = scmp.ne.s32.totalorder %s43, %s46
    %p52 = scmp.eq.s32.totalorder %s7, 0
    %p53 = por %p51, %p52
    %p54 = scmp.ne.s32.totalorder %s43, %s46
    %p55 = scmp.eq.s32.totalorder %s12, 3
    %p56 = por %p54, %p55
    %p57 = scmp.ne.s32.totalorder %s46, %s47
    %p58 = scmp.eq.s32.totalorder %s12, 0
    %p59 = por %p57, %p58
    %p60 = scmp.ne.s32.totalorder %s46, %s47
    %p61 = scmp.eq.s32.totalorder %s13, 3
    %p62 = por %p60, %p61
    %p64 = scmp.ne.s32.totalorder %s47, %s63
    %p65 = scmp.eq.s32.totalorder %s13, 0
    %p66 = por %p64, %p65
    %p67 = scmp.le.s32.totalorder 1, %s7
    %p68 = scmp.lt.s32.totalorder %s7, 5
    %p69 = pnand %p67, %p68
    %p70 = pneg %p69
    // Predicated region
    $region9: #{block_forward.11} parent=5 // pred_check
      _
    $region10: #{block_forward.11} parent=5 // pred_check_branch
      %72 = sbr.rel (%p69) target = $region12
    $region11: #{block_forward.11} parent=5 // pred_region
      %s73 = ssub.s32 %s7, 1
    $region12: #{block_forward.11} parent=5 // pred_fallthru
      _
    %p74 = scmp.lt.s32.totalorder %s7, 4
    // Predicated region
    $region13: #{block_forward.11} parent=5 // pred_check
      %p75 = pneg %p74
    $region14: #{block_forward.11} parent=5 // pred_check_branch
      %77 = sbr.rel (%p75) target = $region16
    $region15: #{block_forward.11} parent=5 // pred_region
      // Predicated region
      $region17: #{block_forward.11} parent=15 // pred_check
        %p78 = pneg %p27
      $region18: #{block_forward.11} parent=15 // pred_check_branch
        %80 = sbr.rel (%p78) target = $region20
      $region19: #{block_forward.11} parent=15 // pred_region
        %s81 = smul.u32 2, %s7
        %p82 = scmp.lt.s32.totalorder %s81, 7
        %s83 = scalar_select %p82, %s81, 7
        %s84 = scalar_lea.vmem %s0, %s83
        %s85 = smul.u32 2, %s7
      $region20: #{block_forward.11} parent=15 // pred_fallthru
        _
    $region16: #{block_forward.11} parent=5 // pred_fallthru
      _
    %p86 = scmp.le.s32.totalorder 1, %s7
    %p87 = scmp.lt.s32.totalorder %s7, 5
    %p88 = pnand %p86, %p87
    %p89 = pneg %p88
    // Predicated region
    $region21: #{block_forward.11} parent=5 // pred_check
      _
    $region22: #{block_forward.11} parent=5 // pred_check_branch
      %91 = sbr.rel (%p88) target = $region24
    $region23: #{block_forward.11} parent=5 // pred_region
      %s92 = ssub.s32 %s7, 1
      %s93 = smul.u32 2, %s12
      %p94 = scmp.lt.s32.totalorder %s93, 7
      %s95 = scalar_select %p94, %s93, 7
      %s96 = scalar_lea.vmem %s0, %s95
      %p97 = pneg %p33
      %p98 = pneg %p30
      %p99 = pneg %p59
      %p100 = pneg %p56
      %s101 = smul.u32 2, %s12
      %p102 = scmp.lt.s32.totalorder %s101, 7
      %s103 = scalar_select %p102, %s101, 7
      %s104 = scalar_lea.vmem %s1, %s103
      %s105 = smul.u32 2, %s12
      %p106 = scmp.lt.s32.totalorder %s105, 7
      %s107 = scalar_select %p106, %s105, 7
      %s108 = scalar_lea.vmem %s0, %s107
      %s109 = smul.u32 2, %s12
      %s110 = smul.u32 2, %s12
      %p111 = scmp.lt.s32.totalorder %s110, 7
      %s112 = scalar_select %p111, %s110, 7
      %s113 = scalar_lea.vmem %s1, %s112
      %s114 = smul.u32 2, %s12
      %v116 = vld [vmem:[%s108] sm:$0x1]
      %v117 = vld [vmem:[%s108 + $0x1] sm:$0x1]
      %v120 = vunpack.c.l.s4 1966171168
      %v121 = vunpack.c.0.s8 %v120
      %v122 = vlaneseq
      %v123 = vshrl.u32 %v122, 7
      %v124 = vsub.s32 %v121, %v123
      %v125 = vrot.slane %v116, %v124
      %v127 = vunpack.c.l.s4 1966171168
      %v128 = vunpack.c.0.s8 %v127
      %v129 = vlaneseq
      %v130 = vshrl.u32 %v129, 7
      %v131 = vsub.s32 %v128, %v130
      %v132 = vrot.slane %v125, %v131
      %133 = vrot.lane.b32.xlu0 %v132, 96
      %v134 = vpop.permute.xlu0 %133
      %vm135 = vcmask 64512
      %v137 = vsel %vm135, %v116, 0
      %v140 = vsel %vm135, %v134, 0
      %142 = vmatprep.subr.bf16.mxu0 0
      %143 = vmatpush1.bf16.xpose.msra.mxu0 %v140
      %144 = vmatprep.subr.bf16.mxu0 0
      %145 = vmatpush1.bf16.xpose.msra.mxu0 0
      %146 = vmatprep.subr.bf16.mxu0 0
      %147 = vmatpush1.bf16.xpose.msra.mxu0 0
      %148 = vmatprep.subr.bf16.mxu0 0
      %149 = vmatpush1.bf16.xpose.msra.mxu0 0
      %150 = vmatprep.subr.bf16.mxu0 0
      %151 = vmatpush1.bf16.xpose.msra.mxu0 0
      %152 = vmatprep.subr.bf16.mxu0 0
      %153 = vmatpush1.bf16.xpose.msra.mxu0 0
      %154 = vmatprep.subr.bf16.mxu0 0
      %155 = vmatpush1.bf16.xpose.msra.mxu0 0
      %156 = vmatprep.subr.bf16.mxu0 0
      %157 = vmatpush1.bf16.xpose.msra.mxu0 0
      %158 = vmatprep.subr.bf16.mxu0 0
      %159 = vmatpush1.bf16.xpose.msra.mxu0 0
      %160 = vmatprep.subr.bf16.mxu0 0
      %161 = vmatpush1.bf16.xpose.msra.mxu0 0
      %162 = vmatprep.subr.bf16.mxu0 0
      %163 = vmatpush1.bf16.xpose.msra.mxu0 0
      %164 = vmatprep.subr.bf16.mxu0 0
      %165 = vmatpush1.bf16.xpose.msra.mxu0 0
      %166 = vmatprep.subr.bf16.mxu0 0
      %167 = vmatpush1.bf16.xpose.msra.mxu0 0
      %168 = vmatprep.subr.bf16.mxu0 0
      %169 = vmatpush1.bf16.xpose.msra.mxu0 0
      %170 = vmatprep.subr.bf16.mxu0 0
      %171 = vmatpush1.bf16.xpose.msra.mxu0 0
      %172 = vmatprep.subr.bf16.mxu0 0
      %173 = vmatpush1.bf16.xpose.msra.mxu0 0
      %174 = vmatprep.mubr.bf16.mxu0 0
      %175 = vmatmul.mubr.bf16.gmra.mrb[0].mxu0 %v137
      %v176 = vpop.f32.mrb[0].mxu0
      %v177 = vadd.f32 0.0, %v176
      %v178 = vpop.f32.mrb[0].mxu0
      %v179 = vpop.f32.mrb[0].mxu0
      %v180 = vpop.f32.mrb[0].mxu0
      %181 = vdwg.mxu0
      %v184 = vunpack.c.l.s4 1966171168
      %v185 = vunpack.c.0.s8 %v184
      %v186 = vlaneseq
      %v187 = vshrl.u32 %v186, 7
      %v188 = vsub.s32 %v185, %v187
      %v189 = vrot.slane %v117, %v188
      %v191 = vunpack.c.l.s4 1966171168
      %v192 = vunpack.c.0.s8 %v191
      %v193 = vlaneseq
      %v194 = vshrl.u32 %v193, 7
      %v195 = vsub.s32 %v192, %v194
      %v196 = vrot.slane %v189, %v195
      %197 = vrot.lane.b32.xlu0 %v196, 96
      %v198 = vpop.permute.xlu0 %197
      %v200 = vsel %vm135, %v117, 0
      %v203 = vsel %vm135, %v198, 0
      %205 = vmatprep.subr.bf16.mxu0 0
      %206 = vmatpush1.bf16.xpose.msra.mxu0 %v203
      %207 = vmatprep.subr.bf16.mxu0 0
      %208 = vmatpush1.bf16.xpose.msra.mxu0 0
      %209 = vmatprep.subr.bf16.mxu0 0
      %210 = vmatpush1.bf16.xpose.msra.mxu0 0
      %211 = vmatprep.subr.bf16.mxu0 0
      %212 = vmatpush1.bf16.xpose.msra.mxu0 0
      %213 = vmatprep.subr.bf16.mxu0 0
      %214 = vmatpush1.bf16.xpose.msra.mxu0 0
      %215 = vmatprep.subr.bf16.mxu0 0
      %216 = vmatpush1.bf16.xpose.msra.mxu0 0
      %217 = vmatprep.subr.bf16.mxu0 0
      %218 = vmatpush1.bf16.xpose.msra.mxu0 0
      %219 = vmatprep.subr.bf16.mxu0 0
      %220 = vmatpush1.bf16.xpose.msra.mxu0 0
      %221 = vmatprep.subr.bf16.mxu0 0
      %222 = vmatpush1.bf16.xpose.msra.mxu0 0
      %223 = vmatprep.subr.bf16.mxu0 0
      %224 = vmatpush1.bf16.xpose.msra.mxu0 0
      %225 = vmatprep.subr.bf16.mxu0 0
      %226 = vmatpush1.bf16.xpose.msra.mxu0 0
      %227 = vmatprep.subr.bf16.mxu0 0
      %228 = vmatpush1.bf16.xpose.msra.mxu0 0
      %229 = vmatprep.subr.bf16.mxu0 0
      %230 = vmatpush1.bf16.xpose.msra.mxu0 0
      %231 = vmatprep.subr.bf16.mxu0 0
      %232 = vmatpush1.bf16.xpose.msra.mxu0 0
      %233 = vmatprep.subr.bf16.mxu0 0
      %234 = vmatpush1.bf16.xpose.msra.mxu0 0
      %235 = vmatprep.subr.bf16.mxu0 0
      %236 = vmatpush1.bf16.xpose.msra.mxu0 0
      %237 = vmatprep.mubr.bf16.mxu0 0
      %238 = vmatmul.mubr.bf16.gmra.mrb[0].mxu0 %v200
      %v239 = vpop.f32.mrb[0].mxu0
      %v240 = vadd.f32 0.0, %v239
      %v241 = vpop.f32.mrb[0].mxu0
      %v242 = vpop.f32.mrb[0].mxu0
      %v243 = vpop.f32.mrb[0].mxu0
      %244 = vdwg.mxu0
      %v245 = vmul.f32 %v177, 0.35355338
      %v246 = vmul.f32 %v240, 0.35355338
      %vm247 = vcmask 9216
      %v248 = vsel %vm247, %v245, -inf
      %249 = vmax.xlane.f32.xlu0 %v248
      %v250 = vpop.xlane.xlu0 %249
      %v251 = vsel %vm247, %v246, -inf
      %252 = vmax.xlane.f32.xlu0 %v251
      %v253 = vpop.xlane.xlu0 %252
      %v254 = vsub.f32 %v245, %v250
      %v255 = vsub.f32 %v246, %v253
      %v256 = vmul.f32 %v254, 1.442695
      %v257 = vpow.pop %v256
      %v258 = vmul.f32 %v255, 1.442695
      %v259 = vpow.pop %v258
      %v260 = vpack.c.bf16 %v257, %v257
      %v261 = vpack.c.bf16 %v259, %v259
      %262 = vrot.lane.b32.xlu0 %v132, 64
      %v263 = vpop.permute.xlu0 %262
      %vm264 = vcmask 15360
      %v266 = vsel %vm264, %v260, 0
      %vm268 = vcmask 1040384
      %v270 = vsel %vm268, %v263, 0
      %272 = vmatprep.subr.bf16.mxu0 0
      %273 = vmatpush1.bf16.msra.mxu0 %v270
      %274 = vmatprep.subr.bf16.mxu0 0
      %275 = vmatpush1.bf16.msra.mxu0 0
      %276 = vmatprep.subr.bf16.mxu0 0
      %277 = vmatpush1.bf16.msra.mxu0 0
      %278 = vmatprep.subr.bf16.mxu0 0
      %279 = vmatpush1.bf16.msra.mxu0 0
      %280 = vmatprep.subr.bf16.mxu0 0
      %281 = vmatpush1.bf16.msra.mxu0 0
      %282 = vmatprep.subr.bf16.mxu0 0
      %283 = vmatpush1.bf16.msra.mxu0 0
      %284 = vmatprep.subr.bf16.mxu0 0
      %285 = vmatpush1.bf16.msra.mxu0 0
      %286 = vmatprep.subr.bf16.mxu0 0
      %287 = vmatpush1.bf16.msra.mxu0 0
      %288 = vmatprep.subr.bf16.mxu0 0
      %289 = vmatpush1.bf16.msra.mxu0 0
      %290 = vmatprep.subr.bf16.mxu0 0
      %291 = vmatpush1.bf16.msra.mxu0 0
      %292 = vmatprep.subr.bf16.mxu0 0
      %293 = vmatpush1.bf16.msra.mxu0 0
      %294 = vmatprep.subr.bf16.mxu0 0
      %295 = vmatpush1.bf16.msra.mxu0 0
      %296 = vmatprep.subr.bf16.mxu0 0
      %297 = vmatpush1.bf16.msra.mxu0 0
      %298 = vmatprep.subr.bf16.mxu0 0
      %299 = vmatpush1.bf16.msra.mxu0 0
      %300 = vmatprep.subr.bf16.mxu0 0
      %301 = vmatpush1.bf16.msra.mxu0 0
      %302 = vmatprep.subr.bf16.mxu0 0
      %303 = vmatpush1.bf16.msra.mxu0 0
      %304 = vmatprep.mubr.bf16.mxu0 0
      %305 = vmatmul.mubr.bf16.gmra.mrb[0].mxu0 %v266
      %v306 = vpop.f32.mrb[0].mxu0
      %v307 = vadd.f32 0.0, %v306
      %v308 = vpop.f32.mrb[0].mxu0
      %v309 = vpop.f32.mrb[0].mxu0
      %v310 = vpop.f32.mrb[0].mxu0
      %311 = vdwg.mxu0
      %312 = vrot.lane.b32.xlu0 %v196, 64
      %v313 = vpop.permute.xlu0 %312
      %v315 = vsel %vm264, %v261, 0
      %v318 = vsel %vm268, %v313, 0
      %320 = vmatprep.subr.bf16.mxu0 0
      %321 = vmatpush1.bf16.msra.mxu0 %v318
      %322 = vmatprep.subr.bf16.mxu0 0
      %323 = vmatpush1.bf16.msra.mxu0 0
      %324 = vmatprep.subr.bf16.mxu0 0
      %325 = vmatpush1.bf16.msra.mxu0 0
      %326 = vmatprep.subr.bf16.mxu0 0
      %327 = vmatpush1.bf16.msra.mxu0 0
      %328 = vmatprep.subr.bf16.mxu0 0
      %329 = vmatpush1.bf16.msra.mxu0 0
      %330 = vmatprep.subr.bf16.mxu0 0
      %331 = vmatpush1.bf16.msra.mxu0 0
      %332 = vmatprep.subr.bf16.mxu0 0
      %333 = vmatpush1.bf16.msra.mxu0 0
      %334 = vmatprep.subr.bf16.mxu0 0
      %335 = vmatpush1.bf16.msra.mxu0 0
      %336 = vmatprep.subr.bf16.mxu0 0
      %337 = vmatpush1.bf16.msra.mxu0 0
      %338 = vmatprep.subr.bf16.mxu0 0
      %339 = vmatpush1.bf16.msra.mxu0 0
      %340 = vmatprep.subr.bf16.mxu0 0
      %341 = vmatpush1.bf16.msra.mxu0 0
      %342 = vmatprep.subr.bf16.mxu0 0
      %343 = vmatpush1.bf16.msra.mxu0 0
      %344 = vmatprep.subr.bf16.mxu0 0
      %345 = vmatpush1.bf16.msra.mxu0 0
      %346 = vmatprep.subr.bf16.mxu0 0
      %347 = vmatpush1.bf16.msra.mxu0 0
      %348 = vmatprep.subr.bf16.mxu0 0
      %349 = vmatpush1.bf16.msra.mxu0 0
      %350 = vmatprep.subr.bf16.mxu0 0
      %351 = vmatpush1.bf16.msra.mxu0 0
      %352 = vmatprep.mubr.bf16.mxu0 0
      %353 = vmatmul.mubr.bf16.gmra.mrb[0].mxu0 %v315
      %v354 = vpop.f32.mrb[0].mxu0
      %v355 = vadd.f32 0.0, %v354
      %v356 = vpop.f32.mrb[0].mxu0
      %v357 = vpop.f32.mrb[0].mxu0
      %v358 = vpop.f32.mrb[0].mxu0
      %359 = vdwg.mxu0
      %v360 = vsel %vm247, %v257, 0.0
      %361 = vadd.xlane.f32.xlu0 %v360
      %v362 = vpop.xlane.xlu0 %361
      %v363 = vsel %vm247, %v259, 0.0
      %364 = vadd.xlane.f32.xlu0 %v363
      %v365 = vpop.xlane.xlu0 %364
      %v366 = vrcp.pop %v362
      %v367 = vrcp.pop %v365
      %v368 = vmul.f32 %v307, %v366
      %v369 = vmul.f32 %v355, %v367
      %370 = vrot.lane.b32.xlu0 %v132, 120
      %v371 = vpop.permute.xlu0 %370
      %372 = vrot.lane.b32.xlu0 %v132, 88
      %v373 = vpop.permute.xlu0 %372
      %v375 = vsel %vm135, %v371, 0
      %v378 = vsel %vm135, %v373, 0
      %380 = vmatprep.subr.bf16.mxu0 0
      %381 = vmatpush1.bf16.xpose.msra.mxu0 %v378
      %382 = vmatprep.subr.bf16.mxu0 0
      %383 = vmatpush1.bf16.xpose.msra.mxu0 0
      %384 = vmatprep.subr.bf16.mxu0 0
      %385 = vmatpush1.bf16.xpose.msra.mxu0 0
      %386 = vmatprep.subr.bf16.mxu0 0
      %387 = vmatpush1.bf16.xpose.msra.mxu0 0
      %388 = vmatprep.subr.bf16.mxu0 0
      %389 = vmatpush1.bf16.xpose.msra.mxu0 0
      %390 = vmatprep.subr.bf16.mxu0 0
      %391 = vmatpush1.bf16.xpose.msra.mxu0 0
      %392 = vmatprep.subr.bf16.mxu0 0
      %393 = vmatpush1.bf16.xpose.msra.mxu0 0
      %394 = vmatprep.subr.bf16.mxu0 0
      %395 = vmatpush1.bf16.xpose.msra.mxu0 0
      %396 = vmatprep.subr.bf16.mxu0 0
      %397 = vmatpush1.bf16.xpose.msra.mxu0 0
      %398 = vmatprep.subr.bf16.mxu0 0
      %399 = vmatpush1.bf16.xpose.msra.mxu0 0
      %400 = vmatprep.subr.bf16.mxu0 0
      %401 = vmatpush1.bf16.xpose.msra.mxu0 0
      %402 = vmatprep.subr.bf16.mxu0 0
      %403 = vmatpush1.bf16.xpose.msra.mxu0 0
      %404 = vmatprep.subr.bf16.mxu0 0
      %405 = vmatpush1.bf16.xpose.msra.mxu0 0
      %406 = vmatprep.subr.bf16.mxu0 0
      %407 = vmatpush1.bf16.xpose.msra.mxu0 0
      %408 = vmatprep.subr.bf16.mxu0 0
      %409 = vmatpush1.bf16.xpose.msra.mxu0 0
      %410 = vmatprep.subr.bf16.mxu0 0
      %411 = vmatpush1.bf16.xpose.msra.mxu0 0
      %412 = vmatprep.mubr.bf16.mxu0 0
      %413 = vmatmul.mubr.bf16.gmra.mrb[0].mxu0 %v375
      %v414 = vpop.f32.mrb[0].mxu0
      %v415 = vadd.f32 0.0, %v414
      %v416 = vpop.f32.mrb[0].mxu0
      %v417 = vpop.f32.mrb[0].mxu0
      %v418 = vpop.f32.mrb[0].mxu0
      %419 = vdwg.mxu0
      %420 = vrot.lane.b32.xlu0 %v196, 120
      %v421 = vpop.permute.xlu0 %420
      %422 = vrot.lane.b32.xlu0 %v196, 88
      %v423 = vpop.permute.xlu0 %422
      %v425 = vsel %vm135, %v421, 0
      %v428 = vsel %vm135, %v423, 0
      %430 = vmatprep.subr.bf16.mxu0 0
      %431 = vmatpush1.bf16.xpose.msra.mxu0 %v428
      %432 = vmatprep.subr.bf16.mxu0 0
      %433 = vmatpush1.bf16.xpose.msra.mxu0 0
      %434 = vmatprep.subr.bf16.mxu0 0
      %435 = vmatpush1.bf16.xpose.msra.mxu0 0
      %436 = vmatprep.subr.bf16.mxu0 0
      %437 = vmatpush1.bf16.xpose.msra.mxu0 0
      %438 = vmatprep.subr.bf16.mxu0 0
      %439 = vmatpush1.bf16.xpose.msra.mxu0 0
      %440 = vmatprep.subr.bf16.mxu0 0
      %441 = vmatpush1.bf16.xpose.msra.mxu0 0
      %442 = vmatprep.subr.bf16.mxu0 0
      %443 = vmatpush1.bf16.xpose.msra.mxu0 0
      %444 = vmatprep.subr.bf16.mxu0 0
      %445 = vmatpush1.bf16.xpose.msra.mxu0 0
      %446 = vmatprep.subr.bf16.mxu0 0
      %447 = vmatpush1.bf16.xpose.msra.mxu0 0
      %448 = vmatprep.subr.bf16.mxu0 0
      %449 = vmatpush1.bf16.xpose.msra.mxu0 0
      %450 = vmatprep.subr.bf16.mxu0 0
      %451 = vmatpush1.bf16.xpose.msra.mxu0 0
      %452 = vmatprep.subr.bf16.mxu0 0
      %453 = vmatpush1.bf16.xpose.msra.mxu0 0
      %454 = vmatprep.subr.bf16.mxu0 0
      %455 = vmatpush1.bf16.xpose.msra.mxu0 0
      %456 = vmatprep.subr.bf16.mxu0 0
      %457 = vmatpush1.bf16.xpose.msra.mxu0 0
      %458 = vmatprep.subr.bf16.mxu0 0
      %459 = vmatpush1.bf16.xpose.msra.mxu0 0
      %460 = vmatprep.subr.bf16.mxu0 0
      %461 = vmatpush1.bf16.xpose.msra.mxu0 0
      %462 = vmatprep.mubr.bf16.mxu0 0
      %463 = vmatmul.mubr.bf16.gmra.mrb[0].mxu0 %v425
      %v464 = vpop.f32.mrb[0].mxu0
      %v465 = vadd.f32 0.0, %v464
      %v466 = vpop.f32.mrb[0].mxu0
      %v467 = vpop.f32.mrb[0].mxu0
      %v468 = vpop.f32.mrb[0].mxu0
      %469 = vdwg.mxu0
      %v470 = vmul.f32 %v415, 0.35355338
      %v471 = vmul.f32 %v465, 0.35355338
      %v472 = vsel %vm247, %v470, -inf
      %473 = vmax.xlane.f32.xlu0 %v472
      %v474 = vpop.xlane.xlu0 %473
      %v475 = vsel %vm247, %v471, -inf
      %476 = vmax.xlane.f32.xlu0 %v475
      %v477 = vpop.xlane.xlu0 %476
      %v478 = vsub.f32 %v470, %v474
      %v479 = vsub.f32 %v471, %v477
      %v480 = vmul.f32 %v478, 1.442695
      %v481 = vpow.pop %v480
      %v482 = vmul.f32 %v479, 1.442695
      %v483 = vpow.pop %v482
      %v484 = vpack.c.bf16 %v481, %v481
      %v485 = vpack.c.bf16 %v483, %v483
      %486 = vrot.lane.b32.xlu0 %v132, 56
      %v487 = vpop.permute.xlu0 %486
      %v489 = vsel %vm264, %v484, 0
      %v492 = vsel %vm268, %v487, 0
      %494 = vmatprep.subr.bf16.mxu0 0
      %495 = vmatpush1.bf16.msra.mxu0 %v492
      %496 = vmatprep.subr.bf16.mxu0 0
      %497 = vmatpush1.bf16.msra.mxu0 0
      %498 = vmatprep.subr.bf16.mxu0 0
      %499 = vmatpush1.bf16.msra.mxu0 0
      %500 = vmatprep.subr.bf16.mxu0 0
      %501 = vmatpush1.bf16.msra.mxu0 0
      %502 = vmatprep.subr.bf16.mxu0 0
      %503 = vmatpush1.bf16.msra.mxu0 0
      %504 = vmatprep.subr.bf16.mxu0 0
      %505 = vmatpush1.bf16.msra.mxu0 0
      %506 = vmatprep.subr.bf16.mxu0 0
      %507 = vmatpush1.bf16.msra.mxu0 0
      %508 = vmatprep.subr.bf16.mxu0 0
      %509 = vmatpush1.bf16.msra.mxu0 0
      %510 = vmatprep.subr.bf16.mxu0 0
      %511 = vmatpush1.bf16.msra.mxu0 0
      %512 = vmatprep.subr.bf16.mxu0 0
      %513 = vmatpush1.bf16.msra.mxu0 0
      %514 = vmatprep.subr.bf16.mxu0 0
      %515 = vmatpush1.bf16.msra.mxu0 0
      %516 = vmatprep.subr.bf16.mxu0 0
      %517 = vmatpush1.bf16.msra.mxu0 0
      %518 = vmatprep.subr.bf16.mxu0 0
      %519 = vmatpush1.bf16.msra.mxu0 0
      %520 = vmatprep.subr.bf16.mxu0 0
      %521 = vmatpush1.bf16.msra.mxu0 0
      %522 = vmatprep.subr.bf16.mxu0 0
      %523 = vmatpush1.bf16.msra.mxu0 0
      %524 = vmatprep.subr.bf16.mxu0 0
      %525 = vmatpush1.bf16.msra.mxu0 0
      %526 = vmatprep.mubr.bf16.mxu0 0
      %527 = vmatmul.mubr.bf16.gmra.mrb[0].mxu0 %v489
      %v528 = vpop.f32.mrb[0].mxu0
      %v529 = vadd.f32 0.0, %v528
      %v530 = vpop.f32.mrb[0].mxu0
      %v531 = vpop.f32.mrb[0].mxu0
      %v532 = vpop.f32.mrb[0].mxu0
      %533 = vdwg.mxu0
      %534 = vrot.lane.b32.xlu0 %v196, 56
      %v535 = vpop.permute.xlu0 %534
      %v537 = vsel %vm264, %v485, 0
      %v540 = vsel %vm268, %v535, 0
      %542 = vmatprep.subr.bf16.mxu0 0
      %543 = vmatpush1.bf16.msra.mxu0 %v540
      %544 = vmatprep.subr.bf16.mxu0 0
      %545 = vmatpush1.bf16.msra.mxu0 0
      %546 = vmatprep.subr.bf16.mxu0 0
      %547 = vmatpush1.bf16.msra.mxu0 0
      %548 = vmatprep.subr.bf16.mxu0 0
      %549 = vmatpush1.bf16.msra.mxu0 0
      %550 = vmatprep.subr.bf16.mxu0 0
      %551 = vmatpush1.bf16.msra.mxu0 0
      %552 = vmatprep.subr.bf16.mxu0 0
      %553 = vmatpush1.bf16.msra.mxu0 0
      %554 = vmatprep.subr.bf16.mxu0 0
      %555 = vmatpush1.bf16.msra.mxu0 0
      %556 = vmatprep.subr.bf16.mxu0 0
      %557 = vmatpush1.bf16.msra.mxu0 0
      %558 = vmatprep.subr.bf16.mxu0 0
      %559 = vmatpush1.bf16.msra.mxu0 0
      %560 = vmatprep.subr.bf16.mxu0 0
      %561 = vmatpush1.bf16.msra.mxu0 0
      %562 = vmatprep.subr.bf16.mxu0 0
      %563 = vmatpush1.bf16.msra.mxu0 0
      %564 = vmatprep.subr.bf16.mxu0 0
      %565 = vmatpush1.bf16.msra.mxu0 0
      %566 = vmatprep.subr.bf16.mxu0 0
      %567 = vmatpush1.bf16.msra.mxu0 0
      %568 = vmatprep.subr.bf16.mxu0 0
      %569 = vmatpush1.bf16.msra.mxu0 0
      %570 = vmatprep.subr.bf16.mxu0 0
      %571 = vmatpush1.bf16.msra.mxu0 0
      %572 = vmatprep.subr.bf16.mxu0 0
      %573 = vmatpush1.bf16.msra.mxu0 0
      %574 = vmatprep.mubr.bf16.mxu0 0
      %575 = vmatmul.mubr.bf16.gmra.mrb[0].mxu0 %v537
      %v576 = vpop.f32.mrb[0].mxu0
      %v577 = vadd.f32 0.0, %v576
      %v578 = vpop.f32.mrb[0].mxu0
      %v579 = vpop.f32.mrb[0].mxu0
      %v580 = vpop.f32.mrb[0].mxu0
      %581 = vdwg.mxu0
      %v582 = vsel %vm247, %v481, 0.0
      %583 = vadd.xlane.f32.xlu0 %v582
      %v584 = vpop.xlane.xlu0 %583
      %v585 = vsel %vm247, %v483, 0.0
      %586 = vadd.xlane.f32.xlu0 %v585
      %v587 = vpop.xlane.xlu0 %586
      %v588 = vrcp.pop %v584
      %v589 = vrcp.pop %v587
      %v590 = vmul.f32 %v529, %v588
      %v591 = vmul.f32 %v577, %v589
      %592 = vrot.lane.b32.xlu0 %v132, 112
      %v593 = vpop.permute.xlu0 %592
      %594 = vrot.lane.b32.xlu0 %v132, 80
      %v595 = vpop.permute.xlu0 %594
      %v597 = vsel %vm135, %v593, 0
      %v600 = vsel %vm135, %v595, 0
      %602 = vmatprep.subr.bf16.mxu0 0
      %603 = vmatpush1.bf16.xpose.msra.mxu0 %v600
      %604 = vmatprep.subr.bf16.mxu0 0
      %605 = vmatpush1.bf16.xpose.msra.mxu0 0
      %606 = vmatprep.subr.bf16.mxu0 0
      %607 = vmatpush1.bf16.xpose.msra.mxu0 0
      %608 = vmatprep.subr.bf16.mxu0 0
      %609 = vmatpush1.bf16.xpose.msra.mxu0 0
      %610 = vmatprep.subr.bf16.mxu0 0
      %611 = vmatpush1.bf16.xpose.msra.mxu0 0
      %612 = vmatprep.subr.bf16.mxu0 0
      %613 = vmatpush1.bf16.xpose.msra.mxu0 0
      %614 = vmatprep.subr.bf16.mxu0 0
      %615 = vmatpush1.bf16.xpose.msra.mxu0 0
      %616 = vmatprep.subr.bf16.mxu0 0
      %617 = vmatpush1.bf16.xpose.msra.mxu0 0
      %618 = vmatprep.subr.bf16.mxu0 0
      %619 = vmatpush1.bf16.xpose.msra.mxu0 0
      %620 = vmatprep.subr.bf16.mxu0 0
      %621 = vmatpush1.bf16.xpose.msra.mxu0 0
      %622 = vmatprep.subr.bf16.mxu0 0
      %623 = vmatpush1.bf16.xpose.msra.mxu0 0
      %624 = vmatprep.subr.bf16.mxu0 0
      %625 = vmatpush1.bf16.xpose.msra.mxu0 0
      %626 = vmatprep.subr.bf16.mxu0 0
      %627 = vmatpush1.bf16.xpose.msra.mxu0 0
      %628 = vmatprep.subr.bf16.mxu0 0
      %629 = vmatpush1.bf16.xpose.msra.mxu0 0
      %630 = vmatprep.subr.bf16.mxu0 0
      %631 = vmatpush1.bf16.xpose.msra.mxu0 0
      %632 = vmatprep.subr.bf16.mxu0 0
      %633 = vmatpush1.bf16.xpose.msra.mxu0 0
      %634 = vmatprep.mubr.bf16.mxu0 0
      %635 = vmatmul.mubr.bf16.gmra.mrb[0].mxu0 %v597
      %v636 = vpop.f32.mrb[0].mxu0
      %v637 = vadd.f32 0.0, %v636
      %v638 = vpop.f32.mrb[0].mxu0
      %v639 = vpop.f32.mrb[0].mxu0
      %v640 = vpop.f32.mrb[0].mxu0
      %641 = vdwg.mxu0
      %642 = vrot.lane.b32.xlu0 %v196, 112
      %v643 = vpop.permute.xlu0 %642
      %644 = vrot.lane.b32.xlu0 %v196, 80
      %v645 = vpop.permute.xlu0 %644
      %v647 = vsel %vm135, %v643, 0
      %v650 = vsel %vm135, %v645, 0
      %652 = vmatprep.subr.bf16.mxu0 0
      %653 = vmatpush1.bf16.xpose.msra.mxu0 %v650
      %654 = vmatprep.subr.bf16.mxu0 0
      %655 = vmatpush1.bf16.xpose.msra.mxu0 0
      %656 = vmatprep.subr.bf16.mxu0 0
      %657 = vmatpush1.bf16.xpose.msra.mxu0 0
      %658 = vmatprep.subr.bf16.mxu0 0
      %659 = vmatpush1.bf16.xpose.msra.mxu0 0
      %660 = vmatprep.subr.bf16.mxu0 0
      %661 = vmatpush1.bf16.xpose.msra.mxu0 0
      %662 = vmatprep.subr.bf16.mxu0 0
      %663 = vmatpush1.bf16.xpose.msra.mxu0 0
      %664 = vmatprep.subr.bf16.mxu0 0
      %665 = vmatpush1.bf16.xpose.msra.mxu0 0
      %666 = vmatprep.subr.bf16.mxu0 0
      %667 = vmatpush1.bf16.xpose.msra.mxu0 0
      %668 = vmatprep.subr.bf16.mxu0 0
      %669 = vmatpush1.bf16.xpose.msra.mxu0 0
      %670 = vmatprep.subr.bf16.mxu0 0
      %671 = vmatpush1.bf16.xpose.msra.mxu0 0
      %672 = vmatprep.subr.bf16.mxu0 0
      %673 = vmatpush1.bf16.xpose.msra.mxu0 0
      %674 = vmatprep.subr.bf16.mxu0 0
      %675 = vmatpush1.bf16.xpose.msra.mxu0 0
      %676 = vmatprep.subr.bf16.mxu0 0
      %677 = vmatpush1.bf16.xpose.msra.mxu0 0
      %678 = vmatprep.subr.bf16.mxu0 0
      %679 = vmatpush1.bf16.xpose.msra.mxu0 0
      %680 = vmatprep.subr.bf16.mxu0 0
      %681 = vmatpush1.bf16.xpose.msra.mxu0 0
      %682 = vmatprep.subr.bf16.mxu0 0
      %683 = vmatpush1.bf16.xpose.msra.mxu0 0
      %684 = vmatprep.mubr.bf16.mxu0 0
      %685 = vmatmul.mubr.bf16.gmra.mrb[0].mxu0 %v647
      %v686 = vpop.f32.mrb[0].mxu0
      %v687 = vadd.f32 0.0, %v686
      %v688 = vpop.f32.mrb[0].mxu0
      %v689 = vpop.f32.mrb[0].mxu0
      %v690 = vpop.f32.mrb[0].mxu0
      %691 = vdwg.mxu0
      %v692 = vmul.f32 %v637, 0.35355338
      %v693 = vmul.f32 %v687, 0.35355338
      %v694 = vsel %vm247, %v692, -inf
      %695 = vmax.xlane.f32.xlu0 %v694
      %v696 = vpop.xlane.xlu0 %695
      %v697 = vsel %vm247, %v693, -inf
      %698 = vmax.xlane.f32.xlu0 %v697
      %v699 = vpop.xlane.xlu0 %698
      %v700 = vsub.f32 %v692, %v696
      %v701 = vsub.f32 %v693, %v699
      %v702 = vmul.f32 %v700, 1.442695
      %v703 = vpow.pop %v702
      %v704 = vmul.f32 %v701, 1.442695
      %v705 = vpow.pop %v704
      %v706 = vpack.c.bf16 %v703, %v703
      %v707 = vpack.c.bf16 %v705, %v705
      %708 = vrot.lane.b32.xlu0 %v132, 48
      %v709 = vpop.permute.xlu0 %708
      %v711 = vsel %vm264, %v706, 0
      %v714 = vsel %vm268, %v709, 0
      %716 = vmatprep.subr.bf16.mxu0 0
      %717 = vmatpush1.bf16.msra.mxu0 %v714
      %718 = vmatprep.subr.bf16.mxu0 0
      %719 = vmatpush1.bf16.msra.mxu0 0
      %720 = vmatprep.subr.bf16.mxu0 0
      %721 = vmatpush1.bf16.msra.mxu0 0
      %722 = vmatprep.subr.bf16.mxu0 0
      %723 = vmatpush1.bf16.msra.mxu0 0
      %724 = vmatprep.subr.bf16.mxu0 0
      %725 = vmatpush1.bf16.msra.mxu0 0
      %726 = vmatprep.subr.bf16.mxu0 0
      %727 = vmatpush1.bf16.msra.mxu0 0
      %728 = vmatprep.subr.bf16.mxu0 0
      %729 = vmatpush1.bf16.msra.mxu0 0
      %730 = vmatprep.subr.bf16.mxu0 0
      %731 = vmatpush1.bf16.msra.mxu0 0
      %732 = vmatprep.subr.bf16.mxu0 0
      %733 = vmatpush1.bf16.msra.mxu0 0
      %734 = vmatprep.subr.bf16.mxu0 0
      %735 = vmatpush1.bf16.msra.mxu0 0
      %736 = vmatprep.subr.bf16.mxu0 0
      %737 = vmatpush1.bf16.msra.mxu0 0
      %738 = vmatprep.subr.bf16.mxu0 0
      %739 = vmatpush1.bf16.msra.mxu0 0
      %740 = vmatprep.subr.bf16.mxu0 0
      %741 = vmatpush1.bf16.msra.mxu0 0
      %742 = vmatprep.subr.bf16.mxu0 0
      %743 = vmatpush1.bf16.msra.mxu0 0
      %744 = vmatprep.subr.bf16.mxu0 0
      %745 = vmatpush1.bf16.msra.mxu0 0
      %746 = vmatprep.subr.bf16.mxu0 0
      %747 = vmatpush1.bf16.msra.mxu0 0
      %748 = vmatprep.mubr.bf16.mxu0 0
      %749 = vmatmul.mubr.bf16.gmra.mrb[0].mxu0 %v711
      %v750 = vpop.f32.mrb[0].mxu0
      %v751 = vadd.f32 0.0, %v750
      %v752 = vpop.f32.mrb[0].mxu0
      %v753 = vpop.f32.mrb[0].mxu0
      %v754 = vpop.f32.mrb[0].mxu0
      %755 = vdwg.mxu0
      %756 = vrot.lane.b32.xlu0 %v196, 48
      %v757 = vpop.permute.xlu0 %756
      %v759 = vsel %vm264, %v707, 0
      %v762 = vsel %vm268, %v757, 0
      %764 = vmatprep.subr.bf16.mxu0 0
      %765 = vmatpush1.bf16.msra.mxu0 %v762
      %766 = vmatprep.subr.bf16.mxu0 0
      %767 = vmatpush1.bf16.msra.mxu0 0
      %768 = vmatprep.subr.bf16.mxu0 0
      %769 = vmatpush1.bf16.msra.mxu0 0
      %770 = vmatprep.subr.bf16.mxu0 0
      %771 = vmatpush1.bf16.msra.mxu0 0
      %772 = vmatprep.subr.bf16.mxu0 0
      %773 = vmatpush1.bf16.msra.mxu0 0
      %774 = vmatprep.subr.bf16.mxu0 0
      %775 = vmatpush1.bf16.msra.mxu0 0
      %776 = vmatprep.subr.bf16.mxu0 0
      %777 = vmatpush1.bf16.msra.mxu0 0
      %778 = vmatprep.subr.bf16.mxu0 0
      %779 = vmatpush1.bf16.msra.mxu0 0
      %780 = vmatprep.subr.bf16.mxu0 0
      %781 = vmatpush1.bf16.msra.mxu0 0
      %782 = vmatprep.subr.bf16.mxu0 0
      %783 = vmatpush1.bf16.msra.mxu0 0
      %784 = vmatprep.subr.bf16.mxu0 0
      %785 = vmatpush1.bf16.msra.mxu0 0
      %786 = vmatprep.subr.bf16.mxu0 0
      %787 = vmatpush1.bf16.msra.mxu0 0
      %788 = vmatprep.subr.bf16.mxu0 0
      %789 = vmatpush1.bf16.msra.mxu0 0
      %790 = vmatprep.subr.bf16.mxu0 0
      %791 = vmatpush1.bf16.msra.mxu0 0
      %792 = vmatprep.subr.bf16.mxu0 0
      %793 = vmatpush1.bf16.msra.mxu0 0
      %794 = vmatprep.subr.bf16.mxu0 0
      %795 = vmatpush1.bf16.msra.mxu0 0
      %796 = vmatprep.mubr.bf16.mxu0 0
      %797 = vmatmul.mubr.bf16.gmra.mrb[0].mxu0 %v759
      %v798 = vpop.f32.mrb[0].mxu0
      %v799 = vadd.f32 0.0, %v798
      %v800 = vpop.f32.mrb[0].mxu0
      %v801 = vpop.f32.mrb[0].mxu0
      %v802 = vpop.f32.mrb[0].mxu0
      %803 = vdwg.mxu0
      %v804 = vsel %vm247, %v703, 0.0
      %805 = vadd.xlane.f32.xlu0 %v804
      %v806 = vpop.xlane.xlu0 %805
      %v807 = vsel %vm247, %v705, 0.0
      %808 = vadd.xlane.f32.xlu0 %v807
      %v809 = vpop.xlane.xlu0 %808
      %v810 = vrcp.pop %v806
      %v811 = vrcp.pop %v809
      %v812 = vmul.f32 %v751, %v810
      %v813 = vmul.f32 %v799, %v811
      %814 = vrot.lane.b32.xlu0 %v132, 104
      %v815 = vpop.permute.xlu0 %814
      %816 = vrot.lane.b32.xlu0 %v132, 72
      %v817 = vpop.permute.xlu0 %816
      %v819 = vsel %vm135, %v815, 0
      %v822 = vsel %vm135, %v817, 0
      %824 = vmatprep.subr.bf16.mxu0 0
      %825 = vmatpush1.bf16.xpose.msra.mxu0 %v822
      %826 = vmatprep.subr.bf16.mxu0 0
      %827 = vmatpush1.bf16.xpose.msra.mxu0 0
      %828 = vmatprep.subr.bf16.mxu0 0
      %829 = vmatpush1.bf16.xpose.msra.mxu0 0
      %830 = vmatprep.subr.bf16.mxu0 0
      %831 = vmatpush1.bf16.xpose.msra.mxu0 0
      %832 = vmatprep.subr.bf16.mxu0 0
      %833 = vmatpush1.bf16.xpose.msra.mxu0 0
      %834 = vmatprep.subr.bf16.mxu0 0
      %835 = vmatpush1.bf16.xpose.msra.mxu0 0
      %836 = vmatprep.subr.bf16.mxu0 0
      %837 = vmatpush1.bf16.xpose.msra.mxu0 0
      %838 = vmatprep.subr.bf16.mxu0 0
      %839 = vmatpush1.bf16.xpose.msra.mxu0 0
      %840 = vmatprep.subr.bf16.mxu0 0
      %841 = vmatpush1.bf16.xpose.msra.mxu0 0
      %842 = vmatprep.subr.bf16.mxu0 0
      %843 = vmatpush1.bf16.xpose.msra.mxu0 0
      %844 = vmatprep.subr.bf16.mxu0 0
      %845 = vmatpush1.bf16.xpose.msra.mxu0 0
      %846 = vmatprep.subr.bf16.mxu0 0
      %847 = vmatpush1.bf16.xpose.msra.mxu0 0
      %848 = vmatprep.subr.bf16.mxu0 0
      %849 = vmatpush1.bf16.xpose.msra.mxu0 0
      %850 = vmatprep.subr.bf16.mxu0 0
      %851 = vmatpush1.bf16.xpose.msra.mxu0 0
      %852 = vmatprep.subr.bf16.mxu0 0
      %853 = vmatpush1.bf16.xpose.msra.mxu0 0
      %854 = vmatprep.subr.bf16.mxu0 0
      %855 = vmatpush1.bf16.xpose.msra.mxu0 0
      %856 = vmatprep.mubr.bf16.mxu0 0
      %857 = vmatmul.mubr.bf16.gmra.mrb[0].mxu0 %v819
      %v858 = vpop.f32.mrb[0].mxu0
      %v859 = vadd.f32 0.0, %v858
      %v860 = vpop.f32.mrb[0].mxu0
      %v861 = vpop.f32.mrb[0].mxu0
      %v862 = vpop.f32.mrb[0].mxu0
      %863 = vdwg.mxu0
      %864 = vrot.lane.b32.xlu0 %v196, 104
      %v865 = vpop.permute.xlu0 %864
      %866 = vrot.lane.b32.xlu0 %v196, 72
      %v867 = vpop.permute.xlu0 %866
      %v869 = vsel %vm135, %v865, 0
      %v872 = vsel %vm135, %v867, 0
      %874 = vmatprep.subr.bf16.mxu0 0
      %875 = vmatpush1.bf16.xpose.msra.mxu0 %v872
      %876 = vmatprep.subr.bf16.mxu0 0
      %877 = vmatpush1.bf16.xpose.msra.mxu0 0
      %878 = vmatprep.subr.bf16.mxu0 0
      %879 = vmatpush1.bf16.xpose.msra.mxu0 0
      %880 = vmatprep.subr.bf16.mxu0 0
      %881 = vmatpush1.bf16.xpose.msra.mxu0 0
      %882 = vmatprep.subr.bf16.mxu0 0
      %883 = vmatpush1.bf16.xpose.msra.mxu0 0
      %884 = vmatprep.subr.bf16.mxu0 0
      %885 = vmatpush1.bf16.xpose.msra.mxu0 0
      %886 = vmatprep.subr.bf16.mxu0 0
      %887 = vmatpush1.bf16.xpose.msra.mxu0 0
      %888 = vmatprep.subr.bf16.mxu0 0
      %889 = vmatpush1.bf16.xpose.msra.mxu0 0
      %890 = vmatprep.subr.bf16.mxu0 0
      %891 = vmatpush1.bf16.xpose.msra.mxu0 0
      %892 = vmatprep.subr.bf16.mxu0 0
      %893 = vmatpush1.bf16.xpose.msra.mxu0 0
      %894 = vmatprep.subr.bf16.mxu0 0
      %895 = vmatpush1.bf16.xpose.msra.mxu0 0
      %896 = vmatprep.subr.bf16.mxu0 0
      %897 = vmatpush1.bf16.xpose.msra.mxu0 0
      %898 = vmatprep.subr.bf16.mxu0 0
      %899 = vmatpush1.bf16.xpose.msra.mxu0 0
      %900 = vmatprep.subr.bf16.mxu0 0
      %901 = vmatpush1.bf16.xpose.msra.mxu0 0
      %902 = vmatprep.subr.bf16.mxu0 0
      %903 = vmatpush1.bf16.xpose.msra.mxu0 0
      %904 = vmatprep.subr.bf16.mxu0 0
      %905 = vmatpush1.bf16.xpose.msra.mxu0 0
      %906 = vmatprep.mubr.bf16.mxu0 0
      %907 = vmatmul.mubr.bf16.gmra.mrb[0].mxu0 %v869
      %v908 = vpop.f32.mrb[0].mxu0
      %v909 = vadd.f32 0.0, %v908
      %v910 = vpop.f32.mrb[0].mxu0
      %v911 = vpop.f32.mrb[0].mxu0
      %v912 = vpop.f32.mrb[0].mxu0
      %913 = vdwg.mxu0
      %v914 = vmul.f32 %v859, 0.35355338
      %v915 = vmul.f32 %v909, 0.35355338
      %v916 = vsel %vm247, %v914, -inf
      %917 = vmax.xlane.f32.xlu0 %v916
      %v918 = vpop.xlane.xlu0 %917
      %v919 = vsel %vm247, %v915, -inf
      %920 = vmax.xlane.f32.xlu0 %v919
      %v921 = vpop.xlane.xlu0 %920
      %v922 = vsub.f32 %v914, %v918
      %v923 = vsub.f32 %v915, %v921
      %v924 = vmul.f32 %v922, 1.442695
      %v925 = vpow.pop %v924
      %v926 = vmul.f32 %v923, 1.442695
      %v927 = vpow.pop %v926
      %v928 = vpack.c.bf16 %v925, %v925
      %v929 = vpack.c.bf16 %v927, %v927
      %930 = vrot.lane.b32.xlu0 %v132, 40
      %v931 = vpop.permute.xlu0 %930
      %v933 = vsel %vm264, %v928, 0
      %v936 = vsel %vm268, %v931, 0
      %938 = vmatprep.subr.bf16.mxu0 0
      %939 = vmatpush1.bf16.msra.mxu0 %v936
      %940 = vmatprep.subr.bf16.mxu0 0
      %941 = vmatpush1.bf16.msra.mxu0 0
      %942 = vmatprep.subr.bf16.mxu0 0
      %943 = vmatpush1.bf16.msra.mxu0 0
      %944 = vmatprep.subr.bf16.mxu0 0
      %945 = vmatpush1.bf16.msra.mxu0 0
      %946 = vmatprep.subr.bf16.mxu0 0
      %947 = vmatpush1.bf16.msra.mxu0 0
      %948 = vmatprep.subr.bf16.mxu0 0
      %949 = vmatpush1.bf16.msra.mxu0 0
      %950 = vmatprep.subr.bf16.mxu0 0
      %951 = vmatpush1.bf16.msra.mxu0 0
      %952 = vmatprep.subr.bf16.mxu0 0
      %953 = vmatpush1.bf16.msra.mxu0 0
      %954 = vmatprep.subr.bf16.mxu0 0
      %955 = vmatpush1.bf16.msra.mxu0 0
      %956 = vmatprep.subr.bf16.mxu0 0
      %957 = vmatpush1.bf16.msra.mxu0 0
      %958 = vmatprep.subr.bf16.mxu0 0
      %959 = vmatpush1.bf16.msra.mxu0 0
      %960 = vmatprep.subr.bf16.mxu0 0
      %961 = vmatpush1.bf16.msra.mxu0 0
      %962 = vmatprep.subr.bf16.mxu0 0
      %963 = vmatpush1.bf16.msra.mxu0 0
      %964 = vmatprep.subr.bf16.mxu0 0
      %965 = vmatpush1.bf16.msra.mxu0 0
      %966 = vmatprep.subr.bf16.mxu0 0
      %967 = vmatpush1.bf16.msra.mxu0 0
      %968 = vmatprep.subr.bf16.mxu0 0
      %969 = vmatpush1.bf16.msra.mxu0 0
      %970 = vmatprep.mubr.bf16.mxu0 0
      %971 = vmatmul.mubr.bf16.gmra.mrb[0].mxu0 %v933
      %v972 = vpop.f32.mrb[0].mxu0
      %v973 = vadd.f32 0.0, %v972
      %v974 = vpop.f32.mrb[0].mxu0
      %v975 = vpop.f32.mrb[0].mxu0
      %v976 = vpop.f32.mrb[0].mxu0
      %977 = vdwg.mxu0
      %978 = vrot.lane.b32.xlu0 %v196, 40
      %v979 = vpop.permute.xlu0 %978
      %v981 = vsel %vm264, %v929, 0
      %v984 = vsel %vm268, %v979, 0
      %986 = vmatprep.subr.bf16.mxu0 0
      %987 = vmatpush1.bf16.msra.mxu0 %v984
      %988 = vmatprep.subr.bf16.mxu0 0
      %989 = vmatpush1.bf16.msra.mxu0 0
      %990 = vmatprep.subr.bf16.mxu0 0
      %991 = vmatpush1.bf16.msra.mxu0 0
      %992 = vmatprep.subr.bf16.mxu0 0
      %993 = vmatpush1.bf16.msra.mxu0 0
      %994 = vmatprep.subr.bf16.mxu0 0
      %995 = vmatpush1.bf16.msra.mxu0 0
      %996 = vmatprep.subr.bf16.mxu0 0
      %997 = vmatpush1.bf16.msra.mxu0 0
      %998 = vmatprep.subr.bf16.mxu0 0
      %999 = vmatpush1.bf16.msra.mxu0 0
      %1000 = vmatprep.subr.bf16.mxu0 0
      %1001 = vmatpush1.bf16.msra.mxu0 0
      %1002 = vmatprep.subr.bf16.mxu0 0
      %1003 = vmatpush1.bf16.msra.mxu0 0
      %1004 = vmatprep.subr.bf16.mxu0 0
      %1005 = vmatpush1.bf16.msra.mxu0 0
      %1006 = vmatprep.subr.bf16.mxu0 0
      %1007 = vmatpush1.bf16.msra.mxu0 0
      %1008 = vmatprep.subr.bf16.mxu0 0
      %1009 = vmatpush1.bf16.msra.mxu0 0
      %1010 = vmatprep.subr.bf16.mxu0 0
      %1011 = vmatpush1.bf16.msra.mxu0 0
      %1012 = vmatprep.subr.bf16.mxu0 0
      %1013 = vmatpush1.bf16.msra.mxu0 0
      %1014 = vmatprep.subr.bf16.mxu0 0
      %1015 = vmatpush1.bf16.msra.mxu0 0
      %1016 = vmatprep.subr.bf16.mxu0 0
      %1017 = vmatpush1.bf16.msra.mxu0 0
      %1018 = vmatprep.mubr.bf16.mxu0 0
      %1019 = vmatmul.mubr.bf16.gmra.mrb[0].mxu0 %v981
      %v1020 = vpop.f32.mrb[0].mxu0
      %v1021 = vadd.f32 0.0, %v1020
      %v1022 = vpop.f32.mrb[0].mxu0
      %v1023 = vpop.f32.mrb[0].mxu0
      %v1024 = vpop.f32.mrb[0].mxu0
      %1025 = vdwg.mxu0
      %v1026 = vsel %vm247, %v925, 0.0
      %1027 = vadd.xlane.f32.xlu0 %v1026
      %v1028 = vpop.xlane.xlu0 %1027
      %v1029 = vsel %vm247, %v927, 0.0
      %1030 = vadd.xlane.f32.xlu0 %v1029
      %v1031 = vpop.xlane.xlu0 %1030
      %v1032 = vrcp.pop %v1028
      %v1033 = vrcp.pop %v1031
      %v1034 = vmul.f32 %v973, %v1032
      %v1035 = vmul.f32 %v1021, %v1033
      %1038 = vrot.lane.b32.xlu0 %v590, 8
      %v1039 = vpop.permute.xlu0 %1038
      %1040 = vrot.lane.b32.xlu0 %v591, 8
      %v1041 = vpop.permute.xlu0 %1040
      %1046 = vrot.lane.b32.xlu0 %v812, 16
      %v1047 = vpop.permute.xlu0 %1046
      %1048 = vrot.lane.b32.xlu0 %v813, 16
      %v1049 = vpop.permute.xlu0 %1048
      %1054 = vrot.lane.b32.xlu0 %v1034, 24
      %v1055 = vpop.permute.xlu0 %1054
      %1056 = vrot.lane.b32.xlu0 %v1035, 24
      %v1057 = vpop.permute.xlu0 %1056
      %v1060 = vsel %vm135, %v368, %v1039
      %v1061 = vsel %vm135, %v369, %v1041
      %vm1062 = vcmask 130048
      %v1063 = vsel %vm1062, %v1060, %v1047
      %v1064 = vsel %vm1062, %v1061, %v1049
      %vm1065 = vcmask 195584
      %v1066 = vsel %vm1065, %v1063, %v1055
      %v1067 = vsel %vm1065, %v1064, %v1057
      %v1068 = vpack.c.bf16 %v1066, %v1066
      %v1069 = vpack.c.bf16 %v1067, %v1067
      %vm1070 = vcmask 253952
      %1071 = vst.msk [vmem:[%s113] sm:$0x1] %vm1070, %v1068
      %1072 = vst.msk [vmem:[%s113 + $0x1] sm:$0x1] %vm1070, %v1069
      %s1073 = smul.u32 2, %s12
      %p1074 = scmp.lt.s32.totalorder %s1073, 7
      %s1075 = scalar_select %p1074, %s1073, 7
      %s1076 = scalar_lea.vmem %s1, %s1075
      // Predicated region
      $region25: #{block_forward.11} parent=23 // pred_check
        %p1077 = pneg %p56
      $region26: #{block_forward.11} parent=23 // pred_check_branch
        %1079 = sbr.rel (%p1077) target = $region28
      $region27: #{block_forward.11} parent=23 // pred_region
        %s1080 = smul.u32 2, %s12
      $region28: #{block_forward.11} parent=23 // pred_fallthru
        _
    $region24: #{block_forward.11} parent=5 // pred_fallthru
      _
    %p1081 = scmp.le.s32.totalorder 2, %s7
    // Predicated region
    $region29: #{block_forward.11} parent=5 // pred_check
      %p1082 = pneg %p1081
    $region30: #{block_forward.11} parent=5 // pred_check_branch
      %1084 = sbr.rel (%p1082) target = $region32
    $region31: #{block_forward.11} parent=5 // pred_region
      %s1085 = ssub.s32 %s7, 2
      // Predicated region
      $region33: #{block_forward.11} parent=31 // pred_check
        %p1086 = pneg %p62
      $region34: #{block_forward.11} parent=31 // pred_check_branch
        %1088 = sbr.rel (%p1086) target = $region36
      $region35: #{block_forward.11} parent=31 // pred_region
        %s1089 = smul.u32 2, %s13
        %p1090 = scmp.lt.s32.totalorder %s1089, 7
        %s1091 = scalar_select %p1090, %s1089, 7
        %s1092 = scalar_lea.vmem %s1, %s1091
      $region36: #{block_forward.11} parent=31 // pred_fallthru
        _
    $region32: #{block_forward.11} parent=5 // pred_fallthru
      _
  $region6: #{block_forward.11} parent=0 // loop_footer
    %s11 = sadd.s32 1, %s7
  $region7: #{block_forward.11} parent=0 // loop_footer_branch
    %6 = sbr.rel target = $region3
  $region8: #{block_forward.11} parent=0 // loop_exit
    _

// kernel: block_forward.13
$region0: #{block_forward.13}
  #allocation0 [shape = 'u32[]', space=smem, size = 0x4, offset = 0x4, fixed_abs, tag = 'smem constant byte address 0x4 - core index']
  #allocation1 [shape = 'u32[144,128]{1,0:T(1,128)}', space=vmem, size = 0x12000, scoped, tag = 'internal scratch']
  %s0 = inlined_call_operand.vmem [shape: bf16[16,32], index: 0, kind: input, shape index: {}]
  %s1 = inlined_call_operand.vmem [shape: bf16[32,32], index: 1, kind: input, shape index: {}]
  %s2 = inlined_call_operand.vmem [shape: f32[1,32], index: 2, kind: input, shape index: {}]
  %s3 = inlined_call_operand.vmem [shape: f32[16,32], index: 3, kind: input, shape index: {}]
  %s4 = inlined_call_operand.vmem [shape: f32[16,32], index: 4, kind: output, shape index: {}]
  %s5 = sld [smem:[#allocation0]]
  $region26: #{block_forward.13} parent=0
    _
  %s7 = ssub.s32 1, %s5
  %s8 = scalar_select 0, %s7, %s5
  // Predicated region
  $region2: #{block_forward.13} parent=0 // pred_check
    _
  $region3: #{block_forward.13} parent=0 // pred_check_branch
    %10 = sbr.rel (0) target = $region5
  $region4: #{block_forward.13} parent=0 // pred_region
    _
  $region5: #{block_forward.13} parent=0 // pred_fallthru
    _
  // Predicated region
  $region6: #{block_forward.13} parent=0 // pred_check
    _
  $region7: #{block_forward.13} parent=0 // pred_check_branch
    %12 = sbr.rel (0) target = $region9
  $region8: #{block_forward.13} parent=0 // pred_region
    _
  $region9: #{block_forward.13} parent=0 // pred_fallthru
    _
  // Predicated region
  $region10: #{block_forward.13} parent=0 // pred_check
    _
  $region11: #{block_forward.13} parent=0 // pred_check_branch
    %14 = sbr.rel (0) target = $region13
  $region12: #{block_forward.13} parent=0 // pred_region
    _
  $region13: #{block_forward.13} parent=0 // pred_fallthru
    _
  // Predicated region
  $region14: #{block_forward.13} parent=0 // pred_check
    _
  $region15: #{block_forward.13} parent=0 // pred_check_branch
    %16 = sbr.rel (0) target = $region17
  $region16: #{block_forward.13} parent=0 // pred_region
    _
  $region17: #{block_forward.13} parent=0 // pred_fallthru
    _
  %v18 = vld [vmem:[%s0] sm:$0xf]
  %v19 = vld [vmem:[%s0 + $0x4] sm:$0xf]
  %v20 = vld [vmem:[%s1] sm:$0xf]
  %v21 = vld [vmem:[%s1 + $0x4] sm:$0xf]
  %v22 = vld [vmem:[%s1 + $0x8] sm:$0xf]
  %v23 = vld [vmem:[%s1 + $0xc] sm:$0xf]
  %v24 = vld [vmem:[%s2] sm:$0x1]
  %v26 = vlaneseq
  %v27 = vshrl.u32 %v26, 7
  %v28 = vsub.s32 0, %v27
  %v29 = vrot.slane %v24, %v28
  %v33 = vunpack.c.l.b16 %v18
  %v34 = vunpack.c.l.b16 %v19
  %v35 = vpack.c.b16 %v34, %v33
  %v40 = vunpack.c.l.b16 %v20
  %v41 = vunpack.c.l.b16 %v21
  %v42 = vunpack.c.l.b16 %v22
  %v43 = vunpack.c.l.b16 %v23
  %v44 = vpack.c.b16 %v41, %v40
  %v45 = vpack.c.b16 %v43, %v42
  %vm48 = vcmask 261120
  %v50 = vsel %vm48, %v35, 0
  %52 = vmatprep.subr.bf16.mxu0 0
  %53 = vmatpush1.bf16.msra.mxu0 %v44
  %54 = vmatprep.subr.bf16.mxu0 0
  %55 = vmatpush1.bf16.msra.mxu0 %v45
  %56 = vmatprep.subr.bf16.mxu0 0
  %57 = vmatpush1.bf16.msra.mxu0 0
  %58 = vmatprep.subr.bf16.mxu0 0
  %59 = vmatpush1.bf16.msra.mxu0 0
  %60 = vmatprep.subr.bf16.mxu0 0
  %61 = vmatpush1.bf16.msra.mxu0 0
  %62 = vmatprep.subr.bf16.mxu0 0
  %63 = vmatpush1.bf16.msra.mxu0 0
  %64 = vmatprep.subr.bf16.mxu0 0
  %65 = vmatpush1.bf16.msra.mxu0 0
  %66 = vmatprep.subr.bf16.mxu0 0
  %67 = vmatpush1.bf16.msra.mxu0 0
  %68 = vmatprep.subr.bf16.mxu0 0
  %69 = vmatpush1.bf16.msra.mxu0 0
  %70 = vmatprep.subr.bf16.mxu0 0
  %71 = vmatpush1.bf16.msra.mxu0 0
  %72 = vmatprep.subr.bf16.mxu0 0
  %73 = vmatpush1.bf16.msra.mxu0 0
  %74 = vmatprep.subr.bf16.mxu0 0
  %75 = vmatpush1.bf16.msra.mxu0 0
  %76 = vmatprep.subr.bf16.mxu0 0
  %77 = vmatpush1.bf16.msra.mxu0 0
  %78 = vmatprep.subr.bf16.mxu0 0
  %79 = vmatpush1.bf16.msra.mxu0 0
  %80 = vmatprep.subr.bf16.mxu0 0
  %81 = vmatpush1.bf16.msra.mxu0 0
  %82 = vmatprep.subr.bf16.mxu0 0
  %83 = vmatpush1.bf16.msra.mxu0 0
  %84 = vmatprep.mubr.bf16.mxu0 0
  %85 = vmatmul.mubr.bf16.gmra.mrb[0].mxu0 %v50
  %v86 = vpop.f32.mrb[0].mxu0
  %v87 = vadd.f32 %v29, %v86
  %v88 = vpop.f32.mrb[0].mxu0
  %v89 = vpop.f32.mrb[0].mxu0
  %v90 = vadd.f32 %v29, %v89
  %v91 = vpop.f32.mrb[0].mxu0
  %92 = vdwg.mxu0
  %v93 = vld [vmem:[%s3] sm:$0xff]
  %v94 = vld [vmem:[%s3 + $0x8] sm:$0xff]
  %v95 = vadd.f32 %v87, %v93
  %v96 = vadd.f32 %v90, %v94
  %97 = vst.msk [vmem:[%s4] sm:$0xff] %vm48, %v95
  %98 = vst.msk [vmem:[%s4 + $0x8] sm:$0xff] %vm48, %v96
  // Predicated region
  $region18: #{block_forward.13} parent=0 // pred_check
    _
  $region19: #{block_forward.13} parent=0 // pred_check_branch
    %100 = sbr.rel (0) target = $region21
  $region20: #{block_forward.13} parent=0 // pred_region
    _
  $region21: #{block_forward.13} parent=0 // pred_fallthru
    _
  // Predicated region
  $region22: #{block_forward.13} parent=0 // pred_check
    _
  $region23: #{block_forward.13} parent=0 // pred_check_branch
    %102 = sbr.rel (0) target = $region25
  $region24: #{block_forward.13} parent=0 // pred_region
    _
  $region25: #{block_forward.13} parent=0 // pred_fallthru
    _

// kernel: block_forward.18
$region0: #{block_forward.18}
  #allocation0 [shape = 'u32[]', space=smem, size = 0x4, offset = 0x4, fixed_abs, tag = 'smem constant byte address 0x4 - core index']
  #allocation1 [shape = 'u32[144,128]{1,0:T(1,128)}', space=vmem, size = 0x12000, scoped, tag = 'internal scratch']
  %s0 = inlined_call_operand.vmem [shape: bf16[4,32], index: 0, kind: input, shape index: {}]
  %s1 = inlined_call_operand.vmem [shape: bf16[32,32], index: 1, kind: input, shape index: {}]
  %s2 = inlined_call_operand.vmem [shape: f32[1,32], index: 2, kind: input, shape index: {}]
  %s3 = inlined_call_operand.vmem [shape: f32[4,32], index: 3, kind: output, shape index: {}]
  %s4 = sld [smem:[#allocation0]]
  $region22: #{block_forward.18} parent=0
    _
  %s6 = ssub.s32 1, %s4
  %s7 = scalar_select 0, %s6, %s4
  // Predicated region
  $region2: #{block_forward.18} parent=0 // pred_check
    _
  $region3: #{block_forward.18} parent=0 // pred_check_branch
    %9 = sbr.rel (0) target = $region5
  $region4: #{block_forward.18} parent=0 // pred_region
    _
  $region5: #{block_forward.18} parent=0 // pred_fallthru
    _
  // Predicated region
  $region6: #{block_forward.18} parent=0 // pred_check
    _
  $region7: #{block_forward.18} parent=0 // pred_check_branch
    %11 = sbr.rel (0) target = $region9
  $region8: #{block_forward.18} parent=0 // pred_region
    _
  $region9: #{block_forward.18} parent=0 // pred_fallthru
    _
  // Predicated region
  $region10: #{block_forward.18} parent=0 // pred_check
    _
  $region11: #{block_forward.18} parent=0 // pred_check_branch
    %13 = sbr.rel (0) target = $region13
  $region12: #{block_forward.18} parent=0 // pred_region
    _
  $region13: #{block_forward.18} parent=0 // pred_fallthru
    _
  %v15 = vld [vmem:[%s0] sm:$0x3]
  %v16 = vld [vmem:[%s1] sm:$0xf]
  %v17 = vld [vmem:[%s1 + $0x4] sm:$0xf]
  %v18 = vld [vmem:[%s1 + $0x8] sm:$0xf]
  %v19 = vld [vmem:[%s1 + $0xc] sm:$0xf]
  %v20 = vld [vmem:[%s2] sm:$0x1]
  %v22 = vlaneseq
  %v23 = vshrl.u32 %v22, 7
  %v24 = vsub.s32 0, %v23
  %v25 = vrot.slane %v20, %v24
  %v31 = vunpack.c.l.b16 %v16
  %v32 = vunpack.c.l.b16 %v17
  %v33 = vunpack.c.l.b16 %v18
  %v34 = vunpack.c.l.b16 %v19
  %v35 = vpack.c.b16 %v32, %v31
  %v36 = vpack.c.b16 %v34, %v33
  %vm39 = vcmask 261120
  %v41 = vsel %vm39, %v15, 0
  %43 = vmatprep.subr.bf16.mxu0 0
  %44 = vmatpush1.bf16.msra.mxu0 %v35
  %45 = vmatprep.subr.bf16.mxu0 0
  %46 = vmatpush1.bf16.msra.mxu0 %v36
  %47 = vmatprep.subr.bf16.mxu0 0
  %48 = vmatpush1.bf16.msra.mxu0 0
  %49 = vmatprep.subr.bf16.mxu0 0
  %50 = vmatpush1.bf16.msra.mxu0 0
  %51 = vmatprep.subr.bf16.mxu0 0
  %52 = vmatpush1.bf16.msra.mxu0 0
  %53 = vmatprep.subr.bf16.mxu0 0
  %54 = vmatpush1.bf16.msra.mxu0 0
  %55 = vmatprep.subr.bf16.mxu0 0
  %56 = vmatpush1.bf16.msra.mxu0 0
  %57 = vmatprep.subr.bf16.mxu0 0
  %58 = vmatpush1.bf16.msra.mxu0 0
  %59 = vmatprep.subr.bf16.mxu0 0
  %60 = vmatpush1.bf16.msra.mxu0 0
  %61 = vmatprep.subr.bf16.mxu0 0
  %62 = vmatpush1.bf16.msra.mxu0 0
  %63 = vmatprep.subr.bf16.mxu0 0
  %64 = vmatpush1.bf16.msra.mxu0 0
  %65 = vmatprep.subr.bf16.mxu0 0
  %66 = vmatpush1.bf16.msra.mxu0 0
  %67 = vmatprep.subr.bf16.mxu0 0
  %68 = vmatpush1.bf16.msra.mxu0 0
  %69 = vmatprep.subr.bf16.mxu0 0
  %70 = vmatpush1.bf16.msra.mxu0 0
  %71 = vmatprep.subr.bf16.mxu0 0
  %72 = vmatpush1.bf16.msra.mxu0 0
  %73 = vmatprep.subr.bf16.mxu0 0
  %74 = vmatpush1.bf16.msra.mxu0 0
  %75 = vmatprep.mubr.bf16.mxu0 0
  %76 = vmatmul.mubr.bf16.gmra.mrb[0].mxu0 %v41
  %v77 = vpop.f32.mrb[0].mxu0
  %v78 = vadd.f32 %v25, %v77
  %v79 = vpop.f32.mrb[0].mxu0
  %v80 = vpop.f32.mrb[0].mxu0
  %v81 = vpop.f32.mrb[0].mxu0
  %82 = vdwg.mxu0
  %vm83 = vcmask 257024
  %84 = vst.msk [vmem:[%s3] sm:$0xf] %vm83, %v78
  // Predicated region
  $region14: #{block_forward.18} parent=0 // pred_check
    _
  $region15: #{block_forward.18} parent=0 // pred_check_branch
    %86 = sbr.rel (0) target = $region17
  $region16: #{block_forward.18} parent=0 // pred_region
    _
  $region17: #{block_forward.18} parent=0 // pred_fallthru
    _
  // Predicated region
  $region18: #{block_forward.18} parent=0 // pred_check
    _
  $region19: #{block_forward.18} parent=0 // pred_check_branch
    %88 = sbr.rel (0) target = $region21
  $region20: #{block_forward.18} parent=0 // pred_region
    _
  $region21: #{block_forward.18} parent=0 // pred_fallthru
    _

// kernel: block_forward.16
$region0: #{block_forward.16}
  #allocation0 [shape = 'u32[]', space=smem, size = 0x4, offset = 0x4, fixed_abs, tag = 'smem constant byte address 0x4 - core index']
  #allocation1 [shape = 'u32[144,128]{1,0:T(1,128)}', space=vmem, size = 0x12000, scoped, tag = 'internal scratch']
  %s0 = inlined_call_operand.vmem [shape: bf16[4,4,96], index: 0, kind: input, shape index: {}]
  %s1 = inlined_call_operand.vmem [shape: bf16[4,1,96], index: 1, kind: input, shape index: {}]
  %s2 = inlined_call_operand.vmem [shape: bf16[4,4,32], index: 2, kind: output, shape index: {0}]
  %s3 = inlined_call_operand.vmem [shape: bf16[4,1,32], index: 3, kind: output, shape index: {1}]
  %4 = xla_tuple %s2, %s3
  %s5 = sld [smem:[#allocation0]]
  $region49: #{block_forward.16} parent=0
    _
  %s7 = ssub.s32 1, %s5
  %s8 = scalar_select 0, %s7, %s5
  loop: start=0, step=1, limit=6
  $region2: #{block_forward.16} parent=0 // loop_pre_header
    _
  $region3: #{block_forward.16} parent=0 // loop_header
    %s10 = sphi 0, %s14
    %p11 = scmp.ge.s32.totalorder %s10, 6
    %s20 = sphi 0, %s22
    %s23 = sphi 0, %s20
    %s24 = sphi 0, %s23
    %s40 = sphi 0, %s24
    %s46 = sphi 0, %s48
    %s49 = sphi 0, %s46
    %s50 = sphi 0, %s49
    %s66 = sphi 0, %s50
    %s72 = sphi 0, %s74
    %s75 = sphi 0, %s72
    %s76 = sphi 0, %s75
    %s92 = sphi 0, %s76
    %s98 = sphi 0, %s100
    %s101 = sphi 0, %s98
    %s102 = sphi 0, %s101
    %s118 = sphi 0, %s102
  $region4: #{block_forward.16} parent=0 // loop_header_branch
    %13 = sbr.rel (%p11) target = $region8
  $region5: #{block_forward.16} parent=0 // loop_body
    %s15 = ssub.s32 %s10, 1
    %s16 = ssub.s32 %s10, 2
    %s17 = sadd.s32 %s10, 1
    %s18 = ssub.s32 %s10, %s17
    %p19 = scmp.eq.s32.totalorder %s18, 0
    %s21 = sadd.s32 %s20, 1
    %s22 = scalar_select %p19, %s20, %s21
    %p25 = pneg %p19
    %p26 = scmp.eq.s32.totalorder %s10, 3
    %p27 = por %p25, %p26
    %p28 = scmp.ne.s32.totalorder %s20, %s23
    %p29 = scmp.eq.s32.totalorder %s10, 0
    %p30 = por %p28, %p29
    %p31 = scmp.ne.s32.totalorder %s20, %s23
    %p32 = scmp.eq.s32.totalorder %s15, 3
    %p33 = por %p31, %p32
    %p34 = scmp.ne.s32.totalorder %s23, %s24
    %p35 = scmp.eq.s32.totalorder %s15, 0
    %p36 = por %p34, %p35
    %p37 = scmp.ne.s32.totalorder %s23, %s24
    %p38 = scmp.eq.s32.totalorder %s16, 3
    %p39 = por %p37, %p38
    %p41 = scmp.ne.s32.totalorder %s24, %s40
    %p42 = scmp.eq.s32.totalorder %s16, 0
    %p43 = por %p41, %p42
    %s44 = ssub.s32 %s10, %s17
    %p45 = scmp.eq.s32.totalorder %s44, 0
    %s47 = sadd.s32 %s46, 1
    %s48 = scalar_select %p45, %s46, %s47
    %p51 = pneg %p45
    %p52 = scmp.eq.s32.totalorder %s10, 3
    %p53 = por %p51, %p52
    %p54 = scmp.ne.s32.totalorder %s46, %s49
    %p55 = scmp.eq.s32.totalorder %s10, 0
    %p56 = por %p54, %p55
    %p57 = scmp.ne.s32.totalorder %s46, %s49
    %p58 = scmp.eq.s32.totalorder %s15, 3
    %p59 = por %p57, %p58
    %p60 = scmp.ne.s32.totalorder %s49, %s50
    %p61 = scmp.eq.s32.totalorder %s15, 0
    %p62 = por %p60, %p61
    %p63 = scmp.ne.s32.totalorder %s49, %s50
    %p64 = scmp.eq.s32.totalorder %s16, 3
    %p65 = por %p63, %p64
    %p67 = scmp.ne.s32.totalorder %s50, %s66
    %p68 = scmp.eq.s32.totalorder %s16, 0
    %p69 = por %p67, %p68
    %s70 = ssub.s32 %s10, %s17
    %p71 = scmp.eq.s32.totalorder %s70, 0
    %s73 = sadd.s32 %s72, 1
    %s74 = scalar_select %p71, %s72, %s73
    %p77 = pneg %p71
    %p78 = scmp.eq.s32.totalorder %s10, 3
    %p79 = por %p77, %p78
    %p80 = scmp.ne.s32.totalorder %s72, %s75
    %p81 = scmp.eq.s32.totalorder %s10, 0
    %p82 = por %p80, %p81
    %p83 = scmp.ne.s32.totalorder %s72, %s75
    %p84 = scmp.eq.s32.totalorder %s15, 3
    %p85 = por %p83, %p84
    %p86 = scmp.ne.s32.totalorder %s75, %s76
    %p87 = scmp.eq.s32.totalorder %s15, 0
    %p88 = por %p86, %p87
    %p89 = scmp.ne.s32.totalorder %s75, %s76
    %p90 = scmp.eq.s32.totalorder %s16, 3
    %p91 = por %p89, %p90
    %p93 = scmp.ne.s32.totalorder %s76, %s92
    %p94 = scmp.eq.s32.totalorder %s16, 0
    %p95 = por %p93, %p94
    %s96 = ssub.s32 %s10, %s17
    %p97 = scmp.eq.s32.totalorder %s96, 0
    %s99 = sadd.s32 %s98, 1
    %s100 = scalar_select %p97, %s98, %s99
    %p103 = pneg %p97
    %p104 = scmp.eq.s32.totalorder %s10, 3
    %p105 = por %p103, %p104
    %p106 = scmp.ne.s32.totalorder %s98, %s101
    %p107 = scmp.eq.s32.totalorder %s10, 0
    %p108 = por %p106, %p107
    %p109 = scmp.ne.s32.totalorder %s98, %s101
    %p110 = scmp.eq.s32.totalorder %s15, 3
    %p111 = por %p109, %p110
    %p112 = scmp.ne.s32.totalorder %s101, %s102
    %p113 = scmp.eq.s32.totalorder %s15, 0
    %p114 = por %p112, %p113
    %p115 = scmp.ne.s32.totalorder %s101, %s102
    %p116 = scmp.eq.s32.totalorder %s16, 3
    %p117 = por %p115, %p116
    %p119 = scmp.ne.s32.totalorder %s102, %s118
    %p120 = scmp.eq.s32.totalorder %s16, 0
    %p121 = por %p119, %p120
    %p122 = scmp.le.s32.totalorder 1, %s10
    %p123 = scmp.lt.s32.totalorder %s10, 5
    %p124 = pnand %p122, %p123
    %p125 = pneg %p124
    // Predicated region
    $region9: #{block_forward.16} parent=5 // pred_check
      _
    $region10: #{block_forward.16} parent=5 // pred_check_branch
      %127 = sbr.rel (%p124) target = $region12
    $region11: #{block_forward.16} parent=5 // pred_region
      %s128 = ssub.s32 %s10, 1
    $region12: #{block_forward.16} parent=5 // pred_fallthru
      _
    %p129 = scmp.lt.s32.totalorder %s10, 4
    // Predicated region
    $region13: #{block_forward.16} parent=5 // pred_check
      %p130 = pneg %p129
    $region14: #{block_forward.16} parent=5 // pred_check_branch
      %132 = sbr.rel (%p130) target = $region16
    $region15: #{block_forward.16} parent=5 // pred_region
      // Predicated region
      $region17: #{block_forward.16} parent=15 // pred_check
        %p133 = pneg %p30
      $region18: #{block_forward.16} parent=15 // pred_check_branch
        %135 = sbr.rel (%p133) target = $region20
      $region19: #{block_forward.16} parent=15 // pred_region
        %p136 = scmp.lt.s32.totalorder %s10, 3
        %s137 = scalar_select %p136, %s10, 3
        %s138 = smul.addr %s137, 2
        %s139 = scalar_lea.vmem %s0, %s138
      $region20: #{block_forward.16} parent=15 // pred_fallthru
        _
      // Predicated region
      $region21: #{block_forward.16} parent=15 // pred_check
        %p140 = pneg %p56
      $region22: #{block_forward.16} parent=15 // pred_check_branch
        %142 = sbr.rel (%p140) target = $region24
      $region23: #{block_forward.16} parent=15 // pred_region
        %p143 = scmp.lt.s32.totalorder %s10, 3
        %s144 = scalar_select %p143, %s10, 3
        %s145 = scalar_lea.vmem %s1, %s144
      $region24: #{block_forward.16} parent=15 // pred_fallthru
        _
    $region16: #{block_forward.16} parent=5 // pred_fallthru
      _
    %p146 = scmp.le.s32.totalorder 1, %s10
    %p147 = scmp.lt.s32.totalorder %s10, 5
    %p148 = pnand %p146, %p147
    %p149 = pneg %p148
    // Predicated region
    $region25: #{block_forward.16} parent=5 // pred_check
      _
    $region26: #{block_forward.16} parent=5 // pred_check_branch
      %151 = sbr.rel (%p148) target = $region28
    $region27: #{block_forward.16} parent=5 // pred_region
      %s152 = ssub.s32 %s10, 1
      %p153 = scmp.lt.s32.totalorder %s15, 3
      %s154 = scalar_select %p153, %s15, 3
      %s155 = smul.addr %s154, 2
      %s156 = scalar_lea.vmem %s0, %s155
      %p157 = pneg %p36
      %p158 = pneg %p33
      %p159 = scmp.lt.s32.totalorder %s15, 3
      %s160 = scalar_select %p159, %s15, 3
      %s161 = scalar_lea.vmem %s1, %s160
      %p162 = pneg %p62
      %p163 = pneg %p59
      %p164 = pneg %p88
      %p165 = pneg %p85
      %p166 = scmp.lt.s32.totalorder %s15, 3
      %s167 = scalar_select %p166, %s15, 3
      %s168 = smul.addr %s167, 2
      %s169 = scalar_lea.vmem %s2, %s168
      %p170 = pneg %p114
      %p171 = pneg %p111
      %p172 = scmp.lt.s32.totalorder %s15, 3
      %s173 = scalar_select %p172, %s15, 3
      %s174 = scalar_lea.vmem %s3, %s173
      %p175 = scmp.lt.s32.totalorder %s15, 3
      %s176 = scalar_select %p175, %s15, 3
      %s177 = smul.addr %s176, 2
      %s178 = scalar_lea.vmem %s0, %s177
      %p179 = scmp.lt.s32.totalorder %s15, 3
      %s180 = scalar_select %p179, %s15, 3
      %s181 = scalar_lea.vmem %s1, %s180
      %p182 = scmp.lt.s32.totalorder %s15, 3
      %s183 = scalar_select %p182, %s15, 3
      %s184 = smul.addr %s183, 2
      %s185 = scalar_lea.vmem %s2, %s184
      %p186 = scmp.lt.s32.totalorder %s15, 3
      %s187 = scalar_select %p186, %s15, 3
      %s188 = scalar_lea.vmem %s3, %s187
      %v190 = vld [vmem:[%s178] sm:$0x3]
      %v191 = vld [vmem:[%s181] sm:$0x1]
      %v194 = vunpack.c.l.s4 1983009808
      %v195 = vunpack.c.0.s8 %v194
      %v196 = vlaneseq
      %v197 = vshrl.u32 %v196, 7
      %v198 = vsub.s32 %v195, %v197
      %v199 = vrot.slane %v190, %v198
      %200 = vrot.lane.b32.xlu0 %v199, 96
      %v201 = vpop.permute.xlu0 %200
      %vm202 = vcmask 64512
      %v204 = vsel %vm202, %v190, 0
      %v207 = vsel %vm202, %v201, 0
      %209 = vmatprep.subr.bf16.mxu0 0
      %210 = vmatpush1.bf16.xpose.msra.mxu0 %v207
      %211 = vmatprep.subr.bf16.mxu0 0
      %212 = vmatpush1.bf16.xpose.msra.mxu0 0
      %213 = vmatprep.subr.bf16.mxu0 0
      %214 = vmatpush1.bf16.xpose.msra.mxu0 0
      %215 = vmatprep.subr.bf16.mxu0 0
      %216 = vmatpush1.bf16.xpose.msra.mxu0 0
      %217 = vmatprep.subr.bf16.mxu0 0
      %218 = vmatpush1.bf16.xpose.msra.mxu0 0
      %219 = vmatprep.subr.bf16.mxu0 0
      %220 = vmatpush1.bf16.xpose.msra.mxu0 0
      %221 = vmatprep.subr.bf16.mxu0 0
      %222 = vmatpush1.bf16.xpose.msra.mxu0 0
      %223 = vmatprep.subr.bf16.mxu0 0
      %224 = vmatpush1.bf16.xpose.msra.mxu0 0
      %225 = vmatprep.subr.bf16.mxu0 0
      %226 = vmatpush1.bf16.xpose.msra.mxu0 0
      %227 = vmatprep.subr.bf16.mxu0 0
      %228 = vmatpush1.bf16.xpose.msra.mxu0 0
      %229 = vmatprep.subr.bf16.mxu0 0
      %230 = vmatpush1.bf16.xpose.msra.mxu0 0
      %231 = vmatprep.subr.bf16.mxu0 0
      %232 = vmatpush1.bf16.xpose.msra.mxu0 0
      %233 = vmatprep.subr.bf16.mxu0 0
      %234 = vmatpush1.bf16.xpose.msra.mxu0 0
      %235 = vmatprep.subr.bf16.mxu0 0
      %236 = vmatpush1.bf16.xpose.msra.mxu0 0
      %237 = vmatprep.subr.bf16.mxu0 0
      %238 = vmatpush1.bf16.xpose.msra.mxu0 0
      %239 = vmatprep.subr.bf16.mxu0 0
      %240 = vmatpush1.bf16.xpose.msra.mxu0 0
      %241 = vmatprep.mubr.bf16.mxu0 0
      %242 = vmatmul.mubr.bf16.gmra.mrb[0].mxu0 %v204
      %v243 = vpop.f32.mrb[0].mxu0
      %v244 = vadd.f32 0.0, %v243
      %v245 = vpop.f32.mrb[0].mxu0
      %v246 = vpop.f32.mrb[0].mxu0
      %v247 = vpop.f32.mrb[0].mxu0
      %248 = vdwg.mxu0
      %v249 = vmul.f32 %v244, 0.35355338
      %v250 = vunpack.c.l.bf16 %v190
      %v251 = vunpack.c.l.bf16 %v191
      %v252 = vlaneseq
      %v253 = vshrl.u32 %v252, 7
      %v254 = vsub.s32 0, %v253
      %v255 = vrot.slane %v251, %v254
      %257 = vrot.lane.b32.xlu0 %v255, 96
      %v258 = vpop.permute.xlu0 %257
      %v260 = vmul.f32 %v250, %v258
      %vm261 = vcmask 60416
      %v262 = vsel %vm261, %v260, 0.0
      %263 = vadd.xlane.f32.xlu0 %v262
      %v264 = vpop.xlane.xlu0 %263
      %v265 = vmul.f32 %v264, 0.35355338
      %vm266 = vcmask 27648
      %v267 = vsel %vm266, %v249, -inf
      %268 = vmax.xlane.f32.xlu0 %v267
      %v269 = vpop.xlane.xlu0 %268
      %v270 = vmax.f32 %v269, %v265
      %v271 = vsub.f32 %v249, %v270
      %v272 = vmul.f32 %v271, 1.442695
      %v273 = vpow.pop %v272
      %v274 = vsub.f32 %v265, %v270
      %v275 = vmul.f32 %v274, 1.442695
      %v276 = vpow.pop %v275
      %v277 = vsel %vm266, %v273, 0.0
      %278 = vadd.xlane.f32.xlu0 %v277
      %v279 = vpop.xlane.xlu0 %278
      %v280 = vadd.f32 %v279, %v276
      %v281 = vpack.c.bf16 %v273, %v273
      %v282 = vmul.f32 %v276, %v255
      %283 = vrot.lane.b32.xlu0 %v199, 64
      %v284 = vpop.permute.xlu0 %283
      %286 = vrot.lane.b32.xlu0 %v282, 64
      %v287 = vpop.permute.xlu0 %286
      %vm289 = vcmask 31744
      %v291 = vsel %vm289, %v281, 0
      %vm293 = vcmask 1041408
      %v295 = vsel %vm293, %v284, 0
      %297 = vmatprep.subr.bf16.mxu0 0
      %298 = vmatpush1.bf16.msra.mxu0 %v295
      %299 = vmatprep.subr.bf16.mxu0 0
      %300 = vmatpush1.bf16.msra.mxu0 0
      %301 = vmatprep.subr.bf16.mxu0 0
      %302 = vmatpush1.bf16.msra.mxu0 0
      %303 = vmatprep.subr.bf16.mxu0 0
      %304 = vmatpush1.bf16.msra.mxu0 0
      %305 = vmatprep.subr.bf16.mxu0 0
      %306 = vmatpush1.bf16.msra.mxu0 0
      %307 = vmatprep.subr.bf16.mxu0 0
      %308 = vmatpush1.bf16.msra.mxu0 0
      %309 = vmatprep.subr.bf16.mxu0 0
      %310 = vmatpush1.bf16.msra.mxu0 0
      %311 = vmatprep.subr.bf16.mxu0 0
      %312 = vmatpush1.bf16.msra.mxu0 0
      %313 = vmatprep.subr.bf16.mxu0 0
      %314 = vmatpush1.bf16.msra.mxu0 0
      %315 = vmatprep.subr.bf16.mxu0 0
      %316 = vmatpush1.bf16.msra.mxu0 0
      %317 = vmatprep.subr.bf16.mxu0 0
      %318 = vmatpush1.bf16.msra.mxu0 0
      %319 = vmatprep.subr.bf16.mxu0 0
      %320 = vmatpush1.bf16.msra.mxu0 0
      %321 = vmatprep.subr.bf16.mxu0 0
      %322 = vmatpush1.bf16.msra.mxu0 0
      %323 = vmatprep.subr.bf16.mxu0 0
      %324 = vmatpush1.bf16.msra.mxu0 0
      %325 = vmatprep.subr.bf16.mxu0 0
      %326 = vmatpush1.bf16.msra.mxu0 0
      %327 = vmatprep.subr.bf16.mxu0 0
      %328 = vmatpush1.bf16.msra.mxu0 0
      %329 = vmatprep.mubr.bf16.mxu0 0
      %330 = vmatmul.mubr.bf16.gmra.mrb[0].mxu0 %v291
      %v331 = vpop.f32.mrb[0].mxu0
      %v332 = vadd.f32 %v287, %v331
      %v333 = vpop.f32.mrb[0].mxu0
      %v334 = vpop.f32.mrb[0].mxu0
      %v335 = vpop.f32.mrb[0].mxu0
      %336 = vdwg.mxu0
      %v337 = vrcp.pop %v280
      %v338 = vmul.f32 %v332, %v337
      %v340 = vsel %vm202, %v191, 0
      %342 = vmatprep.subr.bf16.mxu0 0
      %343 = vmatpush1.bf16.xpose.msra.mxu0 %v207
      %344 = vmatprep.subr.bf16.mxu0 0
      %345 = vmatpush1.bf16.xpose.msra.mxu0 0
      %346 = vmatprep.subr.bf16.mxu0 0
      %347 = vmatpush1.bf16.xpose.msra.mxu0 0
      %348 = vmatprep.subr.bf16.mxu0 0
      %349 = vmatpush1.bf16.xpose.msra.mxu0 0
      %350 = vmatprep.subr.bf16.mxu0 0
      %351 = vmatpush1.bf16.xpose.msra.mxu0 0
      %352 = vmatprep.subr.bf16.mxu0 0
      %353 = vmatpush1.bf16.xpose.msra.mxu0 0
      %354 = vmatprep.subr.bf16.mxu0 0
      %355 = vmatpush1.bf16.xpose.msra.mxu0 0
      %356 = vmatprep.subr.bf16.mxu0 0
      %357 = vmatpush1.bf16.xpose.msra.mxu0 0
      %358 = vmatprep.subr.bf16.mxu0 0
      %359 = vmatpush1.bf16.xpose.msra.mxu0 0
      %360 = vmatprep.subr.bf16.mxu0 0
      %361 = vmatpush1.bf16.xpose.msra.mxu0 0
      %362 = vmatprep.subr.bf16.mxu0 0
      %363 = vmatpush1.bf16.xpose.msra.mxu0 0
      %364 = vmatprep.subr.bf16.mxu0 0
      %365 = vmatpush1.bf16.xpose.msra.mxu0 0
      %366 = vmatprep.subr.bf16.mxu0 0
      %367 = vmatpush1.bf16.xpose.msra.mxu0 0
      %368 = vmatprep.subr.bf16.mxu0 0
      %369 = vmatpush1.bf16.xpose.msra.mxu0 0
      %370 = vmatprep.subr.bf16.mxu0 0
      %371 = vmatpush1.bf16.xpose.msra.mxu0 0
      %372 = vmatprep.subr.bf16.mxu0 0
      %373 = vmatpush1.bf16.xpose.msra.mxu0 0
      %374 = vmatprep.mubr.bf16.mxu0 0
      %375 = vmatmul.mubr.bf16.gmra.mrb[0].mxu0 %v340
      %v376 = vpop.f32.mrb[0].mxu0
      %v377 = vadd.f32 0.0, %v376
      %v378 = vpop.f32.mrb[0].mxu0
      %v379 = vpop.f32.mrb[0].mxu0
      %v380 = vpop.f32.mrb[0].mxu0
      %381 = vdwg.mxu0
      %v382 = vmul.f32 %v377, 0.35355338
      %384 = vrot.lane.b32.xlu0 %v251, 96
      %v385 = vpop.permute.xlu0 %384
      %v387 = vmul.f32 %v251, %v385
      %vm388 = vcmask 57344
      %v389 = vsel %vm388, %v387, 0.0
      %390 = vadd.xlane.f32.xlu0 %v389
      %v391 = vpop.xlane.xlu0 %390
      %v392 = vmul.f32 %v391, 0.35355338
      %vm393 = vcmask 24576
      %v394 = vsel %vm393, %v382, -inf
      %395 = vmax.xlane.f32.xlu0 %v394
      %v396 = vpop.xlane.xlu0 %395
      %v397 = vmax.f32 %v396, %v392
      %v398 = vsub.f32 %v382, %v397
      %v399 = vmul.f32 %v398, 1.442695
      %v400 = vpow.pop %v399
      %v401 = vsub.f32 %v392, %v397
      %v402 = vmul.f32 %v401, 1.442695
      %v403 = vpow.pop %v402
      %v404 = vsel %vm393, %v400, 0.0
      %405 = vadd.xlane.f32.xlu0 %v404
      %v406 = vpop.xlane.xlu0 %405
      %v407 = vadd.f32 %v406, %v403
      %v408 = vpack.c.bf16 %v400, %v400
      %v409 = vlaneseq
      %v410 = vshrl.u32 %v409, 7
      %v411 = vsub.s32 0, %v410
      %v412 = vrot.slane %v251, %v411
      %413 = vrot.lane.b32.xlu0 %v412, 64
      %v414 = vpop.permute.xlu0 %413
      %v416 = vmul.f32 %v403, %v414
      %v418 = vsel %vm289, %v408, 0
      %420 = vmatprep.subr.bf16.mxu0 0
      %421 = vmatpush1.bf16.msra.mxu0 %v295
      %422 = vmatprep.subr.bf16.mxu0 0
      %423 = vmatpush1.bf16.msra.mxu0 0
      %424 = vmatprep.subr.bf16.mxu0 0
      %425 = vmatpush1.bf16.msra.mxu0 0
      %426 = vmatprep.subr.bf16.mxu0 0
      %427 = vmatpush1.bf16.msra.mxu0 0
      %428 = vmatprep.subr.bf16.mxu0 0
      %429 = vmatpush1.bf16.msra.mxu0 0
      %430 = vmatprep.subr.bf16.mxu0 0
      %431 = vmatpush1.bf16.msra.mxu0 0
      %432 = vmatprep.subr.bf16.mxu0 0
      %433 = vmatpush1.bf16.msra.mxu0 0
      %434 = vmatprep.subr.bf16.mxu0 0
      %435 = vmatpush1.bf16.msra.mxu0 0
      %436 = vmatprep.subr.bf16.mxu0 0
      %437 = vmatpush1.bf16.msra.mxu0 0
      %438 = vmatprep.subr.bf16.mxu0 0
      %439 = vmatpush1.bf16.msra.mxu0 0
      %440 = vmatprep.subr.bf16.mxu0 0
      %441 = vmatpush1.bf16.msra.mxu0 0
      %442 = vmatprep.subr.bf16.mxu0 0
      %443 = vmatpush1.bf16.msra.mxu0 0
      %444 = vmatprep.subr.bf16.mxu0 0
      %445 = vmatpush1.bf16.msra.mxu0 0
      %446 = vmatprep.subr.bf16.mxu0 0
      %447 = vmatpush1.bf16.msra.mxu0 0
      %448 = vmatprep.subr.bf16.mxu0 0
      %449 = vmatpush1.bf16.msra.mxu0 0
      %450 = vmatprep.subr.bf16.mxu0 0
      %451 = vmatpush1.bf16.msra.mxu0 0
      %452 = vmatprep.mubr.bf16.mxu0 0
      %453 = vmatmul.mubr.bf16.gmra.mrb[0].mxu0 %v418
      %v454 = vpop.f32.mrb[0].mxu0
      %v455 = vadd.f32 %v416, %v454
      %v456 = vpop.f32.mrb[0].mxu0
      %v457 = vpop.f32.mrb[0].mxu0
      %v458 = vpop.f32.mrb[0].mxu0
      %459 = vdwg.mxu0
      %v460 = vrcp.pop %v407
      %v461 = vmul.f32 %v455, %v460
      %462 = vrot.lane.b32.xlu0 %v199, 120
      %v463 = vpop.permute.xlu0 %462
      %464 = vrot.lane.b32.xlu0 %v199, 88
      %v465 = vpop.permute.xlu0 %464
      %v467 = vsel %vm202, %v463, 0
      %v470 = vsel %vm202, %v465, 0
      %472 = vmatprep.subr.bf16.mxu0 0
      %473 = vmatpush1.bf16.xpose.msra.mxu0 %v470
      %474 = vmatprep.subr.bf16.mxu0 0
      %475 = vmatpush1.bf16.xpose.msra.mxu0 0
      %476 = vmatprep.subr.bf16.mxu0 0
      %477 = vmatpush1.bf16.xpose.msra.mxu0 0
      %478 = vmatprep.subr.bf16.mxu0 0
      %479 = vmatpush1.bf16.xpose.msra.mxu0 0
      %480 = vmatprep.subr.bf16.mxu0 0
      %481 = vmatpush1.bf16.xpose.msra.mxu0 0
      %482 = vmatprep.subr.bf16.mxu0 0
      %483 = vmatpush1.bf16.xpose.msra.mxu0 0
      %484 = vmatprep.subr.bf16.mxu0 0
      %485 = vmatpush1.bf16.xpose.msra.mxu0 0
      %486 = vmatprep.subr.bf16.mxu0 0
      %487 = vmatpush1.bf16.xpose.msra.mxu0 0
      %488 = vmatprep.subr.bf16.mxu0 0
      %489 = vmatpush1.bf16.xpose.msra.mxu0 0
      %490 = vmatprep.subr.bf16.mxu0 0
      %491 = vmatpush1.bf16.xpose.msra.mxu0 0
      %492 = vmatprep.subr.bf16.mxu0 0
      %493 = vmatpush1.bf16.xpose.msra.mxu0 0
      %494 = vmatprep.subr.bf16.mxu0 0
      %495 = vmatpush1.bf16.xpose.msra.mxu0 0
      %496 = vmatprep.subr.bf16.mxu0 0
      %497 = vmatpush1.bf16.xpose.msra.mxu0 0
      %498 = vmatprep.subr.bf16.mxu0 0
      %499 = vmatpush1.bf16.xpose.msra.mxu0 0
      %500 = vmatprep.subr.bf16.mxu0 0
      %501 = vmatpush1.bf16.xpose.msra.mxu0 0
      %502 = vmatprep.subr.bf16.mxu0 0
      %503 = vmatpush1.bf16.xpose.msra.mxu0 0
      %504 = vmatprep.mubr.bf16.mxu0 0
      %505 = vmatmul.mubr.bf16.gmra.mrb[0].mxu0 %v467
      %v506 = vpop.f32.mrb[0].mxu0
      %v507 = vadd.f32 0.0, %v506
      %v508 = vpop.f32.mrb[0].mxu0
      %v509 = vpop.f32.mrb[0].mxu0
      %v510 = vpop.f32.mrb[0].mxu0
      %511 = vdwg.mxu0
      %v512 = vmul.f32 %v507, 0.35355338
      %514 = vrot.lane.b32.xlu0 %v260, 120
      %v515 = vpop.permute.xlu0 %514
      %v517 = vsel %vm261, %v515, 0.0
      %518 = vadd.xlane.f32.xlu0 %v517
      %v519 = vpop.xlane.xlu0 %518
      %v520 = vmul.f32 %v519, 0.35355338
      %v521 = vsel %vm266, %v512, -inf
      %522 = vmax.xlane.f32.xlu0 %v521
      %v523 = vpop.xlane.xlu0 %522
      %v524 = vmax.f32 %v523, %v520
      %v525 = vsub.f32 %v512, %v524
      %v526 = vmul.f32 %v525, 1.442695
      %v527 = vpow.pop %v526
      %v528 = vsub.f32 %v520, %v524
      %v529 = vmul.f32 %v528, 1.442695
      %v530 = vpow.pop %v529
      %v531 = vsel %vm266, %v527, 0.0
      %532 = vadd.xlane.f32.xlu0 %v531
      %v533 = vpop.xlane.xlu0 %532
      %v534 = vadd.f32 %v533, %v530
      %v535 = vpack.c.bf16 %v527, %v527
      %v536 = vmul.f32 %v530, %v255
      %537 = vrot.lane.b32.xlu0 %v199, 56
      %v538 = vpop.permute.xlu0 %537
      %540 = vrot.lane.b32.xlu0 %v536, 56
      %v541 = vpop.permute.xlu0 %540
      %v544 = vsel %vm289, %v535, 0
      %v547 = vsel %vm293, %v538, 0
      %549 = vmatprep.subr.bf16.mxu0 0
      %550 = vmatpush1.bf16.msra.mxu0 %v547
      %551 = vmatprep.subr.bf16.mxu0 0
      %552 = vmatpush1.bf16.msra.mxu0 0
      %553 = vmatprep.subr.bf16.mxu0 0
      %554 = vmatpush1.bf16.msra.mxu0 0
      %555 = vmatprep.subr.bf16.mxu0 0
      %556 = vmatpush1.bf16.msra.mxu0 0
      %557 = vmatprep.subr.bf16.mxu0 0
      %558 = vmatpush1.bf16.msra.mxu0 0
      %559 = vmatprep.subr.bf16.mxu0 0
      %560 = vmatpush1.bf16.msra.mxu0 0
      %561 = vmatprep.subr.bf16.mxu0 0
      %562 = vmatpush1.bf16.msra.mxu0 0
      %563 = vmatprep.subr.bf16.mxu0 0
      %564 = vmatpush1.bf16.msra.mxu0 0
      %565 = vmatprep.subr.bf16.mxu0 0
      %566 = vmatpush1.bf16.msra.mxu0 0
      %567 = vmatprep.subr.bf16.mxu0 0
      %568 = vmatpush1.bf16.msra.mxu0 0
      %569 = vmatprep.subr.bf16.mxu0 0
      %570 = vmatpush1.bf16.msra.mxu0 0
      %571 = vmatprep.subr.bf16.mxu0 0
      %572 = vmatpush1.bf16.msra.mxu0 0
      %573 = vmatprep.subr.bf16.mxu0 0
      %574 = vmatpush1.bf16.msra.mxu0 0
      %575 = vmatprep.subr.bf16.mxu0 0
      %576 = vmatpush1.bf16.msra.mxu0 0
      %577 = vmatprep.subr.bf16.mxu0 0
      %578 = vmatpush1.bf16.msra.mxu0 0
      %579 = vmatprep.subr.bf16.mxu0 0
      %580 = vmatpush1.bf16.msra.mxu0 0
      %581 = vmatprep.mubr.bf16.mxu0 0
      %582 = vmatmul.mubr.bf16.gmra.mrb[0].mxu0 %v544
      %v583 = vpop.f32.mrb[0].mxu0
      %v584 = vadd.f32 %v541, %v583
      %v585 = vpop.f32.mrb[0].mxu0
      %v586 = vpop.f32.mrb[0].mxu0
      %v587 = vpop.f32.mrb[0].mxu0
      %588 = vdwg.mxu0
      %v589 = vrcp.pop %v534
      %v590 = vmul.f32 %v584, %v589
      %v593 = vunpack.c.l.s4 1966171168
      %v594 = vunpack.c.0.s8 %v593
      %v595 = vlaneseq
      %v596 = vshrl.u32 %v595, 7
      %v597 = vsub.s32 %v594, %v596
      %v598 = vrot.slane %v191, %v597
      %v600 = vunpack.c.l.s4 1966171168
      %v601 = vunpack.c.0.s8 %v600
      %v602 = vlaneseq
      %v603 = vshrl.u32 %v602, 7
      %v604 = vsub.s32 %v601, %v603
      %v605 = vrot.slane %v598, %v604
      %606 = vrot.lane.b32.xlu0 %v605, 120
      %v607 = vpop.permute.xlu0 %606
      %v609 = vsel %vm202, %v607, 0
      %611 = vmatprep.subr.bf16.mxu0 0
      %612 = vmatpush1.bf16.xpose.msra.mxu0 %v470
      %613 = vmatprep.subr.bf16.mxu0 0
      %614 = vmatpush1.bf16.xpose.msra.mxu0 0
      %615 = vmatprep.subr.bf16.mxu0 0
      %616 = vmatpush1.bf16.xpose.msra.mxu0 0
      %617 = vmatprep.subr.bf16.mxu0 0
      %618 = vmatpush1.bf16.xpose.msra.mxu0 0
      %619 = vmatprep.subr.bf16.mxu0 0
      %620 = vmatpush1.bf16.xpose.msra.mxu0 0
      %621 = vmatprep.subr.bf16.mxu0 0
      %622 = vmatpush1.bf16.xpose.msra.mxu0 0
      %623 = vmatprep.subr.bf16.mxu0 0
      %624 = vmatpush1.bf16.xpose.msra.mxu0 0
      %625 = vmatprep.subr.bf16.mxu0 0
      %626 = vmatpush1.bf16.xpose.msra.mxu0 0
      %627 = vmatprep.subr.bf16.mxu0 0
      %628 = vmatpush1.bf16.xpose.msra.mxu0 0
      %629 = vmatprep.subr.bf16.mxu0 0
      %630 = vmatpush1.bf16.xpose.msra.mxu0 0
      %631 = vmatprep.subr.bf16.mxu0 0
      %632 = vmatpush1.bf16.xpose.msra.mxu0 0
      %633 = vmatprep.subr.bf16.mxu0 0
      %634 = vmatpush1.bf16.xpose.msra.mxu0 0
      %635 = vmatprep.subr.bf16.mxu0 0
      %636 = vmatpush1.bf16.xpose.msra.mxu0 0
      %637 = vmatprep.subr.bf16.mxu0 0
      %638 = vmatpush1.bf16.xpose.msra.mxu0 0
      %639 = vmatprep.subr.bf16.mxu0 0
      %640 = vmatpush1.bf16.xpose.msra.mxu0 0
      %641 = vmatprep.subr.bf16.mxu0 0
      %642 = vmatpush1.bf16.xpose.msra.mxu0 0
      %643 = vmatprep.mubr.bf16.mxu0 0
      %644 = vmatmul.mubr.bf16.gmra.mrb[0].mxu0 %v609
      %v645 = vpop.f32.mrb[0].mxu0
      %v646 = vadd.f32 0.0, %v645
      %v647 = vpop.f32.mrb[0].mxu0
      %v648 = vpop.f32.mrb[0].mxu0
      %v649 = vpop.f32.mrb[0].mxu0
      %650 = vdwg.mxu0
      %v651 = vmul.f32 %v646, 0.35355338
      %v653 = vlaneseq
      %v654 = vshrl.u32 %v653, 7
      %v655 = vsub.s32 0, %v654
      %v656 = vrot.slane %v387, %v655
      %657 = vrot.lane.b32.xlu0 %v656, 120
      %v658 = vpop.permute.xlu0 %657
      %v660 = vsel %vm388, %v658, 0.0
      %661 = vadd.xlane.f32.xlu0 %v660
      %v662 = vpop.xlane.xlu0 %661
      %v663 = vmul.f32 %v662, 0.35355338
      %v664 = vsel %vm393, %v651, -inf
      %665 = vmax.xlane.f32.xlu0 %v664
      %v666 = vpop.xlane.xlu0 %665
      %v667 = vmax.f32 %v666, %v663
      %v668 = vsub.f32 %v651, %v667
      %v669 = vmul.f32 %v668, 1.442695
      %v670 = vpow.pop %v669
      %v671 = vsub.f32 %v663, %v667
      %v672 = vmul.f32 %v671, 1.442695
      %v673 = vpow.pop %v672
      %v674 = vsel %vm393, %v670, 0.0
      %675 = vadd.xlane.f32.xlu0 %v674
      %v676 = vpop.xlane.xlu0 %675
      %v677 = vadd.f32 %v676, %v673
      %v678 = vpack.c.bf16 %v670, %v670
      %679 = vrot.lane.b32.xlu0 %v412, 56
      %v680 = vpop.permute.xlu0 %679
      %v682 = vmul.f32 %v673, %v680
      %v684 = vsel %vm289, %v678, 0
      %686 = vmatprep.subr.bf16.mxu0 0
      %687 = vmatpush1.bf16.msra.mxu0 %v547
      %688 = vmatprep.subr.bf16.mxu0 0
      %689 = vmatpush1.bf16.msra.mxu0 0
      %690 = vmatprep.subr.bf16.mxu0 0
      %691 = vmatpush1.bf16.msra.mxu0 0
      %692 = vmatprep.subr.bf16.mxu0 0
      %693 = vmatpush1.bf16.msra.mxu0 0
      %694 = vmatprep.subr.bf16.mxu0 0
      %695 = vmatpush1.bf16.msra.mxu0 0
      %696 = vmatprep.subr.bf16.mxu0 0
      %697 = vmatpush1.bf16.msra.mxu0 0
      %698 = vmatprep.subr.bf16.mxu0 0
      %699 = vmatpush1.bf16.msra.mxu0 0
      %700 = vmatprep.subr.bf16.mxu0 0
      %701 = vmatpush1.bf16.msra.mxu0 0
      %702 = vmatprep.subr.bf16.mxu0 0
      %703 = vmatpush1.bf16.msra.mxu0 0
      %704 = vmatprep.subr.bf16.mxu0 0
      %705 = vmatpush1.bf16.msra.mxu0 0
      %706 = vmatprep.subr.bf16.mxu0 0
      %707 = vmatpush1.bf16.msra.mxu0 0
      %708 = vmatprep.subr.bf16.mxu0 0
      %709 = vmatpush1.bf16.msra.mxu0 0
      %710 = vmatprep.subr.bf16.mxu0 0
      %711 = vmatpush1.bf16.msra.mxu0 0
      %712 = vmatprep.subr.bf16.mxu0 0
      %713 = vmatpush1.bf16.msra.mxu0 0
      %714 = vmatprep.subr.bf16.mxu0 0
      %715 = vmatpush1.bf16.msra.mxu0 0
      %716 = vmatprep.subr.bf16.mxu0 0
      %717 = vmatpush1.bf16.msra.mxu0 0
      %718 = vmatprep.mubr.bf16.mxu0 0
      %719 = vmatmul.mubr.bf16.gmra.mrb[0].mxu0 %v684
      %v720 = vpop.f32.mrb[0].mxu0
      %v721 = vadd.f32 %v682, %v720
      %v722 = vpop.f32.mrb[0].mxu0
      %v723 = vpop.f32.mrb[0].mxu0
      %v724 = vpop.f32.mrb[0].mxu0
      %725 = vdwg.mxu0
      %v726 = vrcp.pop %v677
      %v727 = vmul.f32 %v721, %v726
      %728 = vrot.lane.b32.xlu0 %v199, 112
      %v729 = vpop.permute.xlu0 %728
      %730 = vrot.lane.b32.xlu0 %v199, 80
      %v731 = vpop.permute.xlu0 %730
      %v733 = vsel %vm202, %v729, 0
      %v736 = vsel %vm202, %v731, 0
      %738 = vmatprep.subr.bf16.mxu0 0
      %739 = vmatpush1.bf16.xpose.msra.mxu0 %v736
      %740 = vmatprep.subr.bf16.mxu0 0
      %741 = vmatpush1.bf16.xpose.msra.mxu0 0
      %742 = vmatprep.subr.bf16.mxu0 0
      %743 = vmatpush1.bf16.xpose.msra.mxu0 0
      %744 = vmatprep.subr.bf16.mxu0 0
      %745 = vmatpush1.bf16.xpose.msra.mxu0 0
      %746 = vmatprep.subr.bf16.mxu0 0
      %747 = vmatpush1.bf16.xpose.msra.mxu0 0
      %748 = vmatprep.subr.bf16.mxu0 0
      %749 = vmatpush1.bf16.xpose.msra.mxu0 0
      %750 = vmatprep.subr.bf16.mxu0 0
      %751 = vmatpush1.bf16.xpose.msra.mxu0 0
      %752 = vmatprep.subr.bf16.mxu0 0
      %753 = vmatpush1.bf16.xpose.msra.mxu0 0
      %754 = vmatprep.subr.bf16.mxu0 0
      %755 = vmatpush1.bf16.xpose.msra.mxu0 0
      %756 = vmatprep.subr.bf16.mxu0 0
      %757 = vmatpush1.bf16.xpose.msra.mxu0 0
      %758 = vmatprep.subr.bf16.mxu0 0
      %759 = vmatpush1.bf16.xpose.msra.mxu0 0
      %760 = vmatprep.subr.bf16.mxu0 0
      %761 = vmatpush1.bf16.xpose.msra.mxu0 0
      %762 = vmatprep.subr.bf16.mxu0 0
      %763 = vmatpush1.bf16.xpose.msra.mxu0 0
      %764 = vmatprep.subr.bf16.mxu0 0
      %765 = vmatpush1.bf16.xpose.msra.mxu0 0
      %766 = vmatprep.subr.bf16.mxu0 0
      %767 = vmatpush1.bf16.xpose.msra.mxu0 0
      %768 = vmatprep.subr.bf16.mxu0 0
      %769 = vmatpush1.bf16.xpose.msra.mxu0 0
      %770 = vmatprep.mubr.bf16.mxu0 0
      %771 = vmatmul.mubr.bf16.gmra.mrb[0].mxu0 %v733
      %v772 = vpop.f32.mrb[0].mxu0
      %v773 = vadd.f32 0.0, %v772
      %v774 = vpop.f32.mrb[0].mxu0
      %v775 = vpop.f32.mrb[0].mxu0
      %v776 = vpop.f32.mrb[0].mxu0
      %777 = vdwg.mxu0
      %v778 = vmul.f32 %v773, 0.35355338
      %779 = vrot.lane.b32.xlu0 %v260, 112
      %v780 = vpop.permute.xlu0 %779
      %v782 = vsel %vm261, %v780, 0.0
      %783 = vadd.xlane.f32.xlu0 %v782
      %v784 = vpop.xlane.xlu0 %783
      %v785 = vmul.f32 %v784, 0.35355338
      %v786 = vsel %vm266, %v778, -inf
      %787 = vmax.xlane.f32.xlu0 %v786
      %v788 = vpop.xlane.xlu0 %787
      %v789 = vmax.f32 %v788, %v785
      %v790 = vsub.f32 %v778, %v789
      %v791 = vmul.f32 %v790, 1.442695
      %v792 = vpow.pop %v791
      %v793 = vsub.f32 %v785, %v789
      %v794 = vmul.f32 %v793, 1.442695
      %v795 = vpow.pop %v794
      %v796 = vsel %vm266, %v792, 0.0
      %797 = vadd.xlane.f32.xlu0 %v796
      %v798 = vpop.xlane.xlu0 %797
      %v799 = vadd.f32 %v798, %v795
      %v800 = vpack.c.bf16 %v792, %v792
      %v801 = vmul.f32 %v795, %v255
      %802 = vrot.lane.b32.xlu0 %v199, 48
      %v803 = vpop.permute.xlu0 %802
      %805 = vrot.lane.b32.xlu0 %v801, 48
      %v806 = vpop.permute.xlu0 %805
      %v809 = vsel %vm289, %v800, 0
      %v812 = vsel %vm293, %v803, 0
      %814 = vmatprep.subr.bf16.mxu0 0
      %815 = vmatpush1.bf16.msra.mxu0 %v812
      %816 = vmatprep.subr.bf16.mxu0 0
      %817 = vmatpush1.bf16.msra.mxu0 0
      %818 = vmatprep.subr.bf16.mxu0 0
      %819 = vmatpush1.bf16.msra.mxu0 0
      %820 = vmatprep.subr.bf16.mxu0 0
      %821 = vmatpush1.bf16.msra.mxu0 0
      %822 = vmatprep.subr.bf16.mxu0 0
      %823 = vmatpush1.bf16.msra.mxu0 0
      %824 = vmatprep.subr.bf16.mxu0 0
      %825 = vmatpush1.bf16.msra.mxu0 0
      %826 = vmatprep.subr.bf16.mxu0 0
      %827 = vmatpush1.bf16.msra.mxu0 0
      %828 = vmatprep.subr.bf16.mxu0 0
      %829 = vmatpush1.bf16.msra.mxu0 0
      %830 = vmatprep.subr.bf16.mxu0 0
      %831 = vmatpush1.bf16.msra.mxu0 0
      %832 = vmatprep.subr.bf16.mxu0 0
      %833 = vmatpush1.bf16.msra.mxu0 0
      %834 = vmatprep.subr.bf16.mxu0 0
      %835 = vmatpush1.bf16.msra.mxu0 0
      %836 = vmatprep.subr.bf16.mxu0 0
      %837 = vmatpush1.bf16.msra.mxu0 0
      %838 = vmatprep.subr.bf16.mxu0 0
      %839 = vmatpush1.bf16.msra.mxu0 0
      %840 = vmatprep.subr.bf16.mxu0 0
      %841 = vmatpush1.bf16.msra.mxu0 0
      %842 = vmatprep.subr.bf16.mxu0 0
      %843 = vmatpush1.bf16.msra.mxu0 0
      %844 = vmatprep.subr.bf16.mxu0 0
      %845 = vmatpush1.bf16.msra.mxu0 0
      %846 = vmatprep.mubr.bf16.mxu0 0
      %847 = vmatmul.mubr.bf16.gmra.mrb[0].mxu0 %v809
      %v848 = vpop.f32.mrb[0].mxu0
      %v849 = vadd.f32 %v806, %v848
      %v850 = vpop.f32.mrb[0].mxu0
      %v851 = vpop.f32.mrb[0].mxu0
      %v852 = vpop.f32.mrb[0].mxu0
      %853 = vdwg.mxu0
      %v854 = vrcp.pop %v799
      %v855 = vmul.f32 %v849, %v854
      %856 = vrot.lane.b32.xlu0 %v605, 112
      %v857 = vpop.permute.xlu0 %856
      %v859 = vsel %vm202, %v857, 0
      %861 = vmatprep.subr.bf16.mxu0 0
      %862 = vmatpush1.bf16.xpose.msra.mxu0 %v736
      %863 = vmatprep.subr.bf16.mxu0 0
      %864 = vmatpush1.bf16.xpose.msra.mxu0 0
      %865 = vmatprep.subr.bf16.mxu0 0
      %866 = vmatpush1.bf16.xpose.msra.mxu0 0
      %867 = vmatprep.subr.bf16.mxu0 0
      %868 = vmatpush1.bf16.xpose.msra.mxu0 0
      %869 = vmatprep.subr.bf16.mxu0 0
      %870 = vmatpush1.bf16.xpose.msra.mxu0 0
      %871 = vmatprep.subr.bf16.mxu0 0
      %872 = vmatpush1.bf16.xpose.msra.mxu0 0
      %873 = vmatprep.subr.bf16.mxu0 0
      %874 = vmatpush1.bf16.xpose.msra.mxu0 0
      %875 = vmatprep.subr.bf16.mxu0 0
      %876 = vmatpush1.bf16.xpose.msra.mxu0 0
      %877 = vmatprep.subr.bf16.mxu0 0
      %878 = vmatpush1.bf16.xpose.msra.mxu0 0
      %879 = vmatprep.subr.bf16.mxu0 0
      %880 = vmatpush1.bf16.xpose.msra.mxu0 0
      %881 = vmatprep.subr.bf16.mxu0 0
      %882 = vmatpush1.bf16.xpose.msra.mxu0 0
      %883 = vmatprep.subr.bf16.mxu0 0
      %884 = vmatpush1.bf16.xpose.msra.mxu0 0
      %885 = vmatprep.subr.bf16.mxu0 0
      %886 = vmatpush1.bf16.xpose.msra.mxu0 0
      %887 = vmatprep.subr.bf16.mxu0 0
      %888 = vmatpush1.bf16.xpose.msra.mxu0 0
      %889 = vmatprep.subr.bf16.mxu0 0
      %890 = vmatpush1.bf16.xpose.msra.mxu0 0
      %891 = vmatprep.subr.bf16.mxu0 0
      %892 = vmatpush1.bf16.xpose.msra.mxu0 0
      %893 = vmatprep.mubr.bf16.mxu0 0
      %894 = vmatmul.mubr.bf16.gmra.mrb[0].mxu0 %v859
      %v895 = vpop.f32.mrb[0].mxu0
      %v896 = vadd.f32 0.0, %v895
      %v897 = vpop.f32.mrb[0].mxu0
      %v898 = vpop.f32.mrb[0].mxu0
      %v899 = vpop.f32.mrb[0].mxu0
      %900 = vdwg.mxu0
      %v901 = vmul.f32 %v896, 0.35355338
      %902 = vrot.lane.b32.xlu0 %v656, 112
      %v903 = vpop.permute.xlu0 %902
      %v905 = vsel %vm388, %v903, 0.0
      %906 = vadd.xlane.f32.xlu0 %v905
      %v907 = vpop.xlane.xlu0 %906
      %v908 = vmul.f32 %v907, 0.35355338
      %v909 = vsel %vm393, %v901, -inf
      %910 = vmax.xlane.f32.xlu0 %v909
      %v911 = vpop.xlane.xlu0 %910
      %v912 = vmax.f32 %v911, %v908
      %v913 = vsub.f32 %v901, %v912
      %v914 = vmul.f32 %v913, 1.442695
      %v915 = vpow.pop %v914
      %v916 = vsub.f32 %v908, %v912
      %v917 = vmul.f32 %v916, 1.442695
      %v918 = vpow.pop %v917
      %v919 = vsel %vm393, %v915, 0.0
      %920 = vadd.xlane.f32.xlu0 %v919
      %v921 = vpop.xlane.xlu0 %920
      %v922 = vadd.f32 %v921, %v918
      %v923 = vpack.c.bf16 %v915, %v915
      %924 = vrot.lane.b32.xlu0 %v412, 48
      %v925 = vpop.permute.xlu0 %924
      %v927 = vmul.f32 %v918, %v925
      %v929 = vsel %vm289, %v923, 0
      %931 = vmatprep.subr.bf16.mxu0 0
      %932 = vmatpush1.bf16.msra.mxu0 %v812
      %933 = vmatprep.subr.bf16.mxu0 0
      %934 = vmatpush1.bf16.msra.mxu0 0
      %935 = vmatprep.subr.bf16.mxu0 0
      %936 = vmatpush1.bf16.msra.mxu0 0
      %937 = vmatprep.subr.bf16.mxu0 0
      %938 = vmatpush1.bf16.msra.mxu0 0
      %939 = vmatprep.subr.bf16.mxu0 0
      %940 = vmatpush1.bf16.msra.mxu0 0
      %941 = vmatprep.subr.bf16.mxu0 0
      %942 = vmatpush1.bf16.msra.mxu0 0
      %943 = vmatprep.subr.bf16.mxu0 0
      %944 = vmatpush1.bf16.msra.mxu0 0
      %945 = vmatprep.subr.bf16.mxu0 0
      %946 = vmatpush1.bf16.msra.mxu0 0
      %947 = vmatprep.subr.bf16.mxu0 0
      %948 = vmatpush1.bf16.msra.mxu0 0
      %949 = vmatprep.subr.bf16.mxu0 0
      %950 = vmatpush1.bf16.msra.mxu0 0
      %951 = vmatprep.subr.bf16.mxu0 0
      %952 = vmatpush1.bf16.msra.mxu0 0
      %953 = vmatprep.subr.bf16.mxu0 0
      %954 = vmatpush1.bf16.msra.mxu0 0
      %955 = vmatprep.subr.bf16.mxu0 0
      %956 = vmatpush1.bf16.msra.mxu0 0
      %957 = vmatprep.subr.bf16.mxu0 0
      %958 = vmatpush1.bf16.msra.mxu0 0
      %959 = vmatprep.subr.bf16.mxu0 0
      %960 = vmatpush1.bf16.msra.mxu0 0
      %961 = vmatprep.subr.bf16.mxu0 0
      %962 = vmatpush1.bf16.msra.mxu0 0
      %963 = vmatprep.mubr.bf16.mxu0 0
      %964 = vmatmul.mubr.bf16.gmra.mrb[0].mxu0 %v929
      %v965 = vpop.f32.mrb[0].mxu0
      %v966 = vadd.f32 %v927, %v965
      %v967 = vpop.f32.mrb[0].mxu0
      %v968 = vpop.f32.mrb[0].mxu0
      %v969 = vpop.f32.mrb[0].mxu0
      %970 = vdwg.mxu0
      %v971 = vrcp.pop %v922
      %v972 = vmul.f32 %v966, %v971
      %973 = vrot.lane.b32.xlu0 %v199, 104
      %v974 = vpop.permute.xlu0 %973
      %975 = vrot.lane.b32.xlu0 %v199, 72
      %v976 = vpop.permute.xlu0 %975
      %v978 = vsel %vm202, %v974, 0
      %v981 = vsel %vm202, %v976, 0
      %983 = vmatprep.subr.bf16.mxu0 0
      %984 = vmatpush1.bf16.xpose.msra.mxu0 %v981
      %985 = vmatprep.subr.bf16.mxu0 0
      %986 = vmatpush1.bf16.xpose.msra.mxu0 0
      %987 = vmatprep.subr.bf16.mxu0 0
      %988 = vmatpush1.bf16.xpose.msra.mxu0 0
      %989 = vmatprep.subr.bf16.mxu0 0
      %990 = vmatpush1.bf16.xpose.msra.mxu0 0
      %991 = vmatprep.subr.bf16.mxu0 0
      %992 = vmatpush1.bf16.xpose.msra.mxu0 0
      %993 = vmatprep.subr.bf16.mxu0 0
      %994 = vmatpush1.bf16.xpose.msra.mxu0 0
      %995 = vmatprep.subr.bf16.mxu0 0
      %996 = vmatpush1.bf16.xpose.msra.mxu0 0
      %997 = vmatprep.subr.bf16.mxu0 0
      %998 = vmatpush1.bf16.xpose.msra.mxu0 0
      %999 = vmatprep.subr.bf16.mxu0 0
      %1000 = vmatpush1.bf16.xpose.msra.mxu0 0
      %1001 = vmatprep.subr.bf16.mxu0 0
      %1002 = vmatpush1.bf16.xpose.msra.mxu0 0
      %1003 = vmatprep.subr.bf16.mxu0 0
      %1004 = vmatpush1.bf16.xpose.msra.mxu0 0
      %1005 = vmatprep.subr.bf16.mxu0 0
      %1006 = vmatpush1.bf16.xpose.msra.mxu0 0
      %1007 = vmatprep.subr.bf16.mxu0 0
      %1008 = vmatpush1.bf16.xpose.msra.mxu0 0
      %1009 = vmatprep.subr.bf16.mxu0 0
      %1010 = vmatpush1.bf16.xpose.msra.mxu0 0
      %1011 = vmatprep.subr.bf16.mxu0 0
      %1012 = vmatpush1.bf16.xpose.msra.mxu0 0
      %1013 = vmatprep.subr.bf16.mxu0 0
      %1014 = vmatpush1.bf16.xpose.msra.mxu0 0
      %1015 = vmatprep.mubr.bf16.mxu0 0
      %1016 = vmatmul.mubr.bf16.gmra.mrb[0].mxu0 %v978
      %v1017 = vpop.f32.mrb[0].mxu0
      %v1018 = vadd.f32 0.0, %v1017
      %v1019 = vpop.f32.mrb[0].mxu0
      %v1020 = vpop.f32.mrb[0].mxu0
      %v1021 = vpop.f32.mrb[0].mxu0
      %1022 = vdwg.mxu0
      %v1023 = vmul.f32 %v1018, 0.35355338
      %1024 = vrot.lane.b32.xlu0 %v260, 104
      %v1025 = vpop.permute.xlu0 %1024
      %v1027 = vsel %vm261, %v1025, 0.0
      %1028 = vadd.xlane.f32.xlu0 %v1027
      %v1029 = vpop.xlane.xlu0 %1028
      %v1030 = vmul.f32 %v1029, 0.35355338
      %v1031 = vsel %vm266, %v1023, -inf
      %1032 = vmax.xlane.f32.xlu0 %v1031
      %v1033 = vpop.xlane.xlu0 %1032
      %v1034 = vmax.f32 %v1033, %v1030
      %v1035 = vsub.f32 %v1023, %v1034
      %v1036 = vmul.f32 %v1035, 1.442695
      %v1037 = vpow.pop %v1036
      %v1038 = vsub.f32 %v1030, %v1034
      %v1039 = vmul.f32 %v1038, 1.442695
      %v1040 = vpow.pop %v1039
      %v1041 = vsel %vm266, %v1037, 0.0
      %1042 = vadd.xlane.f32.xlu0 %v1041
      %v1043 = vpop.xlane.xlu0 %1042
      %v1044 = vadd.f32 %v1043, %v1040
      %v1045 = vpack.c.bf16 %v1037, %v1037
      %v1046 = vmul.f32 %v1040, %v255
      %1047 = vrot.lane.b32.xlu0 %v199, 40
      %v1048 = vpop.permute.xlu0 %1047
      %1050 = vrot.lane.b32.xlu0 %v1046, 40
      %v1051 = vpop.permute.xlu0 %1050
      %v1054 = vsel %vm289, %v1045, 0
      %v1057 = vsel %vm293, %v1048, 0
      %1059 = vmatprep.subr.bf16.mxu0 0
      %1060 = vmatpush1.bf16.msra.mxu0 %v1057
      %1061 = vmatprep.subr.bf16.mxu0 0
      %1062 = vmatpush1.bf16.msra.mxu0 0
      %1063 = vmatprep.subr.bf16.mxu0 0
      %1064 = vmatpush1.bf16.msra.mxu0 0
      %1065 = vmatprep.subr.bf16.mxu0 0
      %1066 = vmatpush1.bf16.msra.mxu0 0
      %1067 = vmatprep.subr.bf16.mxu0 0
      %1068 = vmatpush1.bf16.msra.mxu0 0
      %1069 = vmatprep.subr.bf16.mxu0 0
      %1070 = vmatpush1.bf16.msra.mxu0 0
      %1071 = vmatprep.subr.bf16.mxu0 0
      %1072 = vmatpush1.bf16.msra.mxu0 0
      %1073 = vmatprep.subr.bf16.mxu0 0
      %1074 = vmatpush1.bf16.msra.mxu0 0
      %1075 = vmatprep.subr.bf16.mxu0 0
      %1076 = vmatpush1.bf16.msra.mxu0 0
      %1077 = vmatprep.subr.bf16.mxu0 0
      %1078 = vmatpush1.bf16.msra.mxu0 0
      %1079 = vmatprep.subr.bf16.mxu0 0
      %1080 = vmatpush1.bf16.msra.mxu0 0
      %1081 = vmatprep.subr.bf16.mxu0 0
      %1082 = vmatpush1.bf16.msra.mxu0 0
      %1083 = vmatprep.subr.bf16.mxu0 0
      %1084 = vmatpush1.bf16.msra.mxu0 0
      %1085 = vmatprep.subr.bf16.mxu0 0
      %1086 = vmatpush1.bf16.msra.mxu0 0
      %1087 = vmatprep.subr.bf16.mxu0 0
      %1088 = vmatpush1.bf16.msra.mxu0 0
      %1089 = vmatprep.subr.bf16.mxu0 0
      %1090 = vmatpush1.bf16.msra.mxu0 0
      %1091 = vmatprep.mubr.bf16.mxu0 0
      %1092 = vmatmul.mubr.bf16.gmra.mrb[0].mxu0 %v1054
      %v1093 = vpop.f32.mrb[0].mxu0
      %v1094 = vadd.f32 %v1051, %v1093
      %v1095 = vpop.f32.mrb[0].mxu0
      %v1096 = vpop.f32.mrb[0].mxu0
      %v1097 = vpop.f32.mrb[0].mxu0
      %1098 = vdwg.mxu0
      %v1099 = vrcp.pop %v1044
      %v1100 = vmul.f32 %v1094, %v1099
      %1101 = vrot.lane.b32.xlu0 %v605, 104
      %v1102 = vpop.permute.xlu0 %1101
      %v1104 = vsel %vm202, %v1102, 0
      %1106 = vmatprep.subr.bf16.mxu0 0
      %1107 = vmatpush1.bf16.xpose.msra.mxu0 %v981
      %1108 = vmatprep.subr.bf16.mxu0 0
      %1109 = vmatpush1.bf16.xpose.msra.mxu0 0
      %1110 = vmatprep.subr.bf16.mxu0 0
      %1111 = vmatpush1.bf16.xpose.msra.mxu0 0
      %1112 = vmatprep.subr.bf16.mxu0 0
      %1113 = vmatpush1.bf16.xpose.msra.mxu0 0
      %1114 = vmatprep.subr.bf16.mxu0 0
      %1115 = vmatpush1.bf16.xpose.msra.mxu0 0
      %1116 = vmatprep.subr.bf16.mxu0 0
      %1117 = vmatpush1.bf16.xpose.msra.mxu0 0
      %1118 = vmatprep.subr.bf16.mxu0 0
      %1119 = vmatpush1.bf16.xpose.msra.mxu0 0
      %1120 = vmatprep.subr.bf16.mxu0 0
      %1121 = vmatpush1.bf16.xpose.msra.mxu0 0
      %1122 = vmatprep.subr.bf16.mxu0 0
      %1123 = vmatpush1.bf16.xpose.msra.mxu0 0
      %1124 = vmatprep.subr.bf16.mxu0 0
      %1125 = vmatpush1.bf16.xpose.msra.mxu0 0
      %1126 = vmatprep.subr.bf16.mxu0 0
      %1127 = vmatpush1.bf16.xpose.msra.mxu0 0
      %1128 = vmatprep.subr.bf16.mxu0 0
      %1129 = vmatpush1.bf16.xpose.msra.mxu0 0
      %1130 = vmatprep.subr.bf16.mxu0 0
      %1131 = vmatpush1.bf16.xpose.msra.mxu0 0
      %1132 = vmatprep.subr.bf16.mxu0 0
      %1133 = vmatpush1.bf16.xpose.msra.mxu0 0
      %1134 = vmatprep.subr.bf16.mxu0 0
      %1135 = vmatpush1.bf16.xpose.msra.mxu0 0
      %1136 = vmatprep.subr.bf16.mxu0 0
      %1137 = vmatpush1.bf16.xpose.msra.mxu0 0
      %1138 = vmatprep.mubr.bf16.mxu0 0
      %1139 = vmatmul.mubr.bf16.gmra.mrb[0].mxu0 %v1104
      %v1140 = vpop.f32.mrb[0].mxu0
      %v1141 = vadd.f32 0.0, %v1140
      %v1142 = vpop.f32.mrb[0].mxu0
      %v1143 = vpop.f32.mrb[0].mxu0
      %v1144 = vpop.f32.mrb[0].mxu0
      %1145 = vdwg.mxu0
      %v1146 = vmul.f32 %v1141, 0.35355338
      %1147 = vrot.lane.b32.xlu0 %v656, 104
      %v1148 = vpop.permute.xlu0 %1147
      %v1150 = vsel %vm388, %v1148, 0.0
      %1151 = vadd.xlane.f32.xlu0 %v1150
      %v1152 = vpop.xlane.xlu0 %1151
      %v1153 = vmul.f32 %v1152, 0.35355338
      %v1154 = vsel %vm393, %v1146, -inf
      %1155 = vmax.xlane.f32.xlu0 %v1154
      %v1156 = vpop.xlane.xlu0 %1155
      %v1157 = vmax.f32 %v1156, %v1153
      %v1158 = vsub.f32 %v1146, %v1157
      %v1159 = vmul.f32 %v1158, 1.442695
      %v1160 = vpow.pop %v1159
      %v1161 = vsub.f32 %v1153, %v1157
      %v1162 = vmul.f32 %v1161, 1.442695
      %v1163 = vpow.pop %v1162
      %v1164 = vsel %vm393, %v1160, 0.0
      %1165 = vadd.xlane.f32.xlu0 %v1164
      %v1166 = vpop.xlane.xlu0 %1165
      %v1167 = vadd.f32 %v1166, %v1163
      %v1168 = vpack.c.bf16 %v1160, %v1160
      %1169 = vrot.lane.b32.xlu0 %v412, 40
      %v1170 = vpop.permute.xlu0 %1169
      %v1172 = vmul.f32 %v1163, %v1170
      %v1174 = vsel %vm289, %v1168, 0
      %1176 = vmatprep.subr.bf16.mxu0 0
      %1177 = vmatpush1.bf16.msra.mxu0 %v1057
      %1178 = vmatprep.subr.bf16.mxu0 0
      %1179 = vmatpush1.bf16.msra.mxu0 0
      %1180 = vmatprep.subr.bf16.mxu0 0
      %1181 = vmatpush1.bf16.msra.mxu0 0
      %1182 = vmatprep.subr.bf16.mxu0 0
      %1183 = vmatpush1.bf16.msra.mxu0 0
      %1184 = vmatprep.subr.bf16.mxu0 0
      %1185 = vmatpush1.bf16.msra.mxu0 0
      %1186 = vmatprep.subr.bf16.mxu0 0
      %1187 = vmatpush1.bf16.msra.mxu0 0
      %1188 = vmatprep.subr.bf16.mxu0 0
      %1189 = vmatpush1.bf16.msra.mxu0 0
      %1190 = vmatprep.subr.bf16.mxu0 0
      %1191 = vmatpush1.bf16.msra.mxu0 0
      %1192 = vmatprep.subr.bf16.mxu0 0
      %1193 = vmatpush1.bf16.msra.mxu0 0
      %1194 = vmatprep.subr.bf16.mxu0 0
      %1195 = vmatpush1.bf16.msra.mxu0 0
      %1196 = vmatprep.subr.bf16.mxu0 0
      %1197 = vmatpush1.bf16.msra.mxu0 0
      %1198 = vmatprep.subr.bf16.mxu0 0
      %1199 = vmatpush1.bf16.msra.mxu0 0
      %1200 = vmatprep.subr.bf16.mxu0 0
      %1201 = vmatpush1.bf16.msra.mxu0 0
      %1202 = vmatprep.subr.bf16.mxu0 0
      %1203 = vmatpush1.bf16.msra.mxu0 0
      %1204 = vmatprep.subr.bf16.mxu0 0
      %1205 = vmatpush1.bf16.msra.mxu0 0
      %1206 = vmatprep.subr.bf16.mxu0 0
      %1207 = vmatpush1.bf16.msra.mxu0 0
      %1208 = vmatprep.mubr.bf16.mxu0 0
      %1209 = vmatmul.mubr.bf16.gmra.mrb[0].mxu0 %v1174
      %v1210 = vpop.f32.mrb[0].mxu0
      %v1211 = vadd.f32 %v1172, %v1210
      %v1212 = vpop.f32.mrb[0].mxu0
      %v1213 = vpop.f32.mrb[0].mxu0
      %v1214 = vpop.f32.mrb[0].mxu0
      %1215 = vdwg.mxu0
      %v1216 = vrcp.pop %v1167
      %v1217 = vmul.f32 %v1211, %v1216
      %1219 = vrot.lane.b32.xlu0 %v590, 8
      %v1220 = vpop.permute.xlu0 %1219
      %1223 = vrot.lane.b32.xlu0 %v855, 16
      %v1224 = vpop.permute.xlu0 %1223
      %1227 = vrot.lane.b32.xlu0 %v1100, 24
      %v1228 = vpop.permute.xlu0 %1227
      %v1230 = vsel %vm202, %v338, %v1220
      %vm1231 = vcmask 130048
      %v1232 = vsel %vm1231, %v1230, %v1224
      %vm1233 = vcmask 195584
      %v1234 = vsel %vm1233, %v1232, %v1228
      %1236 = vrot.lane.b32.xlu0 %v727, 8
      %v1237 = vpop.permute.xlu0 %1236
      %1240 = vrot.lane.b32.xlu0 %v972, 16
      %v1241 = vpop.permute.xlu0 %1240
      %1244 = vrot.lane.b32.xlu0 %v1217, 24
      %v1245 = vpop.permute.xlu0 %1244
      %v1247 = vsel %vm202, %v461, %v1237
      %v1248 = vsel %vm1231, %v1247, %v1241
      %v1249 = vsel %vm1233, %v1248, %v1245
      %v1250 = vpack.c.bf16 %v1234, %v1234
      %vm1251 = vcmask 254976
      %1252 = vst.msk [vmem:[%s185] sm:$0x3] %vm1251, %v1250
      %v1253 = vpack.c.bf16 %v1249, %v1249
      %vm1254 = vcmask 253952
      %vm1255 = vsmask.f32 256
      %vm1256 = vmand %vm1254, %vm1255
      %v1257 = vld [vmem:[%s188] sm:$0x1]
      %v1258 = vsel %vm1256, %v1253, %v1257
      %1259 = vst [vmem:[%s188] sm:$0x1] %v1258
      %p1260 = scmp.lt.s32.totalorder %s15, 3
      %s1261 = scalar_select %p1260, %s15, 3
      %s1262 = smul.addr %s1261, 2
      %s1263 = scalar_lea.vmem %s2, %s1262
      %p1264 = scmp.lt.s32.totalorder %s15, 3
      %s1265 = scalar_select %p1264, %s15, 3
      %s1266 = scalar_lea.vmem %s3, %s1265
      // Predicated region
      $region29: #{block_forward.16} parent=27 // pred_check
        %p1267 = pneg %p85
      $region30: #{block_forward.16} parent=27 // pred_check_branch
        %1269 = sbr.rel (%p1267) target = $region32
      $region31: #{block_forward.16} parent=27 // pred_region
        _
      $region32: #{block_forward.16} parent=27 // pred_fallthru
        _
      // Predicated region
      $region33: #{block_forward.16} parent=27 // pred_check
        %p1270 = pneg %p111
      $region34: #{block_forward.16} parent=27 // pred_check_branch
        %1272 = sbr.rel (%p1270) target = $region36
      $region35: #{block_forward.16} parent=27 // pred_region
        _
      $region36: #{block_forward.16} parent=27 // pred_fallthru
        _
    $region28: #{block_forward.16} parent=5 // pred_fallthru
      _
    %p1273 = scmp.le.s32.totalorder 2, %s10
    // Predicated region
    $region37: #{block_forward.16} parent=5 // pred_check
      %p1274 = pneg %p1273
    $region38: #{block_forward.16} parent=5 // pred_check_branch
      %1276 = sbr.rel (%p1274) target = $region40
    $region39: #{block_forward.16} parent=5 // pred_region
      %s1277 = ssub.s32 %s10, 2
      // Predicated region
      $region41: #{block_forward.16} parent=39 // pred_check
        %p1278 = pneg %p91
      $region42: #{block_forward.16} parent=39 // pred_check_branch
        %1280 = sbr.rel (%p1278) target = $region44
      $region43: #{block_forward.16} parent=39 // pred_region
        %p1281 = scmp.lt.s32.totalorder %s16, 3
        %s1282 = scalar_select %p1281, %s16, 3
        %s1283 = smul.addr %s1282, 2
        %s1284 = scalar_lea.vmem %s2, %s1283
      $region44: #{block_forward.16} parent=39 // pred_fallthru
        _
      // Predicated region
      $region45: #{block_forward.16} parent=39 // pred_check
        %p1285 = pneg %p117
      $region46: #{block_forward.16} parent=39 // pred_check_branch
        %1287 = sbr.rel (%p1285) target = $region48
      $region47: #{block_forward.16} parent=39 // pred_region
        %p1288 = scmp.lt.s32.totalorder %s16, 3
        %s1289 = scalar_select %p1288, %s16, 3
        %s1290 = scalar_lea.vmem %s3, %s1289
      $region48: #{block_forward.16} parent=39 // pred_fallthru
        _
    $region40: #{block_forward.16} parent=5 // pred_fallthru
      _
  $region6: #{block_forward.16} parent=0 // loop_footer
    %s14 = sadd.s32 1, %s10
  $region7: #{block_forward.16} parent=0 // loop_footer_branch
    %9 = sbr.rel target = $region3
  $region8: #{block_forward.16} parent=0 // loop_exit
    _

// kernel: block_forward.19
$region0: #{block_forward.19}
  #allocation0 [shape = 'u32[]', space=smem, size = 0x4, offset = 0x4, fixed_abs, tag = 'smem constant byte address 0x4 - core index']
  #allocation1 [shape = 'u32[144,128]{1,0:T(1,128)}', space=vmem, size = 0x12000, scoped, tag = 'internal scratch']
  #allocation2 [shape = 'bf16[18,32]{1,0:T(8,128)(2,1)}', space=vmem, size = 0x1800, scoped, tag = 'scratch operand']
  #allocation3 [shape = 'f32[18,32]{1,0:T(8,128)}', space=vmem, size = 0x3000, scoped, tag = 'scratch operand']
  %s0 = inlined_call_operand.vmem [shape: f32[18,32], index: 0, kind: input, shape index: {}]
  %s1 = inlined_call_operand.vmem [shape: f32[1,32], index: 1, kind: input, shape index: {}]
  %s2 = inlined_call_operand.vmem [shape: f32[1,32], index: 2, kind: input, shape index: {}]
  %s3 = inlined_call_operand.vmem [shape: bf16[32,128], index: 3, kind: input, shape index: {}]
  %s4 = inlined_call_operand.vmem [shape: f32[1,128], index: 4, kind: input, shape index: {}]
  %s5 = inlined_call_operand.vmem [shape: bf16[128,32], index: 5, kind: input, shape index: {}]
  %s6 = inlined_call_operand.vmem [shape: f32[1,32], index: 6, kind: input, shape index: {}]
  %s7 = inlined_call_operand.vmem [shape: f32[18,32], index: 7, kind: output, shape index: {}]
  %s8 = sld [smem:[#allocation0]]
  $region46: #{block_forward.19} parent=0
    _
  %s10 = ssub.s32 1, %s8
  %s11 = scalar_select 0, %s10, %s8
  // Predicated region
  $region2: #{block_forward.19} parent=0 // pred_check
    _
  $region3: #{block_forward.19} parent=0 // pred_check_branch
    %13 = sbr.rel (0) target = $region5
  $region4: #{block_forward.19} parent=0 // pred_region
    _
  $region5: #{block_forward.19} parent=0 // pred_fallthru
    _
  // Predicated region
  $region6: #{block_forward.19} parent=0 // pred_check
    _
  $region7: #{block_forward.19} parent=0 // pred_check_branch
    %15 = sbr.rel (0) target = $region9
  $region8: #{block_forward.19} parent=0 // pred_region
    _
  $region9: #{block_forward.19} parent=0 // pred_fallthru
    _
  // Predicated region
  $region10: #{block_forward.19} parent=0 // pred_check
    _
  $region11: #{block_forward.19} parent=0 // pred_check_branch
    %17 = sbr.rel (0) target = $region13
  $region12: #{block_forward.19} parent=0 // pred_region
    _
  $region13: #{block_forward.19} parent=0 // pred_fallthru
    _
  // Predicated region
  $region14: #{block_forward.19} parent=0 // pred_check
    _
  $region15: #{block_forward.19} parent=0 // pred_check_branch
    %19 = sbr.rel (0) target = $region17
  $region16: #{block_forward.19} parent=0 // pred_region
    _
  $region17: #{block_forward.19} parent=0 // pred_fallthru
    _
  // Predicated region
  $region18: #{block_forward.19} parent=0 // pred_check
    _
  $region19: #{block_forward.19} parent=0 // pred_check_branch
    %21 = sbr.rel (0) target = $region21
  $region20: #{block_forward.19} parent=0 // pred_region
    _
  $region21: #{block_forward.19} parent=0 // pred_fallthru
    _
  // Predicated region
  $region22: #{block_forward.19} parent=0 // pred_check
    _
  $region23: #{block_forward.19} parent=0 // pred_check_branch
    %23 = sbr.rel (0) target = $region25
  $region24: #{block_forward.19} parent=0 // pred_region
    _
  $region25: #{block_forward.19} parent=0 // pred_fallthru
    _
  // Predicated region
  $region26: #{block_forward.19} parent=0 // pred_check
    _
  $region27: #{block_forward.19} parent=0 // pred_check_branch
    %25 = sbr.rel (0) target = $region29
  $region28: #{block_forward.19} parent=0 // pred_region
    _
  $region29: #{block_forward.19} parent=0 // pred_fallthru
    _
  %p27 = scmp.eq.s32.totalorder 0, 0
  // Predicated region
  $region30: #{block_forward.19} parent=0 // pred_check
    %p28 = pneg %p27
  $region31: #{block_forward.19} parent=0 // pred_check_branch
    %30 = sbr.rel (%p28) target = $region33
  $region32: #{block_forward.19} parent=0 // pred_region
    %v31 = vld [vmem:[%s0] sm:$0xff]
    %v32 = vld [vmem:[%s0 + $0x8] sm:$0xff]
    %v33 = vld [vmem:[%s0 + $0x10] sm:$0x3]
    %vm34 = vcmask 261120
    %v35 = vsel %vm34, %v31, 0.0
    %36 = vadd.xlane.f32.xlu0 %v35
    %v37 = vpop.xlane.xlu0 %36
    %v38 = vsel %vm34, %v32, 0.0
    %39 = vadd.xlane.f32.xlu0 %v38
    %v40 = vpop.xlane.xlu0 %39
    %vm41 = vcmask 254976
    %v42 = vsel %vm41, %v33, 0.0
    %43 = vadd.xlane.f32.xlu0 %v42
    %v44 = vpop.xlane.xlu0 %43
    %v45 = vrcp.pop 32.0
    %v46 = vmul.f32 %v37, %v45
    %v47 = vmul.f32 %v40, %v45
    %v48 = vmul.f32 %v44, %v45
    %v49 = vsub.f32 %v31, %v46
    %v50 = vsub.f32 %v32, %v47
    %v51 = vsub.f32 %v33, %v48
    %v52 = vmul.f32 %v49, %v49
    %v53 = vmul.f32 %v50, %v50
    %v54 = vmul.f32 %v51, %v51
    %v55 = vsel %vm34, %v52, 0.0
    %56 = vadd.xlane.f32.xlu0 %v55
    %v57 = vpop.xlane.xlu0 %56
    %v58 = vsel %vm34, %v53, 0.0
    %59 = vadd.xlane.f32.xlu0 %v58
    %v60 = vpop.xlane.xlu0 %59
    %v61 = vsel %vm41, %v54, 0.0
    %62 = vadd.xlane.f32.xlu0 %v61
    %v63 = vpop.xlane.xlu0 %62
    %v64 = vmul.f32 %v57, %v45
    %v65 = vmul.f32 %v60, %v45
    %v66 = vmul.f32 %v63, %v45
    %v67 = vadd.f32 %v64, 1e-05
    %v68 = vadd.f32 %v65, 1e-05
    %v69 = vadd.f32 %v66, 1e-05
    %v70 = vrsqrt.pop %v67
    %v71 = vrsqrt.pop %v68
    %v72 = vrsqrt.pop %v69
    %v73 = vmul.f32 %v49, %v70
    %v74 = vmul.f32 %v50, %v71
    %v75 = vmul.f32 %v51, %v72
    %v76 = vld [vmem:[%s1] sm:$0x1]
    %v78 = vlaneseq
    %v79 = vshrl.u32 %v78, 7
    %v80 = vsub.s32 0, %v79
    %v81 = vrot.slane %v76, %v80
    %v83 = vmul.f32 %v73, %v81
    %v84 = vmul.f32 %v74, %v81
    %v85 = vmul.f32 %v75, %v81
    %v86 = vld [vmem:[%s2] sm:$0x1]
    %v88 = vlaneseq
    %v89 = vshrl.u32 %v88, 7
    %v90 = vsub.s32 0, %v89
    %v91 = vrot.slane %v86, %v90
    %v93 = vadd.f32 %v83, %v91
    %v94 = vadd.f32 %v84, %v91
    %v95 = vadd.f32 %v85, %v91
    %v96 = vpack.c.bf16 %v94, %v93
    %v97 = vpack.c.bf16 %v95, %v95
    %v100 = vunpack.c.l.b16 %v96
    %v101 = vunpack.c.h.b16 %v96
    %v102 = vunpack.c.l.b16 %v97
    %v103 = vpack.c.b16 %v100, %v100
    %v104 = vpack.c.b16 %v101, %v101
    %v105 = vpack.c.b16 %v102, %v102
    %vm109 = vcmask 257024
    %110 = vst.msk [vmem:[#allocation2] sm:$0xf] %vm109, %v103
    %111 = vst.msk [vmem:[#allocation2 + $0x4] sm:$0xf] %vm109, %v104
    %vm112 = vcmask 253952
    %113 = vst.msk [vmem:[#allocation2 + $0x8] sm:$0x1] %vm112, %v105
    %114 = vst.msk [vmem:[#allocation3] sm:$0xff] %vm34, 0.0
    %115 = vst.msk [vmem:[#allocation3 + $0x8] sm:$0xff] %vm34, 0.0
    %116 = vst.msk [vmem:[#allocation3 + $0x10] sm:$0x3] %vm41, 0.0
  $region33: #{block_forward.19} parent=0 // pred_fallthru
    _
  %v117 = vld [vmem:[#allocation2] sm:$0xf]
  %v118 = vld [vmem:[#allocation2 + $0x4] sm:$0xf]
  %v119 = vld [vmem:[#allocation2 + $0x8] sm:$0x1]
  %v120 = vld [vmem:[%s3] sm:$0xf]
  %v121 = vld [vmem:[%s3 + $0x4] sm:$0xf]
  %v122 = vld [vmem:[%s3 + $0x8] sm:$0xf]
  %v123 = vld [vmem:[%s3 + $0xc] sm:$0xf]
  %v124 = vld [vmem:[%s4] sm:$0x1]
  %v126 = vlaneseq
  %v127 = vshrl.u32 %v126, 7
  %v128 = vsub.s32 0, %v127
  %v129 = vrot.slane %v124, %v128
  %v134 = vunpack.c.l.b16 %v117
  %v135 = vunpack.c.l.b16 %v118
  %v136 = vunpack.c.l.b16 %v119
  %v137 = vpack.c.b16 %v135, %v134
  %v138 = vpack.c.b16 %v136, %v136
  %v143 = vunpack.c.l.b16 %v120
  %v144 = vunpack.c.l.b16 %v121
  %v145 = vunpack.c.l.b16 %v122
  %v146 = vunpack.c.l.b16 %v123
  %v147 = vpack.c.b16 %v144, %v143
  %v148 = vpack.c.b16 %v146, %v145
  %vm151 = vcmask 261120
  %v153 = vsel %vm151, %v137, 0
  %v156 = vsel %vm151, %v138, 0
  %158 = vmatprep.subr.bf16.mxu0 0
  %159 = vmatpush1.bf16.msra.mxu0 %v147
  %160 = vmatprep.subr.bf16.mxu0 0
  %161 = vmatpush1.bf16.msra.mxu0 %v148
  %162 = vmatprep.subr.bf16.mxu0 0
  %163 = vmatpush1.bf16.msra.mxu0 0
  %164 = vmatprep.subr.bf16.mxu0 0
  %165 = vmatpush1.bf16.msra.mxu0 0
  %166 = vmatprep.subr.bf16.mxu0 0
  %167 = vmatpush1.bf16.msra.mxu0 0
  %168 = vmatprep.subr.bf16.mxu0 0
  %169 = vmatpush1.bf16.msra.mxu0 0
  %170 = vmatprep.subr.bf16.mxu0 0
  %171 = vmatpush1.bf16.msra.mxu0 0
  %172 = vmatprep.subr.bf16.mxu0 0
  %173 = vmatpush1.bf16.msra.mxu0 0
  %174 = vmatprep.subr.bf16.mxu0 0
  %175 = vmatpush1.bf16.msra.mxu0 0
  %176 = vmatprep.subr.bf16.mxu0 0
  %177 = vmatpush1.bf16.msra.mxu0 0
  %178 = vmatprep.subr.bf16.mxu0 0
  %179 = vmatpush1.bf16.msra.mxu0 0
  %180 = vmatprep.subr.bf16.mxu0 0
  %181 = vmatpush1.bf16.msra.mxu0 0
  %182 = vmatprep.subr.bf16.mxu0 0
  %183 = vmatpush1.bf16.msra.mxu0 0
  %184 = vmatprep.subr.bf16.mxu0 0
  %185 = vmatpush1.bf16.msra.mxu0 0
  %186 = vmatprep.subr.bf16.mxu0 0
  %187 = vmatpush1.bf16.msra.mxu0 0
  %188 = vmatprep.subr.bf16.mxu0 0
  %189 = vmatpush1.bf16.msra.mxu0 0
  %190 = vmatprep.mubr.bf16.mxu0 0
  %191 = vmatmul.mubr.bf16.gmra.mrb[0].mxu0 %v153
  %v192 = vpop.f32.mrb[0].mxu0
  %v193 = vadd.f32 %v129, %v192
  %v194 = vpop.f32.mrb[0].mxu0
  %v195 = vpop.f32.mrb[0].mxu0
  %v196 = vadd.f32 %v129, %v195
  %v197 = vpop.f32.mrb[0].mxu0
  %198 = vmatprep.mubr.bf16.mxu0 0
  %199 = vmatmul.mubr.bf16.gmra.mrb[0].mxu0 %v156
  %v200 = vpop.f32.mrb[0].mxu0
  %v201 = vadd.f32 %v129, %v200
  %v202 = vpop.f32.mrb[0].mxu0
  %v203 = vpop.f32.mrb[0].mxu0
  %v204 = vpop.f32.mrb[0].mxu0
  %205 = vdwg.mxu0
  %v206 = vmul.f32 %v193, 0.5
  %v207 = vmul.f32 %v196, 0.5
  %v208 = vmul.f32 %v201, 0.5
  %v209 = vmul.f32 %v193, 0.70710677
  %v210 = vmul.f32 %v196, 0.70710677
  %v211 = vmul.f32 %v201, 0.70710677
  %v212 = verf.f32.pop %v209
  %v213 = verf.f32.pop %v210
  %v214 = verf.f32.pop %v211
  %v215 = vadd.f32 %v212, 1.0
  %v216 = vadd.f32 %v213, 1.0
  %v217 = vadd.f32 %v214, 1.0
  %v218 = vmul.f32 %v206, %v215
  %v219 = vmul.f32 %v207, %v216
  %v220 = vmul.f32 %v208, %v217
  %v221 = vld [vmem:[#allocation3] sm:$0xff]
  %v222 = vld [vmem:[#allocation3 + $0x8] sm:$0xff]
  %v223 = vld [vmem:[#allocation3 + $0x10] sm:$0x3]
  %v224 = vpack.c.bf16 %v219, %v218
  %v225 = vpack.c.bf16 %v220, %v220
  %v226 = vld [vmem:[%s5] sm:$0xf]
  %v227 = vld [vmem:[%s5 + $0x4] sm:$0xf]
  %v228 = vld [vmem:[%s5 + $0x8] sm:$0xf]
  %v229 = vld [vmem:[%s5 + $0xc] sm:$0xf]
  %v230 = vld [vmem:[%s5 + $0x10] sm:$0xf]
  %v231 = vld [vmem:[%s5 + $0x14] sm:$0xf]
  %v232 = vld [vmem:[%s5 + $0x18] sm:$0xf]
  %v233 = vld [vmem:[%s5 + $0x1c] sm:$0xf]
  %v234 = vld [vmem:[%s5 + $0x20] sm:$0xf]
  %v235 = vld [vmem:[%s5 + $0x24] sm:$0xf]
  %v236 = vld [vmem:[%s5 + $0x28] sm:$0xf]
  %v237 = vld [vmem:[%s5 + $0x2c] sm:$0xf]
  %v238 = vld [vmem:[%s5 + $0x30] sm:$0xf]
  %v239 = vld [vmem:[%s5 + $0x34] sm:$0xf]
  %v240 = vld [vmem:[%s5 + $0x38] sm:$0xf]
  %v241 = vld [vmem:[%s5 + $0x3c] sm:$0xf]
  %v258 = vunpack.c.l.b16 %v226
  %v259 = vunpack.c.l.b16 %v227
  %v260 = vunpack.c.l.b16 %v228
  %v261 = vunpack.c.l.b16 %v229
  %v262 = vunpack.c.l.b16 %v230
  %v263 = vunpack.c.l.b16 %v231
  %v264 = vunpack.c.l.b16 %v232
  %v265 = vunpack.c.l.b16 %v233
  %v266 = vunpack.c.l.b16 %v234
  %v267 = vunpack.c.l.b16 %v235
  %v268 = vunpack.c.l.b16 %v236
  %v269 = vunpack.c.l.b16 %v237
  %v270 = vunpack.c.l.b16 %v238
  %v271 = vunpack.c.l.b16 %v239
  %v272 = vunpack.c.l.b16 %v240
  %v273 = vunpack.c.l.b16 %v241
  %v274 = vpack.c.b16 %v259, %v258
  %v275 = vpack.c.b16 %v261, %v260
  %v276 = vpack.c.b16 %v263, %v262
  %v277 = vpack.c.b16 %v265, %v264
  %v278 = vpack.c.b16 %v267, %v266
  %v279 = vpack.c.b16 %v269, %v268
  %v280 = vpack.c.b16 %v271, %v270
  %v281 = vpack.c.b16 %v273, %v272
  %290 = vmatprep.subr.bf16.mxu0 0
  %291 = vmatpush1.bf16.msra.mxu0 %v274
  %292 = vmatprep.subr.bf16.mxu0 0
  %293 = vmatpush1.bf16.msra.mxu0 %v275
  %294 = vmatprep.subr.bf16.mxu0 0
  %295 = vmatpush1.bf16.msra.mxu0 %v276
  %296 = vmatprep.subr.bf16.mxu0 0
  %297 = vmatpush1.bf16.msra.mxu0 %v277
  %298 = vmatprep.subr.bf16.mxu0 0
  %299 = vmatpush1.bf16.msra.mxu0 %v278
  %300 = vmatprep.subr.bf16.mxu0 0
  %301 = vmatpush1.bf16.msra.mxu0 %v279
  %302 = vmatprep.subr.bf16.mxu0 0
  %303 = vmatpush1.bf16.msra.mxu0 %v280
  %304 = vmatprep.subr.bf16.mxu0 0
  %305 = vmatpush1.bf16.msra.mxu0 %v281
  %306 = vmatprep.subr.bf16.mxu0 0
  %307 = vmatpush1.bf16.msra.mxu0 0
  %308 = vmatprep.subr.bf16.mxu0 0
  %309 = vmatpush1.bf16.msra.mxu0 0
  %310 = vmatprep.subr.bf16.mxu0 0
  %311 = vmatpush1.bf16.msra.mxu0 0
  %312 = vmatprep.subr.bf16.mxu0 0
  %313 = vmatpush1.bf16.msra.mxu0 0
  %314 = vmatprep.subr.bf16.mxu0 0
  %315 = vmatpush1.bf16.msra.mxu0 0
  %316 = vmatprep.subr.bf16.mxu0 0
  %317 = vmatpush1.bf16.msra.mxu0 0
  %318 = vmatprep.subr.bf16.mxu0 0
  %319 = vmatpush1.bf16.msra.mxu0 0
  %320 = vmatprep.subr.bf16.mxu0 0
  %321 = vmatpush1.bf16.msra.mxu0 0
  %322 = vmatprep.mubr.bf16.mxu0 0
  %323 = vmatmul.mubr.bf16.gmra.mrb[0].mxu0 %v224
  %v324 = vpop.f32.mrb[0].mxu0
  %v325 = vadd.f32 0.0, %v324
  %v326 = vpop.f32.mrb[0].mxu0
  %v327 = vpop.f32.mrb[0].mxu0
  %v328 = vadd.f32 0.0, %v327
  %v329 = vpop.f32.mrb[0].mxu0
  %330 = vmatprep.mubr.bf16.mxu0 0
  %331 = vmatmul.mubr.bf16.gmra.mrb[0].mxu0 %v225
  %v332 = vpop.f32.mrb[0].mxu0
  %v333 = vadd.f32 0.0, %v332
  %v334 = vpop.f32.mrb[0].mxu0
  %v335 = vpop.f32.mrb[0].mxu0
  %v336 = vpop.f32.mrb[0].mxu0
  %337 = vdwg.mxu0
  %v338 = vadd.f32 %v221, %v325
  %v339 = vadd.f32 %v222, %v328
  %v340 = vadd.f32 %v223, %v333
  %341 = vst.msk [vmem:[#allocation3] sm:$0xff] %vm151, %v338
  %342 = vst.msk [vmem:[#allocation3 + $0x8] sm:$0xff] %vm151, %v339
  %vm343 = vcmask 254976
  %344 = vst.msk [vmem:[#allocation3 + $0x10] sm:$0x3] %vm343, %v340
  // Predicated region
  $region34: #{block_forward.19} parent=0 // pred_check
    %p345 = pneg %p27
  $region35: #{block_forward.19} parent=0 // pred_check_branch
    %347 = sbr.rel (%p345) target = $region37
  $region36: #{block_forward.19} parent=0 // pred_region
    %v348 = vld [vmem:[#allocation3] sm:$0xff]
    %v349 = vld [vmem:[#allocation3 + $0x8] sm:$0xff]
    %v350 = vld [vmem:[#allocation3 + $0x10] sm:$0x3]
    %v351 = vld [vmem:[%s6] sm:$0x1]
    %v353 = vlaneseq
    %v354 = vshrl.u32 %v353, 7
    %v355 = vsub.s32 0, %v354
    %v356 = vrot.slane %v351, %v355
    %v358 = vadd.f32 %v348, %v356
    %v359 = vadd.f32 %v349, %v356
    %v360 = vadd.f32 %v350, %v356
    %v361 = vld [vmem:[%s0] sm:$0xff]
    %v362 = vld [vmem:[%s0 + $0x8] sm:$0xff]
    %v363 = vld [vmem:[%s0 + $0x10] sm:$0x3]
    %v364 = vadd.f32 %v358, %v361
    %v365 = vadd.f32 %v359, %v362
    %v366 = vadd.f32 %v360, %v363
    %367 = vst.msk [vmem:[%s7] sm:$0xff] %vm151, %v364
    %368 = vst.msk [vmem:[%s7 + $0x8] sm:$0xff] %vm151, %v365
    %369 = vst.msk [vmem:[%s7 + $0x10] sm:$0x3] %vm343, %v366
  $region37: #{block_forward.19} parent=0 // pred_fallthru
    _
  // Predicated region
  $region38: #{block_forward.19} parent=0 // pred_check
    _
  $region39: #{block_forward.19} parent=0 // pred_check_branch
    %371 = sbr.rel (0) target = $region41
  $region40: #{block_forward.19} parent=0 // pred_region
    _
  $region41: #{block_forward.19} parent=0 // pred_fallthru
    _
  // Predicated region
  $region42: #{block_forward.19} parent=0 // pred_check
    _
  $region43: #{block_forward.19} parent=0 // pred_check_branch
    %373 = sbr.rel (0) target = $region45
  $region44: #{block_forward.19} parent=0 // pred_region
    _
  $region45: #{block_forward.19} parent=0 // pred_fallthru
    _

</llo_original>
